<compile_context>
chip_gen: v7x
topology: tpu7x:2x2x1
jax: 0.10.0
libtpu: 0.0.40
codegen_flags: <defaults>
</compile_context>

<pallas_src>
import functools

import jax
import jax.numpy as jnp
from jax.experimental import pallas as pl
from jax.experimental.pallas import tpu as pltpu


# ----------------------------- kernel helpers -------------------------------

def _mm_bf16(a, b):
    """MXU matmul: bf16 operands, f32 accumulation."""
    return jnp.dot(a.astype(jnp.bfloat16), b.astype(jnp.bfloat16),
                   preferred_element_type=jnp.float32)


def _layernorm(x, g, b, eps):
    mu = jnp.mean(x, axis=-1, keepdims=True)
    var = jnp.mean((x - mu) ** 2, axis=-1, keepdims=True)
    return (x - mu) * jax.lax.rsqrt(var + eps) * g + b


# q @ k^T without materializing a transpose (contract last dims of both).
_NT_DIMS = (((1,), (1,)), ((), ()))


# ----------------------- fully fused forward kernel -------------------------

def _graphormer_kernel(x_ref, logdeg_ref, ndls_ref, seld_ref, selm_ref,
                       ln1g_ref, ln1b_ref, wqkv_ref, bqkv_ref, wo_ref, bo_ref,
                       ln2g_ref, ln2b_ref, w1_ref, b1_ref, w2_ref, b2_ref,
                       wl_ref, bl_ref, wp1_ref, bp1_ref, wp2_ref, bp2_ref,
                       o_ref, *, num_layers, n_heads, eps):
    x = x_ref[...]                                     # [N, D] f32
    log_deg = logdeg_ref[...]                          # [N, 1]
    N, D = x.shape
    Dh = D // n_heads
    scale = 1.0 / float(Dh) ** 0.5

    # -------------------- encoder layers (static unrolled) -------------------
    for l in range(num_layers):
        # ---- pre-LN multi-head self-attention ----
        h = _layernorm(x, ln1g_ref[l], ln1b_ref[l], eps)
        # fused Q/K/V projection: one [N, D] x [D, 3D] MXU pass
        qkv = _mm_bf16(h, wqkv_ref[l]) + bqkv_ref[l]            # [N, 3D]
        wo_l = wo_ref[l]                                        # [D, D]

        attn = jnp.zeros((N, D), jnp.float32)
        for hh in range(n_heads):                     # static, fully unrolled
            q = qkv[:, hh * Dh:(hh + 1) * Dh]                   # [N, Dh]
            k = qkv[:, D + hh * Dh:D + (hh + 1) * Dh]
            v = qkv[:, 2 * D + hh * Dh:2 * D + (hh + 1) * Dh]
            s = jax.lax.dot_general(q, k, _NT_DIMS,
                                    preferred_element_type=jnp.float32) * scale
            m = jnp.max(s, axis=-1, keepdims=True)
            p = jnp.exp(s - m)
            p = p * pl.reciprocal(jnp.sum(p, axis=-1, keepdims=True), approx=True)
            o_h = jnp.dot(p, v, preferred_element_type=jnp.float32)   # [N, Dh]
            # fold this head's slice of the output projection so the running
            # result stays lane-dense [N, D] (no head concat / relayout)
            attn = attn + _mm_bf16(o_h, wo_l[hh * Dh:(hh + 1) * Dh, :])

        x = x + attn + bo_ref[l]                      # out-proj bias + residual

        # ---- pre-LN feed-forward ----
        h2 = _layernorm(x, ln2g_ref[l], ln2b_ref[l], eps)
        f = jnp.maximum(_mm_bf16(h2, w1_ref[l]) + b1_ref[l], 0.0)
        x = x + _mm_bf16(f, w2_ref[l]) + b2_ref[l]

        # ---- degree scaling with log_deg = log(deg + 1) ----
        x = x * log_deg

    # ----------------------------- prediction tail ---------------------------
    # h = relu(lfc2_lpe(cat(x, feats_ndls))) — concat folded into split weights
    ndls = ndls_ref[...]
    out_dim = ndls.shape[1]
    wl = wl_ref[...]
    h = jnp.maximum(
        _mm_bf16(x, wl[0:D, :])
        + _mm_bf16(ndls, wl[D:D + out_dim, :])
        + bl_ref[...], 0.0)                                      # [N, out_dim]

    # exact row gather h[diseases] / h[mirnas] via one-hot MXU matmul (f32,
    # exact: each output row picks exactly one h row, sums with zeros)
    hd = jnp.dot(seld_ref[...], h, preferred_element_type=jnp.float32)   # [P, out_dim]
    hm = jnp.dot(selm_ref[...], h, preferred_element_type=jnp.float32)

    # predict = relu(predict1(cat(h_dis, h_mir))) — concat folded into split weights
    wp1 = wp1_ref[...]
    pre = jnp.maximum(
        jnp.dot(hd, wp1[0:out_dim, :], preferred_element_type=jnp.float32)
        + jnp.dot(hm, wp1[out_dim:2 * out_dim, :], preferred_element_type=jnp.float32)
        + bp1_ref[...], 0.0)
    # score = sigmoid(predict2(predict))   (dropout is identity in eval)
    o_ref[...] = jax.nn.sigmoid(
        jnp.dot(pre, wp2_ref[...], preferred_element_type=jnp.float32) + bp2_ref[...])


# ------------------------- model (wrapper / glue) ----------------------------

def graphormer_forward(params, feats, lpe, feats_ndls, log_deg, diseases, mirnas,
                       *, n_heads, num_layers):
    x0 = jnp.concatenate([feats, lpe], axis=1)        # [N, node_dim + lpe_dim]
    N = x0.shape[0]
    P = diseases.shape[0]
    # one-hot row selectors (built once in the wrapper; exact gather inside kernel)
    sel_d = jax.nn.one_hot(diseases, N, dtype=jnp.float32)       # [P, N]
    sel_m = jax.nn.one_hot(mirnas, N, dtype=jnp.float32)         # [P, N]

    vmem = pl.BlockSpec(memory_space=pltpu.MemorySpace.VMEM)
    return pl.pallas_call(
        functools.partial(_graphormer_kernel,
                          num_layers=num_layers, n_heads=n_heads, eps=1e-5),
        out_shape=jax.ShapeDtypeStruct((P, 1), jnp.float32),
        in_specs=[vmem] * 23,
        out_specs=vmem,
    )(x0, log_deg, feats_ndls, sel_d, sel_m,
      params["ln1_g"], params["ln1_b"], params["wqkv"], params["bqkv"],
      params["wo"], params["bo"], params["ln2_g"], params["ln2_b"],
      params["w1"], params["b1"], params["w2"], params["b2"],
      params["lfc2_lpe_w"], params["lfc2_lpe_b"],
      params["predict1_w"], params["predict1_b"],
      params["predict2_w"], params["predict2_b"])


# ------------------------------ param setup ----------------------------------

def init_params(key, num_layers, node_dim, output_dim, lpe_dim, n_heads):
    d_model = node_dim + lpe_dim
    d_ff = 2 * d_model
    L = num_layers

    def nxt():
        nonlocal key
        key, sub = jax.random.split(key)
        return sub

    def dense(w_shape, b_shape):
        w = 0.1 * jax.random.normal(nxt(), w_shape, jnp.float32)
        b = 0.01 * jax.random.normal(nxt(), b_shape, jnp.float32)
        return w, b

    p = {}
    # encoder layer params stacked on a leading layer axis
    p["ln1_g"] = jnp.ones((L, 1, d_model), jnp.float32)
    p["ln1_b"] = jnp.zeros((L, 1, d_model), jnp.float32)
    p["ln2_g"] = jnp.ones((L, 1, d_model), jnp.float32)
    p["ln2_b"] = jnp.zeros((L, 1, d_model), jnp.float32)
    p["wqkv"], p["bqkv"] = dense((L, d_model, 3 * d_model), (L, 1, 3 * d_model))
    p["wo"],   p["bo"]   = dense((L, d_model, d_model),     (L, 1, d_model))
    p["w1"],   p["b1"]   = dense((L, d_model, d_ff),        (L, 1, d_ff))
    p["w2"],   p["b2"]   = dense((L, d_ff, d_model),        (L, 1, d_model))
    # prediction tail
    p["lfc2_lpe_w"], p["lfc2_lpe_b"] = dense((output_dim * 2 + lpe_dim, output_dim),
                                             (1, output_dim))
    p["predict1_w"], p["predict1_b"] = dense((output_dim * 2, output_dim), (1, output_dim))
    p["predict2_w"], p["predict2_b"] = dense((output_dim, 1), (1, 1))
    return p


# ---------------------------------- main --------------------------------------

if __name__ == "__main__":
    key = jax.random.PRNGKey(0)

    # small shapes consistent with the module
    num_layers = 2
    node_dim = output_dim = 24          # node_dim == output_dim (required by lfc2_lpe dims)
    lpe_dim = 8
    n_heads = 4                          # (node_dim + lpe_dim) % n_heads == 0
    n_dis, n_mir = 8, 8
    num_nodes = n_dis + n_mir

    k_feats, k_lpe, k_ndls, k_par = jax.random.split(key, 4)

    # feats = G.ndata['z'] (d_sim rows for disease nodes, m_sim rows for mirna nodes)
    feats = jax.random.normal(k_feats, (num_nodes, node_dim), jnp.float32)
    lpe = jax.random.normal(k_lpe, (num_nodes, lpe_dim), jnp.float32)
    feats_ndls = jax.random.normal(k_ndls, (num_nodes, output_dim), jnp.float32)

    # deterministic bipartite edge list + self loops; degree over source nodes (row1)
    src, dst = [], []
    for i in range(n_dis):
        for j in (i % n_mir, (i + 1) % n_mir):
            src += [i, n_dis + j]
            dst += [n_dis + j, i]
    src += list(range(num_nodes))        # self loops
    dst += list(range(num_nodes))
    row1 = jnp.asarray(src, jnp.int32)
    deg = jnp.zeros((num_nodes,), jnp.float32).at[row1].add(1.0)
    log_deg = jnp.log(deg + 1.0).reshape(num_nodes, 1)

    diseases = jnp.asarray([0, 1, 2, 3], jnp.int32)
    mirnas = jnp.asarray([8, 9, 10, 11], jnp.int32)

    params = init_params(k_par, num_layers, node_dim, output_dim, lpe_dim, n_heads)

    fwd = jax.jit(functools.partial(graphormer_forward,
                                    n_heads=n_heads, num_layers=num_layers))
    score = fwd(params, feats, lpe, feats_ndls, log_deg, diseases, mirnas)
    score = jax.block_until_ready(score)

    assert score.shape == (diseases.shape[0], 1)
    assert bool(jnp.all(jnp.isfinite(score)))
    assert bool(jnp.all((score >= 0.0) & (score <= 1.0)))
    print("KERNEL_OK")
</pallas_src>

<mosaic_0001>
module attributes {stable_mosaic.version = 11 : i64} {
  func.func @_graphormer_kernel(%arg0: memref<16x32xf32, #tpu.memory_space<vmem>>, %arg1: memref<16x1xf32, #tpu.memory_space<vmem>>, %arg2: memref<16x24xf32, #tpu.memory_space<vmem>>, %arg3: memref<4x16xf32, #tpu.memory_space<vmem>>, %arg4: memref<4x16xf32, #tpu.memory_space<vmem>>, %arg5: memref<2x1x32xf32, #tpu.memory_space<vmem>>, %arg6: memref<2x1x32xf32, #tpu.memory_space<vmem>>, %arg7: memref<2x32x96xf32, #tpu.memory_space<vmem>>, %arg8: memref<2x1x96xf32, #tpu.memory_space<vmem>>, %arg9: memref<2x32x32xf32, #tpu.memory_space<vmem>>, %arg10: memref<2x1x32xf32, #tpu.memory_space<vmem>>, %arg11: memref<2x1x32xf32, #tpu.memory_space<vmem>>, %arg12: memref<2x1x32xf32, #tpu.memory_space<vmem>>, %arg13: memref<2x32x64xf32, #tpu.memory_space<vmem>>, %arg14: memref<2x1x64xf32, #tpu.memory_space<vmem>>, %arg15: memref<2x64x32xf32, #tpu.memory_space<vmem>>, %arg16: memref<2x1x32xf32, #tpu.memory_space<vmem>>, %arg17: memref<56x24xf32, #tpu.memory_space<vmem>>, %arg18: memref<1x24xf32, #tpu.memory_space<vmem>>, %arg19: memref<48x24xf32, #tpu.memory_space<vmem>>, %arg20: memref<1x24xf32, #tpu.memory_space<vmem>>, %arg21: memref<24x1xf32, #tpu.memory_space<vmem>>, %arg22: memref<1x1xf32, #tpu.memory_space<vmem>>, %arg23: memref<4x1xf32, #tpu.memory_space<vmem>>) attributes {dimension_semantics = [], scalar_prefetch = 0 : i64, scratch_operands = 0 : i64, tpu.core_type = #tpu.core_type<tc>} {
    %c0 = arith.constant 0 : index
    %c0_0 = arith.constant 0 : index
    %0 = vector.load %arg0[%c0, %c0_0] : memref<16x32xf32, #tpu.memory_space<vmem>>, vector<16x32xf32>
    %c0_1 = arith.constant 0 : index
    %c0_2 = arith.constant 0 : index
    %1 = vector.load %arg1[%c0_1, %c0_2] : memref<16x1xf32, #tpu.memory_space<vmem>>, vector<16x1xf32>
    %c0_3 = arith.constant 0 : index
    %c0_4 = arith.constant 0 : index
    %c0_5 = arith.constant 0 : index
    %2 = vector.load %arg5[%c0_3, %c0_4, %c0_5] : memref<2x1x32xf32, #tpu.memory_space<vmem>>, vector<1x1x32xf32>
    %3 = vector.shape_cast %2 : vector<1x1x32xf32> to vector<1x32xf32>
    %c0_6 = arith.constant 0 : index
    %c0_7 = arith.constant 0 : index
    %c0_8 = arith.constant 0 : index
    %4 = vector.load %arg6[%c0_6, %c0_7, %c0_8] : memref<2x1x32xf32, #tpu.memory_space<vmem>>, vector<1x1x32xf32>
    %5 = vector.shape_cast %4 : vector<1x1x32xf32> to vector<1x32xf32>
    %cst = arith.constant dense<0.000000e+00> : vector<16xf32>
    %6 = vector.multi_reduction <add>, %0, %cst [1] : vector<16x32xf32> to vector<16xf32>
    %7 = vector.shape_cast %6 : vector<16xf32> to vector<16x1xf32>
    %cst_9 = arith.constant 3.200000e+01 : f32
    %8 = vector.broadcast %cst_9 : f32 to vector<16x1xf32>
    %9 = arith.divf %7, %8 : vector<16x1xf32>
    %10 = vector.broadcast %9 : vector<16x1xf32> to vector<16x32xf32>
    %11 = arith.subf %0, %10 : vector<16x32xf32>
    %12 = arith.mulf %11, %11 : vector<16x32xf32>
    %cst_10 = arith.constant dense<0.000000e+00> : vector<16xf32>
    %13 = vector.multi_reduction <add>, %12, %cst_10 [1] : vector<16x32xf32> to vector<16xf32>
    %14 = vector.shape_cast %13 : vector<16xf32> to vector<16x1xf32>
    %cst_11 = arith.constant 3.200000e+01 : f32
    %15 = vector.broadcast %cst_11 : f32 to vector<16x1xf32>
    %16 = arith.divf %14, %15 : vector<16x1xf32>
    %17 = vector.broadcast %9 : vector<16x1xf32> to vector<16x32xf32>
    %18 = arith.subf %0, %17 : vector<16x32xf32>
    %cst_12 = arith.constant 9.99999974E-6 : f32
    %19 = vector.broadcast %cst_12 : f32 to vector<16x1xf32>
    %20 = arith.addf %16, %19 : vector<16x1xf32>
    %21 = math.rsqrt %20 : vector<16x1xf32>
    %22 = vector.broadcast %21 : vector<16x1xf32> to vector<16x32xf32>
    %23 = arith.mulf %18, %22 : vector<16x32xf32>
    %24 = vector.broadcast %3 : vector<1x32xf32> to vector<16x32xf32>
    %25 = arith.mulf %23, %24 : vector<16x32xf32>
    %26 = vector.broadcast %5 : vector<1x32xf32> to vector<16x32xf32>
    %27 = arith.addf %25, %26 : vector<16x32xf32>
    %c0_13 = arith.constant 0 : index
    %c0_14 = arith.constant 0 : index
    %c0_15 = arith.constant 0 : index
    %28 = vector.load %arg7[%c0_13, %c0_14, %c0_15] : memref<2x32x96xf32, #tpu.memory_space<vmem>>, vector<1x32x96xf32>
    %29 = vector.shape_cast %28 : vector<1x32x96xf32> to vector<32x96xf32>
    %30 = arith.truncf %27 : vector<16x32xf32> to vector<16x32xbf16>
    %31 = arith.truncf %29 : vector<32x96xf32> to vector<32x96xbf16>
    %cst_16 = arith.constant dense<0.000000e+00> : vector<16x96xf32>
    %32 = tpu.matmul %30, %31, %cst_16 {dimension_numbers = #tpu.dot_dimension_numbers<[1], [0], [0], [1], [0, 0, 1, 1], [], []>} : vector<16x32xbf16>, vector<32x96xbf16>, vector<16x96xf32> -> vector<16x96xf32>
    %c0_17 = arith.constant 0 : index
    %c0_18 = arith.constant 0 : index
    %c0_19 = arith.constant 0 : index
    %33 = vector.load %arg8[%c0_17, %c0_18, %c0_19] : memref<2x1x96xf32, #tpu.memory_space<vmem>>, vector<1x1x96xf32>
    %34 = vector.shape_cast %33 : vector<1x1x96xf32> to vector<1x96xf32>
    %35 = vector.broadcast %34 : vector<1x96xf32> to vector<16x96xf32>
    %36 = arith.addf %32, %35 : vector<16x96xf32>
    %c0_20 = arith.constant 0 : index
    %c0_21 = arith.constant 0 : index
    %c0_22 = arith.constant 0 : index
    %37 = vector.load %arg9[%c0_20, %c0_21, %c0_22] : memref<2x32x32xf32, #tpu.memory_space<vmem>>, vector<1x32x32xf32>
    %38 = vector.shape_cast %37 : vector<1x32x32xf32> to vector<32x32xf32>
    %cst_23 = arith.constant 0.000000e+00 : f32
    %39 = vector.broadcast %cst_23 : f32 to vector<16x32xf32>
    %40 = vector.extract_strided_slice %36 {offsets = [0, 0], sizes = [16, 8], strides = [1, 1]} : vector<16x96xf32> to vector<16x8xf32>
    %41 = vector.extract_strided_slice %36 {offsets = [0, 32], sizes = [16, 8], strides = [1, 1]} : vector<16x96xf32> to vector<16x8xf32>
    %42 = vector.extract_strided_slice %36 {offsets = [0, 64], sizes = [16, 8], strides = [1, 1]} : vector<16x96xf32> to vector<16x8xf32>
    %cst_24 = arith.constant dense<0.000000e+00> : vector<16x16xf32>
    %43 = tpu.matmul %40, %41, %cst_24 {dimension_numbers = #tpu.dot_dimension_numbers<[1], [1], [0], [0], [0, 0, 1, 0], [], []>} : vector<16x8xf32>, vector<16x8xf32>, vector<16x16xf32> -> vector<16x16xf32>
    %cst_25 = arith.constant 0.353553385 : f32
    %44 = vector.broadcast %cst_25 : f32 to vector<16x16xf32>
    %45 = arith.mulf %43, %44 : vector<16x16xf32>
    %cst_26 = arith.constant dense<0xFF800000> : vector<16xf32>
    %46 = vector.multi_reduction <maximumf>, %45, %cst_26 [1] : vector<16x16xf32> to vector<16xf32>
    %47 = vector.shape_cast %46 : vector<16xf32> to vector<16x1xf32>
    %48 = vector.broadcast %47 : vector<16x1xf32> to vector<16x16xf32>
    %49 = arith.subf %45, %48 : vector<16x16xf32>
    %50 = math.exp %49 : vector<16x16xf32>
    %cst_27 = arith.constant dense<0.000000e+00> : vector<16xf32>
    %51 = vector.multi_reduction <add>, %50, %cst_27 [1] : vector<16x16xf32> to vector<16xf32>
    %52 = vector.shape_cast %51 : vector<16xf32> to vector<16x1xf32>
    %53 = tpu.reciprocal %52 {approx = true} : vector<16x1xf32> -> vector<16x1xf32>
    %54 = vector.broadcast %53 : vector<16x1xf32> to vector<16x16xf32>
    %55 = arith.mulf %50, %54 : vector<16x16xf32>
    %cst_28 = arith.constant dense<0.000000e+00> : vector<16x8xf32>
    %56 = tpu.matmul %55, %42, %cst_28 {dimension_numbers = #tpu.dot_dimension_numbers<[1], [0], [0], [1], [0, 0, 1, 1], [], []>} : vector<16x16xf32>, vector<16x8xf32>, vector<16x8xf32> -> vector<16x8xf32>
    %57 = vector.extract_strided_slice %38 {offsets = [0, 0], sizes = [8, 32], strides = [1, 1]} : vector<32x32xf32> to vector<8x32xf32>
    %58 = arith.truncf %56 : vector<16x8xf32> to vector<16x8xbf16>
    %59 = arith.truncf %57 : vector<8x32xf32> to vector<8x32xbf16>
    %cst_29 = arith.constant dense<0.000000e+00> : vector<16x32xf32>
    %60 = tpu.matmul %58, %59, %cst_29 {dimension_numbers = #tpu.dot_dimension_numbers<[1], [0], [0], [1], [0, 0, 1, 1], [], []>} : vector<16x8xbf16>, vector<8x32xbf16>, vector<16x32xf32> -> vector<16x32xf32>
    %61 = arith.addf %39, %60 : vector<16x32xf32>
    %62 = vector.extract_strided_slice %36 {offsets = [0, 8], sizes = [16, 8], strides = [1, 1]} : vector<16x96xf32> to vector<16x8xf32>
    %63 = vector.extract_strided_slice %36 {offsets = [0, 40], sizes = [16, 8], strides = [1, 1]} : vector<16x96xf32> to vector<16x8xf32>
    %64 = vector.extract_strided_slice %36 {offsets = [0, 72], sizes = [16, 8], strides = [1, 1]} : vector<16x96xf32> to vector<16x8xf32>
    %cst_30 = arith.constant dense<0.000000e+00> : vector<16x16xf32>
    %65 = tpu.matmul %62, %63, %cst_30 {dimension_numbers = #tpu.dot_dimension_numbers<[1], [1], [0], [0], [0, 0, 1, 0], [], []>} : vector<16x8xf32>, vector<16x8xf32>, vector<16x16xf32> -> vector<16x16xf32>
    %cst_31 = arith.constant 0.353553385 : f32
    %66 = vector.broadcast %cst_31 : f32 to vector<16x16xf32>
    %67 = arith.mulf %65, %66 : vector<16x16xf32>
    %cst_32 = arith.constant dense<0xFF800000> : vector<16xf32>
    %68 = vector.multi_reduction <maximumf>, %67, %cst_32 [1] : vector<16x16xf32> to vector<16xf32>
    %69 = vector.shape_cast %68 : vector<16xf32> to vector<16x1xf32>
    %70 = vector.broadcast %69 : vector<16x1xf32> to vector<16x16xf32>
    %71 = arith.subf %67, %70 : vector<16x16xf32>
    %72 = math.exp %71 : vector<16x16xf32>
    %cst_33 = arith.constant dense<0.000000e+00> : vector<16xf32>
    %73 = vector.multi_reduction <add>, %72, %cst_33 [1] : vector<16x16xf32> to vector<16xf32>
    %74 = vector.shape_cast %73 : vector<16xf32> to vector<16x1xf32>
    %75 = tpu.reciprocal %74 {approx = true} : vector<16x1xf32> -> vector<16x1xf32>
    %76 = vector.broadcast %75 : vector<16x1xf32> to vector<16x16xf32>
    %77 = arith.mulf %72, %76 : vector<16x16xf32>
    %cst_34 = arith.constant dense<0.000000e+00> : vector<16x8xf32>
    %78 = tpu.matmul %77, %64, %cst_34 {dimension_numbers = #tpu.dot_dimension_numbers<[1], [0], [0], [1], [0, 0, 1, 1], [], []>} : vector<16x16xf32>, vector<16x8xf32>, vector<16x8xf32> -> vector<16x8xf32>
    %79 = vector.extract_strided_slice %38 {offsets = [8, 0], sizes = [8, 32], strides = [1, 1]} : vector<32x32xf32> to vector<8x32xf32>
    %80 = arith.truncf %78 : vector<16x8xf32> to vector<16x8xbf16>
    %81 = arith.truncf %79 : vector<8x32xf32> to vector<8x32xbf16>
    %cst_35 = arith.constant dense<0.000000e+00> : vector<16x32xf32>
    %82 = tpu.matmul %80, %81, %cst_35 {dimension_numbers = #tpu.dot_dimension_numbers<[1], [0], [0], [1], [0, 0, 1, 1], [], []>} : vector<16x8xbf16>, vector<8x32xbf16>, vector<16x32xf32> -> vector<16x32xf32>
    %83 = arith.addf %61, %82 : vector<16x32xf32>
    %84 = vector.extract_strided_slice %36 {offsets = [0, 16], sizes = [16, 8], strides = [1, 1]} : vector<16x96xf32> to vector<16x8xf32>
    %85 = vector.extract_strided_slice %36 {offsets = [0, 48], sizes = [16, 8], strides = [1, 1]} : vector<16x96xf32> to vector<16x8xf32>
    %86 = vector.extract_strided_slice %36 {offsets = [0, 80], sizes = [16, 8], strides = [1, 1]} : vector<16x96xf32> to vector<16x8xf32>
    %cst_36 = arith.constant dense<0.000000e+00> : vector<16x16xf32>
    %87 = tpu.matmul %84, %85, %cst_36 {dimension_numbers = #tpu.dot_dimension_numbers<[1], [1], [0], [0], [0, 0, 1, 0], [], []>} : vector<16x8xf32>, vector<16x8xf32>, vector<16x16xf32> -> vector<16x16xf32>
    %cst_37 = arith.constant 0.353553385 : f32
    %88 = vector.broadcast %cst_37 : f32 to vector<16x16xf32>
    %89 = arith.mulf %87, %88 : vector<16x16xf32>
    %cst_38 = arith.constant dense<0xFF800000> : vector<16xf32>
    %90 = vector.multi_reduction <maximumf>, %89, %cst_38 [1] : vector<16x16xf32> to vector<16xf32>
    %91 = vector.shape_cast %90 : vector<16xf32> to vector<16x1xf32>
    %92 = vector.broadcast %91 : vector<16x1xf32> to vector<16x16xf32>
    %93 = arith.subf %89, %92 : vector<16x16xf32>
    %94 = math.exp %93 : vector<16x16xf32>
    %cst_39 = arith.constant dense<0.000000e+00> : vector<16xf32>
    %95 = vector.multi_reduction <add>, %94, %cst_39 [1] : vector<16x16xf32> to vector<16xf32>
    %96 = vector.shape_cast %95 : vector<16xf32> to vector<16x1xf32>
    %97 = tpu.reciprocal %96 {approx = true} : vector<16x1xf32> -> vector<16x1xf32>
    %98 = vector.broadcast %97 : vector<16x1xf32> to vector<16x16xf32>
    %99 = arith.mulf %94, %98 : vector<16x16xf32>
    %cst_40 = arith.constant dense<0.000000e+00> : vector<16x8xf32>
    %100 = tpu.matmul %99, %86, %cst_40 {dimension_numbers = #tpu.dot_dimension_numbers<[1], [0], [0], [1], [0, 0, 1, 1], [], []>} : vector<16x16xf32>, vector<16x8xf32>, vector<16x8xf32> -> vector<16x8xf32>
    %101 = vector.extract_strided_slice %38 {offsets = [16, 0], sizes = [8, 32], strides = [1, 1]} : vector<32x32xf32> to vector<8x32xf32>
    %102 = arith.truncf %100 : vector<16x8xf32> to vector<16x8xbf16>
    %103 = arith.truncf %101 : vector<8x32xf32> to vector<8x32xbf16>
    %cst_41 = arith.constant dense<0.000000e+00> : vector<16x32xf32>
    %104 = tpu.matmul %102, %103, %cst_41 {dimension_numbers = #tpu.dot_dimension_numbers<[1], [0], [0], [1], [0, 0, 1, 1], [], []>} : vector<16x8xbf16>, vector<8x32xbf16>, vector<16x32xf32> -> vector<16x32xf32>
    %105 = arith.addf %83, %104 : vector<16x32xf32>
    %106 = vector.extract_strided_slice %36 {offsets = [0, 24], sizes = [16, 8], strides = [1, 1]} : vector<16x96xf32> to vector<16x8xf32>
    %107 = vector.extract_strided_slice %36 {offsets = [0, 56], sizes = [16, 8], strides = [1, 1]} : vector<16x96xf32> to vector<16x8xf32>
    %108 = vector.extract_strided_slice %36 {offsets = [0, 88], sizes = [16, 8], strides = [1, 1]} : vector<16x96xf32> to vector<16x8xf32>
    %cst_42 = arith.constant dense<0.000000e+00> : vector<16x16xf32>
    %109 = tpu.matmul %106, %107, %cst_42 {dimension_numbers = #tpu.dot_dimension_numbers<[1], [1], [0], [0], [0, 0, 1, 0], [], []>} : vector<16x8xf32>, vector<16x8xf32>, vector<16x16xf32> -> vector<16x16xf32>
    %cst_43 = arith.constant 0.353553385 : f32
    %110 = vector.broadcast %cst_43 : f32 to vector<16x16xf32>
    %111 = arith.mulf %109, %110 : vector<16x16xf32>
    %cst_44 = arith.constant dense<0xFF800000> : vector<16xf32>
    %112 = vector.multi_reduction <maximumf>, %111, %cst_44 [1] : vector<16x16xf32> to vector<16xf32>
    %113 = vector.shape_cast %112 : vector<16xf32> to vector<16x1xf32>
    %114 = vector.broadcast %113 : vector<16x1xf32> to vector<16x16xf32>
    %115 = arith.subf %111, %114 : vector<16x16xf32>
    %116 = math.exp %115 : vector<16x16xf32>
    %cst_45 = arith.constant dense<0.000000e+00> : vector<16xf32>
    %117 = vector.multi_reduction <add>, %116, %cst_45 [1] : vector<16x16xf32> to vector<16xf32>
    %118 = vector.shape_cast %117 : vector<16xf32> to vector<16x1xf32>
    %119 = tpu.reciprocal %118 {approx = true} : vector<16x1xf32> -> vector<16x1xf32>
    %120 = vector.broadcast %119 : vector<16x1xf32> to vector<16x16xf32>
    %121 = arith.mulf %116, %120 : vector<16x16xf32>
    %cst_46 = arith.constant dense<0.000000e+00> : vector<16x8xf32>
    %122 = tpu.matmul %121, %108, %cst_46 {dimension_numbers = #tpu.dot_dimension_numbers<[1], [0], [0], [1], [0, 0, 1, 1], [], []>} : vector<16x16xf32>, vector<16x8xf32>, vector<16x8xf32> -> vector<16x8xf32>
    %123 = vector.extract_strided_slice %38 {offsets = [24, 0], sizes = [8, 32], strides = [1, 1]} : vector<32x32xf32> to vector<8x32xf32>
    %124 = arith.truncf %122 : vector<16x8xf32> to vector<16x8xbf16>
    %125 = arith.truncf %123 : vector<8x32xf32> to vector<8x32xbf16>
    %cst_47 = arith.constant dense<0.000000e+00> : vector<16x32xf32>
    %126 = tpu.matmul %124, %125, %cst_47 {dimension_numbers = #tpu.dot_dimension_numbers<[1], [0], [0], [1], [0, 0, 1, 1], [], []>} : vector<16x8xbf16>, vector<8x32xbf16>, vector<16x32xf32> -> vector<16x32xf32>
    %127 = arith.addf %105, %126 : vector<16x32xf32>
    %128 = arith.addf %0, %127 : vector<16x32xf32>
    %c0_48 = arith.constant 0 : index
    %c0_49 = arith.constant 0 : index
    %c0_50 = arith.constant 0 : index
    %129 = vector.load %arg10[%c0_48, %c0_49, %c0_50] : memref<2x1x32xf32, #tpu.memory_space<vmem>>, vector<1x1x32xf32>
    %130 = vector.shape_cast %129 : vector<1x1x32xf32> to vector<1x32xf32>
    %131 = vector.broadcast %130 : vector<1x32xf32> to vector<16x32xf32>
    %132 = arith.addf %128, %131 : vector<16x32xf32>
    %c0_51 = arith.constant 0 : index
    %c0_52 = arith.constant 0 : index
    %c0_53 = arith.constant 0 : index
    %133 = vector.load %arg11[%c0_51, %c0_52, %c0_53] : memref<2x1x32xf32, #tpu.memory_space<vmem>>, vector<1x1x32xf32>
    %134 = vector.shape_cast %133 : vector<1x1x32xf32> to vector<1x32xf32>
    %c0_54 = arith.constant 0 : index
    %c0_55 = arith.constant 0 : index
    %c0_56 = arith.constant 0 : index
    %135 = vector.load %arg12[%c0_54, %c0_55, %c0_56] : memref<2x1x32xf32, #tpu.memory_space<vmem>>, vector<1x1x32xf32>
    %136 = vector.shape_cast %135 : vector<1x1x32xf32> to vector<1x32xf32>
    %cst_57 = arith.constant dense<0.000000e+00> : vector<16xf32>
    %137 = vector.multi_reduction <add>, %132, %cst_57 [1] : vector<16x32xf32> to vector<16xf32>
    %138 = vector.shape_cast %137 : vector<16xf32> to vector<16x1xf32>
    %cst_58 = arith.constant 3.200000e+01 : f32
    %139 = vector.broadcast %cst_58 : f32 to vector<16x1xf32>
    %140 = arith.divf %138, %139 : vector<16x1xf32>
    %141 = vector.broadcast %140 : vector<16x1xf32> to vector<16x32xf32>
    %142 = arith.subf %132, %141 : vector<16x32xf32>
    %143 = arith.mulf %142, %142 : vector<16x32xf32>
    %cst_59 = arith.constant dense<0.000000e+00> : vector<16xf32>
    %144 = vector.multi_reduction <add>, %143, %cst_59 [1] : vector<16x32xf32> to vector<16xf32>
    %145 = vector.shape_cast %144 : vector<16xf32> to vector<16x1xf32>
    %cst_60 = arith.constant 3.200000e+01 : f32
    %146 = vector.broadcast %cst_60 : f32 to vector<16x1xf32>
    %147 = arith.divf %145, %146 : vector<16x1xf32>
    %148 = vector.broadcast %140 : vector<16x1xf32> to vector<16x32xf32>
    %149 = arith.subf %132, %148 : vector<16x32xf32>
    %cst_61 = arith.constant 9.99999974E-6 : f32
    %150 = vector.broadcast %cst_61 : f32 to vector<16x1xf32>
    %151 = arith.addf %147, %150 : vector<16x1xf32>
    %152 = math.rsqrt %151 : vector<16x1xf32>
    %153 = vector.broadcast %152 : vector<16x1xf32> to vector<16x32xf32>
    %154 = arith.mulf %149, %153 : vector<16x32xf32>
    %155 = vector.broadcast %134 : vector<1x32xf32> to vector<16x32xf32>
    %156 = arith.mulf %154, %155 : vector<16x32xf32>
    %157 = vector.broadcast %136 : vector<1x32xf32> to vector<16x32xf32>
    %158 = arith.addf %156, %157 : vector<16x32xf32>
    %c0_62 = arith.constant 0 : index
    %c0_63 = arith.constant 0 : index
    %c0_64 = arith.constant 0 : index
    %159 = vector.load %arg13[%c0_62, %c0_63, %c0_64] : memref<2x32x64xf32, #tpu.memory_space<vmem>>, vector<1x32x64xf32>
    %160 = vector.shape_cast %159 : vector<1x32x64xf32> to vector<32x64xf32>
    %161 = arith.truncf %158 : vector<16x32xf32> to vector<16x32xbf16>
    %162 = arith.truncf %160 : vector<32x64xf32> to vector<32x64xbf16>
    %cst_65 = arith.constant dense<0.000000e+00> : vector<16x64xf32>
    %163 = tpu.matmul %161, %162, %cst_65 {dimension_numbers = #tpu.dot_dimension_numbers<[1], [0], [0], [1], [0, 0, 1, 1], [], []>} : vector<16x32xbf16>, vector<32x64xbf16>, vector<16x64xf32> -> vector<16x64xf32>
    %c0_66 = arith.constant 0 : index
    %c0_67 = arith.constant 0 : index
    %c0_68 = arith.constant 0 : index
    %164 = vector.load %arg14[%c0_66, %c0_67, %c0_68] : memref<2x1x64xf32, #tpu.memory_space<vmem>>, vector<1x1x64xf32>
    %165 = vector.shape_cast %164 : vector<1x1x64xf32> to vector<1x64xf32>
    %166 = vector.broadcast %165 : vector<1x64xf32> to vector<16x64xf32>
    %167 = arith.addf %163, %166 : vector<16x64xf32>
    %cst_69 = arith.constant 0.000000e+00 : f32
    %168 = vector.broadcast %cst_69 : f32 to vector<16x64xf32>
    %169 = arith.maximumf %167, %168 : vector<16x64xf32>
    %c0_70 = arith.constant 0 : index
    %c0_71 = arith.constant 0 : index
    %c0_72 = arith.constant 0 : index
    %170 = vector.load %arg15[%c0_70, %c0_71, %c0_72] : memref<2x64x32xf32, #tpu.memory_space<vmem>>, vector<1x64x32xf32>
    %171 = vector.shape_cast %170 : vector<1x64x32xf32> to vector<64x32xf32>
    %172 = arith.truncf %169 : vector<16x64xf32> to vector<16x64xbf16>
    %173 = arith.truncf %171 : vector<64x32xf32> to vector<64x32xbf16>
    %cst_73 = arith.constant dense<0.000000e+00> : vector<16x32xf32>
    %174 = tpu.matmul %172, %173, %cst_73 {dimension_numbers = #tpu.dot_dimension_numbers<[1], [0], [0], [1], [0, 0, 1, 1], [], []>} : vector<16x64xbf16>, vector<64x32xbf16>, vector<16x32xf32> -> vector<16x32xf32>
    %175 = arith.addf %132, %174 : vector<16x32xf32>
    %c0_74 = arith.constant 0 : index
    %c0_75 = arith.constant 0 : index
    %c0_76 = arith.constant 0 : index
    %176 = vector.load %arg16[%c0_74, %c0_75, %c0_76] : memref<2x1x32xf32, #tpu.memory_space<vmem>>, vector<1x1x32xf32>
    %177 = vector.shape_cast %176 : vector<1x1x32xf32> to vector<1x32xf32>
    %178 = vector.broadcast %177 : vector<1x32xf32> to vector<16x32xf32>
    %179 = arith.addf %175, %178 : vector<16x32xf32>
    %180 = vector.broadcast %1 : vector<16x1xf32> to vector<16x32xf32>
    %181 = arith.mulf %179, %180 : vector<16x32xf32>
    %c1 = arith.constant 1 : index
    %c0_77 = arith.constant 0 : index
    %c0_78 = arith.constant 0 : index
    %182 = vector.load %arg5[%c1, %c0_77, %c0_78] : memref<2x1x32xf32, #tpu.memory_space<vmem>>, vector<1x1x32xf32>
    %183 = vector.shape_cast %182 : vector<1x1x32xf32> to vector<1x32xf32>
    %c1_79 = arith.constant 1 : index
    %c0_80 = arith.constant 0 : index
    %c0_81 = arith.constant 0 : index
    %184 = vector.load %arg6[%c1_79, %c0_80, %c0_81] : memref<2x1x32xf32, #tpu.memory_space<vmem>>, vector<1x1x32xf32>
    %185 = vector.shape_cast %184 : vector<1x1x32xf32> to vector<1x32xf32>
    %cst_82 = arith.constant dense<0.000000e+00> : vector<16xf32>
    %186 = vector.multi_reduction <add>, %181, %cst_82 [1] : vector<16x32xf32> to vector<16xf32>
    %187 = vector.shape_cast %186 : vector<16xf32> to vector<16x1xf32>
    %cst_83 = arith.constant 3.200000e+01 : f32
    %188 = vector.broadcast %cst_83 : f32 to vector<16x1xf32>
    %189 = arith.divf %187, %188 : vector<16x1xf32>
    %190 = vector.broadcast %189 : vector<16x1xf32> to vector<16x32xf32>
    %191 = arith.subf %181, %190 : vector<16x32xf32>
    %192 = arith.mulf %191, %191 : vector<16x32xf32>
    %cst_84 = arith.constant dense<0.000000e+00> : vector<16xf32>
    %193 = vector.multi_reduction <add>, %192, %cst_84 [1] : vector<16x32xf32> to vector<16xf32>
    %194 = vector.shape_cast %193 : vector<16xf32> to vector<16x1xf32>
    %cst_85 = arith.constant 3.200000e+01 : f32
    %195 = vector.broadcast %cst_85 : f32 to vector<16x1xf32>
    %196 = arith.divf %194, %195 : vector<16x1xf32>
    %197 = vector.broadcast %189 : vector<16x1xf32> to vector<16x32xf32>
    %198 = arith.subf %181, %197 : vector<16x32xf32>
    %cst_86 = arith.constant 9.99999974E-6 : f32
    %199 = vector.broadcast %cst_86 : f32 to vector<16x1xf32>
    %200 = arith.addf %196, %199 : vector<16x1xf32>
    %201 = math.rsqrt %200 : vector<16x1xf32>
    %202 = vector.broadcast %201 : vector<16x1xf32> to vector<16x32xf32>
    %203 = arith.mulf %198, %202 : vector<16x32xf32>
    %204 = vector.broadcast %183 : vector<1x32xf32> to vector<16x32xf32>
    %205 = arith.mulf %203, %204 : vector<16x32xf32>
    %206 = vector.broadcast %185 : vector<1x32xf32> to vector<16x32xf32>
    %207 = arith.addf %205, %206 : vector<16x32xf32>
    %c1_87 = arith.constant 1 : index
    %c0_88 = arith.constant 0 : index
    %c0_89 = arith.constant 0 : index
    %208 = vector.load %arg7[%c1_87, %c0_88, %c0_89] : memref<2x32x96xf32, #tpu.memory_space<vmem>>, vector<1x32x96xf32>
    %209 = vector.shape_cast %208 : vector<1x32x96xf32> to vector<32x96xf32>
    %210 = arith.truncf %207 : vector<16x32xf32> to vector<16x32xbf16>
    %211 = arith.truncf %209 : vector<32x96xf32> to vector<32x96xbf16>
    %cst_90 = arith.constant dense<0.000000e+00> : vector<16x96xf32>
    %212 = tpu.matmul %210, %211, %cst_90 {dimension_numbers = #tpu.dot_dimension_numbers<[1], [0], [0], [1], [0, 0, 1, 1], [], []>} : vector<16x32xbf16>, vector<32x96xbf16>, vector<16x96xf32> -> vector<16x96xf32>
    %c1_91 = arith.constant 1 : index
    %c0_92 = arith.constant 0 : index
    %c0_93 = arith.constant 0 : index
    %213 = vector.load %arg8[%c1_91, %c0_92, %c0_93] : memref<2x1x96xf32, #tpu.memory_space<vmem>>, vector<1x1x96xf32>
    %214 = vector.shape_cast %213 : vector<1x1x96xf32> to vector<1x96xf32>
    %215 = vector.broadcast %214 : vector<1x96xf32> to vector<16x96xf32>
    %216 = arith.addf %212, %215 : vector<16x96xf32>
    %c1_94 = arith.constant 1 : index
    %c0_95 = arith.constant 0 : index
    %c0_96 = arith.constant 0 : index
    %217 = vector.load %arg9[%c1_94, %c0_95, %c0_96] : memref<2x32x32xf32, #tpu.memory_space<vmem>>, vector<1x32x32xf32>
    %218 = vector.shape_cast %217 : vector<1x32x32xf32> to vector<32x32xf32>
    %cst_97 = arith.constant 0.000000e+00 : f32
    %219 = vector.broadcast %cst_97 : f32 to vector<16x32xf32>
    %220 = vector.extract_strided_slice %216 {offsets = [0, 0], sizes = [16, 8], strides = [1, 1]} : vector<16x96xf32> to vector<16x8xf32>
    %221 = vector.extract_strided_slice %216 {offsets = [0, 32], sizes = [16, 8], strides = [1, 1]} : vector<16x96xf32> to vector<16x8xf32>
    %222 = vector.extract_strided_slice %216 {offsets = [0, 64], sizes = [16, 8], strides = [1, 1]} : vector<16x96xf32> to vector<16x8xf32>
    %cst_98 = arith.constant dense<0.000000e+00> : vector<16x16xf32>
    %223 = tpu.matmul %220, %221, %cst_98 {dimension_numbers = #tpu.dot_dimension_numbers<[1], [1], [0], [0], [0, 0, 1, 0], [], []>} : vector<16x8xf32>, vector<16x8xf32>, vector<16x16xf32> -> vector<16x16xf32>
    %cst_99 = arith.constant 0.353553385 : f32
    %224 = vector.broadcast %cst_99 : f32 to vector<16x16xf32>
    %225 = arith.mulf %223, %224 : vector<16x16xf32>
    %cst_100 = arith.constant dense<0xFF800000> : vector<16xf32>
    %226 = vector.multi_reduction <maximumf>, %225, %cst_100 [1] : vector<16x16xf32> to vector<16xf32>
    %227 = vector.shape_cast %226 : vector<16xf32> to vector<16x1xf32>
    %228 = vector.broadcast %227 : vector<16x1xf32> to vector<16x16xf32>
    %229 = arith.subf %225, %228 : vector<16x16xf32>
    %230 = math.exp %229 : vector<16x16xf32>
    %cst_101 = arith.constant dense<0.000000e+00> : vector<16xf32>
    %231 = vector.multi_reduction <add>, %230, %cst_101 [1] : vector<16x16xf32> to vector<16xf32>
    %232 = vector.shape_cast %231 : vector<16xf32> to vector<16x1xf32>
    %233 = tpu.reciprocal %232 {approx = true} : vector<16x1xf32> -> vector<16x1xf32>
    %234 = vector.broadcast %233 : vector<16x1xf32> to vector<16x16xf32>
    %235 = arith.mulf %230, %234 : vector<16x16xf32>
    %cst_102 = arith.constant dense<0.000000e+00> : vector<16x8xf32>
    %236 = tpu.matmul %235, %222, %cst_102 {dimension_numbers = #tpu.dot_dimension_numbers<[1], [0], [0], [1], [0, 0, 1, 1], [], []>} : vector<16x16xf32>, vector<16x8xf32>, vector<16x8xf32> -> vector<16x8xf32>
    %237 = vector.extract_strided_slice %218 {offsets = [0, 0], sizes = [8, 32], strides = [1, 1]} : vector<32x32xf32> to vector<8x32xf32>
    %238 = arith.truncf %236 : vector<16x8xf32> to vector<16x8xbf16>
    %239 = arith.truncf %237 : vector<8x32xf32> to vector<8x32xbf16>
    %cst_103 = arith.constant dense<0.000000e+00> : vector<16x32xf32>
    %240 = tpu.matmul %238, %239, %cst_103 {dimension_numbers = #tpu.dot_dimension_numbers<[1], [0], [0], [1], [0, 0, 1, 1], [], []>} : vector<16x8xbf16>, vector<8x32xbf16>, vector<16x32xf32> -> vector<16x32xf32>
    %241 = arith.addf %219, %240 : vector<16x32xf32>
    %242 = vector.extract_strided_slice %216 {offsets = [0, 8], sizes = [16, 8], strides = [1, 1]} : vector<16x96xf32> to vector<16x8xf32>
    %243 = vector.extract_strided_slice %216 {offsets = [0, 40], sizes = [16, 8], strides = [1, 1]} : vector<16x96xf32> to vector<16x8xf32>
    %244 = vector.extract_strided_slice %216 {offsets = [0, 72], sizes = [16, 8], strides = [1, 1]} : vector<16x96xf32> to vector<16x8xf32>
    %cst_104 = arith.constant dense<0.000000e+00> : vector<16x16xf32>
    %245 = tpu.matmul %242, %243, %cst_104 {dimension_numbers = #tpu.dot_dimension_numbers<[1], [1], [0], [0], [0, 0, 1, 0], [], []>} : vector<16x8xf32>, vector<16x8xf32>, vector<16x16xf32> -> vector<16x16xf32>
    %cst_105 = arith.constant 0.353553385 : f32
    %246 = vector.broadcast %cst_105 : f32 to vector<16x16xf32>
    %247 = arith.mulf %245, %246 : vector<16x16xf32>
    %cst_106 = arith.constant dense<0xFF800000> : vector<16xf32>
    %248 = vector.multi_reduction <maximumf>, %247, %cst_106 [1] : vector<16x16xf32> to vector<16xf32>
    %249 = vector.shape_cast %248 : vector<16xf32> to vector<16x1xf32>
    %250 = vector.broadcast %249 : vector<16x1xf32> to vector<16x16xf32>
    %251 = arith.subf %247, %250 : vector<16x16xf32>
    %252 = math.exp %251 : vector<16x16xf32>
    %cst_107 = arith.constant dense<0.000000e+00> : vector<16xf32>
    %253 = vector.multi_reduction <add>, %252, %cst_107 [1] : vector<16x16xf32> to vector<16xf32>
    %254 = vector.shape_cast %253 : vector<16xf32> to vector<16x1xf32>
    %255 = tpu.reciprocal %254 {approx = true} : vector<16x1xf32> -> vector<16x1xf32>
    %256 = vector.broadcast %255 : vector<16x1xf32> to vector<16x16xf32>
    %257 = arith.mulf %252, %256 : vector<16x16xf32>
    %cst_108 = arith.constant dense<0.000000e+00> : vector<16x8xf32>
    %258 = tpu.matmul %257, %244, %cst_108 {dimension_numbers = #tpu.dot_dimension_numbers<[1], [0], [0], [1], [0, 0, 1, 1], [], []>} : vector<16x16xf32>, vector<16x8xf32>, vector<16x8xf32> -> vector<16x8xf32>
    %259 = vector.extract_strided_slice %218 {offsets = [8, 0], sizes = [8, 32], strides = [1, 1]} : vector<32x32xf32> to vector<8x32xf32>
    %260 = arith.truncf %258 : vector<16x8xf32> to vector<16x8xbf16>
    %261 = arith.truncf %259 : vector<8x32xf32> to vector<8x32xbf16>
    %cst_109 = arith.constant dense<0.000000e+00> : vector<16x32xf32>
    %262 = tpu.matmul %260, %261, %cst_109 {dimension_numbers = #tpu.dot_dimension_numbers<[1], [0], [0], [1], [0, 0, 1, 1], [], []>} : vector<16x8xbf16>, vector<8x32xbf16>, vector<16x32xf32> -> vector<16x32xf32>
    %263 = arith.addf %241, %262 : vector<16x32xf32>
    %264 = vector.extract_strided_slice %216 {offsets = [0, 16], sizes = [16, 8], strides = [1, 1]} : vector<16x96xf32> to vector<16x8xf32>
    %265 = vector.extract_strided_slice %216 {offsets = [0, 48], sizes = [16, 8], strides = [1, 1]} : vector<16x96xf32> to vector<16x8xf32>
    %266 = vector.extract_strided_slice %216 {offsets = [0, 80], sizes = [16, 8], strides = [1, 1]} : vector<16x96xf32> to vector<16x8xf32>
    %cst_110 = arith.constant dense<0.000000e+00> : vector<16x16xf32>
    %267 = tpu.matmul %264, %265, %cst_110 {dimension_numbers = #tpu.dot_dimension_numbers<[1], [1], [0], [0], [0, 0, 1, 0], [], []>} : vector<16x8xf32>, vector<16x8xf32>, vector<16x16xf32> -> vector<16x16xf32>
    %cst_111 = arith.constant 0.353553385 : f32
    %268 = vector.broadcast %cst_111 : f32 to vector<16x16xf32>
    %269 = arith.mulf %267, %268 : vector<16x16xf32>
    %cst_112 = arith.constant dense<0xFF800000> : vector<16xf32>
    %270 = vector.multi_reduction <maximumf>, %269, %cst_112 [1] : vector<16x16xf32> to vector<16xf32>
    %271 = vector.shape_cast %270 : vector<16xf32> to vector<16x1xf32>
    %272 = vector.broadcast %271 : vector<16x1xf32> to vector<16x16xf32>
    %273 = arith.subf %269, %272 : vector<16x16xf32>
    %274 = math.exp %273 : vector<16x16xf32>
    %cst_113 = arith.constant dense<0.000000e+00> : vector<16xf32>
    %275 = vector.multi_reduction <add>, %274, %cst_113 [1] : vector<16x16xf32> to vector<16xf32>
    %276 = vector.shape_cast %275 : vector<16xf32> to vector<16x1xf32>
    %277 = tpu.reciprocal %276 {approx = true} : vector<16x1xf32> -> vector<16x1xf32>
    %278 = vector.broadcast %277 : vector<16x1xf32> to vector<16x16xf32>
    %279 = arith.mulf %274, %278 : vector<16x16xf32>
    %cst_114 = arith.constant dense<0.000000e+00> : vector<16x8xf32>
    %280 = tpu.matmul %279, %266, %cst_114 {dimension_numbers = #tpu.dot_dimension_numbers<[1], [0], [0], [1], [0, 0, 1, 1], [], []>} : vector<16x16xf32>, vector<16x8xf32>, vector<16x8xf32> -> vector<16x8xf32>
    %281 = vector.extract_strided_slice %218 {offsets = [16, 0], sizes = [8, 32], strides = [1, 1]} : vector<32x32xf32> to vector<8x32xf32>
    %282 = arith.truncf %280 : vector<16x8xf32> to vector<16x8xbf16>
    %283 = arith.truncf %281 : vector<8x32xf32> to vector<8x32xbf16>
    %cst_115 = arith.constant dense<0.000000e+00> : vector<16x32xf32>
    %284 = tpu.matmul %282, %283, %cst_115 {dimension_numbers = #tpu.dot_dimension_numbers<[1], [0], [0], [1], [0, 0, 1, 1], [], []>} : vector<16x8xbf16>, vector<8x32xbf16>, vector<16x32xf32> -> vector<16x32xf32>
    %285 = arith.addf %263, %284 : vector<16x32xf32>
    %286 = vector.extract_strided_slice %216 {offsets = [0, 24], sizes = [16, 8], strides = [1, 1]} : vector<16x96xf32> to vector<16x8xf32>
    %287 = vector.extract_strided_slice %216 {offsets = [0, 56], sizes = [16, 8], strides = [1, 1]} : vector<16x96xf32> to vector<16x8xf32>
    %288 = vector.extract_strided_slice %216 {offsets = [0, 88], sizes = [16, 8], strides = [1, 1]} : vector<16x96xf32> to vector<16x8xf32>
    %cst_116 = arith.constant dense<0.000000e+00> : vector<16x16xf32>
    %289 = tpu.matmul %286, %287, %cst_116 {dimension_numbers = #tpu.dot_dimension_numbers<[1], [1], [0], [0], [0, 0, 1, 0], [], []>} : vector<16x8xf32>, vector<16x8xf32>, vector<16x16xf32> -> vector<16x16xf32>
    %cst_117 = arith.constant 0.353553385 : f32
    %290 = vector.broadcast %cst_117 : f32 to vector<16x16xf32>
    %291 = arith.mulf %289, %290 : vector<16x16xf32>
    %cst_118 = arith.constant dense<0xFF800000> : vector<16xf32>
    %292 = vector.multi_reduction <maximumf>, %291, %cst_118 [1] : vector<16x16xf32> to vector<16xf32>
    %293 = vector.shape_cast %292 : vector<16xf32> to vector<16x1xf32>
    %294 = vector.broadcast %293 : vector<16x1xf32> to vector<16x16xf32>
    %295 = arith.subf %291, %294 : vector<16x16xf32>
    %296 = math.exp %295 : vector<16x16xf32>
    %cst_119 = arith.constant dense<0.000000e+00> : vector<16xf32>
    %297 = vector.multi_reduction <add>, %296, %cst_119 [1] : vector<16x16xf32> to vector<16xf32>
    %298 = vector.shape_cast %297 : vector<16xf32> to vector<16x1xf32>
    %299 = tpu.reciprocal %298 {approx = true} : vector<16x1xf32> -> vector<16x1xf32>
    %300 = vector.broadcast %299 : vector<16x1xf32> to vector<16x16xf32>
    %301 = arith.mulf %296, %300 : vector<16x16xf32>
    %cst_120 = arith.constant dense<0.000000e+00> : vector<16x8xf32>
    %302 = tpu.matmul %301, %288, %cst_120 {dimension_numbers = #tpu.dot_dimension_numbers<[1], [0], [0], [1], [0, 0, 1, 1], [], []>} : vector<16x16xf32>, vector<16x8xf32>, vector<16x8xf32> -> vector<16x8xf32>
    %303 = vector.extract_strided_slice %218 {offsets = [24, 0], sizes = [8, 32], strides = [1, 1]} : vector<32x32xf32> to vector<8x32xf32>
    %304 = arith.truncf %302 : vector<16x8xf32> to vector<16x8xbf16>
    %305 = arith.truncf %303 : vector<8x32xf32> to vector<8x32xbf16>
    %cst_121 = arith.constant dense<0.000000e+00> : vector<16x32xf32>
    %306 = tpu.matmul %304, %305, %cst_121 {dimension_numbers = #tpu.dot_dimension_numbers<[1], [0], [0], [1], [0, 0, 1, 1], [], []>} : vector<16x8xbf16>, vector<8x32xbf16>, vector<16x32xf32> -> vector<16x32xf32>
    %307 = arith.addf %285, %306 : vector<16x32xf32>
    %308 = arith.addf %181, %307 : vector<16x32xf32>
    %c1_122 = arith.constant 1 : index
    %c0_123 = arith.constant 0 : index
    %c0_124 = arith.constant 0 : index
    %309 = vector.load %arg10[%c1_122, %c0_123, %c0_124] : memref<2x1x32xf32, #tpu.memory_space<vmem>>, vector<1x1x32xf32>
    %310 = vector.shape_cast %309 : vector<1x1x32xf32> to vector<1x32xf32>
    %311 = vector.broadcast %310 : vector<1x32xf32> to vector<16x32xf32>
    %312 = arith.addf %308, %311 : vector<16x32xf32>
    %c1_125 = arith.constant 1 : index
    %c0_126 = arith.constant 0 : index
    %c0_127 = arith.constant 0 : index
    %313 = vector.load %arg11[%c1_125, %c0_126, %c0_127] : memref<2x1x32xf32, #tpu.memory_space<vmem>>, vector<1x1x32xf32>
    %314 = vector.shape_cast %313 : vector<1x1x32xf32> to vector<1x32xf32>
    %c1_128 = arith.constant 1 : index
    %c0_129 = arith.constant 0 : index
    %c0_130 = arith.constant 0 : index
    %315 = vector.load %arg12[%c1_128, %c0_129, %c0_130] : memref<2x1x32xf32, #tpu.memory_space<vmem>>, vector<1x1x32xf32>
    %316 = vector.shape_cast %315 : vector<1x1x32xf32> to vector<1x32xf32>
    %cst_131 = arith.constant dense<0.000000e+00> : vector<16xf32>
    %317 = vector.multi_reduction <add>, %312, %cst_131 [1] : vector<16x32xf32> to vector<16xf32>
    %318 = vector.shape_cast %317 : vector<16xf32> to vector<16x1xf32>
    %cst_132 = arith.constant 3.200000e+01 : f32
    %319 = vector.broadcast %cst_132 : f32 to vector<16x1xf32>
    %320 = arith.divf %318, %319 : vector<16x1xf32>
    %321 = vector.broadcast %320 : vector<16x1xf32> to vector<16x32xf32>
    %322 = arith.subf %312, %321 : vector<16x32xf32>
    %323 = arith.mulf %322, %322 : vector<16x32xf32>
    %cst_133 = arith.constant dense<0.000000e+00> : vector<16xf32>
    %324 = vector.multi_reduction <add>, %323, %cst_133 [1] : vector<16x32xf32> to vector<16xf32>
    %325 = vector.shape_cast %324 : vector<16xf32> to vector<16x1xf32>
    %cst_134 = arith.constant 3.200000e+01 : f32
    %326 = vector.broadcast %cst_134 : f32 to vector<16x1xf32>
    %327 = arith.divf %325, %326 : vector<16x1xf32>
    %328 = vector.broadcast %320 : vector<16x1xf32> to vector<16x32xf32>
    %329 = arith.subf %312, %328 : vector<16x32xf32>
    %cst_135 = arith.constant 9.99999974E-6 : f32
    %330 = vector.broadcast %cst_135 : f32 to vector<16x1xf32>
    %331 = arith.addf %327, %330 : vector<16x1xf32>
    %332 = math.rsqrt %331 : vector<16x1xf32>
    %333 = vector.broadcast %332 : vector<16x1xf32> to vector<16x32xf32>
    %334 = arith.mulf %329, %333 : vector<16x32xf32>
    %335 = vector.broadcast %314 : vector<1x32xf32> to vector<16x32xf32>
    %336 = arith.mulf %334, %335 : vector<16x32xf32>
    %337 = vector.broadcast %316 : vector<1x32xf32> to vector<16x32xf32>
    %338 = arith.addf %336, %337 : vector<16x32xf32>
    %c1_136 = arith.constant 1 : index
    %c0_137 = arith.constant 0 : index
    %c0_138 = arith.constant 0 : index
    %339 = vector.load %arg13[%c1_136, %c0_137, %c0_138] : memref<2x32x64xf32, #tpu.memory_space<vmem>>, vector<1x32x64xf32>
    %340 = vector.shape_cast %339 : vector<1x32x64xf32> to vector<32x64xf32>
    %341 = arith.truncf %338 : vector<16x32xf32> to vector<16x32xbf16>
    %342 = arith.truncf %340 : vector<32x64xf32> to vector<32x64xbf16>
    %cst_139 = arith.constant dense<0.000000e+00> : vector<16x64xf32>
    %343 = tpu.matmul %341, %342, %cst_139 {dimension_numbers = #tpu.dot_dimension_numbers<[1], [0], [0], [1], [0, 0, 1, 1], [], []>} : vector<16x32xbf16>, vector<32x64xbf16>, vector<16x64xf32> -> vector<16x64xf32>
    %c1_140 = arith.constant 1 : index
    %c0_141 = arith.constant 0 : index
    %c0_142 = arith.constant 0 : index
    %344 = vector.load %arg14[%c1_140, %c0_141, %c0_142] : memref<2x1x64xf32, #tpu.memory_space<vmem>>, vector<1x1x64xf32>
    %345 = vector.shape_cast %344 : vector<1x1x64xf32> to vector<1x64xf32>
    %346 = vector.broadcast %345 : vector<1x64xf32> to vector<16x64xf32>
    %347 = arith.addf %343, %346 : vector<16x64xf32>
    %cst_143 = arith.constant 0.000000e+00 : f32
    %348 = vector.broadcast %cst_143 : f32 to vector<16x64xf32>
    %349 = arith.maximumf %347, %348 : vector<16x64xf32>
    %c1_144 = arith.constant 1 : index
    %c0_145 = arith.constant 0 : index
    %c0_146 = arith.constant 0 : index
    %350 = vector.load %arg15[%c1_144, %c0_145, %c0_146] : memref<2x64x32xf32, #tpu.memory_space<vmem>>, vector<1x64x32xf32>
    %351 = vector.shape_cast %350 : vector<1x64x32xf32> to vector<64x32xf32>
    %352 = arith.truncf %349 : vector<16x64xf32> to vector<16x64xbf16>
    %353 = arith.truncf %351 : vector<64x32xf32> to vector<64x32xbf16>
    %cst_147 = arith.constant dense<0.000000e+00> : vector<16x32xf32>
    %354 = tpu.matmul %352, %353, %cst_147 {dimension_numbers = #tpu.dot_dimension_numbers<[1], [0], [0], [1], [0, 0, 1, 1], [], []>} : vector<16x64xbf16>, vector<64x32xbf16>, vector<16x32xf32> -> vector<16x32xf32>
    %355 = arith.addf %312, %354 : vector<16x32xf32>
    %c1_148 = arith.constant 1 : index
    %c0_149 = arith.constant 0 : index
    %c0_150 = arith.constant 0 : index
    %356 = vector.load %arg16[%c1_148, %c0_149, %c0_150] : memref<2x1x32xf32, #tpu.memory_space<vmem>>, vector<1x1x32xf32>
    %357 = vector.shape_cast %356 : vector<1x1x32xf32> to vector<1x32xf32>
    %358 = vector.broadcast %357 : vector<1x32xf32> to vector<16x32xf32>
    %359 = arith.addf %355, %358 : vector<16x32xf32>
    %360 = vector.broadcast %1 : vector<16x1xf32> to vector<16x32xf32>
    %361 = arith.mulf %359, %360 : vector<16x32xf32>
    %c0_151 = arith.constant 0 : index
    %c0_152 = arith.constant 0 : index
    %362 = vector.load %arg2[%c0_151, %c0_152] : memref<16x24xf32, #tpu.memory_space<vmem>>, vector<16x24xf32>
    %c0_153 = arith.constant 0 : index
    %c0_154 = arith.constant 0 : index
    %363 = vector.load %arg17[%c0_153, %c0_154] : memref<56x24xf32, #tpu.memory_space<vmem>>, vector<56x24xf32>
    %364 = vector.extract_strided_slice %363 {offsets = [0, 0], sizes = [32, 24], strides = [1, 1]} : vector<56x24xf32> to vector<32x24xf32>
    %365 = arith.truncf %361 : vector<16x32xf32> to vector<16x32xbf16>
    %366 = arith.truncf %364 : vector<32x24xf32> to vector<32x24xbf16>
    %cst_155 = arith.constant dense<0.000000e+00> : vector<16x24xf32>
    %367 = tpu.matmul %365, %366, %cst_155 {dimension_numbers = #tpu.dot_dimension_numbers<[1], [0], [0], [1], [0, 0, 1, 1], [], []>} : vector<16x32xbf16>, vector<32x24xbf16>, vector<16x24xf32> -> vector<16x24xf32>
    %368 = vector.extract_strided_slice %363 {offsets = [32, 0], sizes = [24, 24], strides = [1, 1]} : vector<56x24xf32> to vector<24x24xf32>
    %369 = arith.truncf %362 : vector<16x24xf32> to vector<16x24xbf16>
    %370 = arith.truncf %368 : vector<24x24xf32> to vector<24x24xbf16>
    %cst_156 = arith.constant dense<0.000000e+00> : vector<16x24xf32>
    %371 = tpu.matmul %369, %370, %cst_156 {dimension_numbers = #tpu.dot_dimension_numbers<[1], [0], [0], [1], [0, 0, 1, 1], [], []>} : vector<16x24xbf16>, vector<24x24xbf16>, vector<16x24xf32> -> vector<16x24xf32>
    %372 = arith.addf %367, %371 : vector<16x24xf32>
    %c0_157 = arith.constant 0 : index
    %c0_158 = arith.constant 0 : index
    %373 = vector.load %arg18[%c0_157, %c0_158] : memref<1x24xf32, #tpu.memory_space<vmem>>, vector<1x24xf32>
    %374 = vector.broadcast %373 : vector<1x24xf32> to vector<16x24xf32>
    %375 = arith.addf %372, %374 : vector<16x24xf32>
    %cst_159 = arith.constant 0.000000e+00 : f32
    %376 = vector.broadcast %cst_159 : f32 to vector<16x24xf32>
    %377 = arith.maximumf %375, %376 : vector<16x24xf32>
    %c0_160 = arith.constant 0 : index
    %c0_161 = arith.constant 0 : index
    %378 = vector.load %arg3[%c0_160, %c0_161] : memref<4x16xf32, #tpu.memory_space<vmem>>, vector<4x16xf32>
    %cst_162 = arith.constant dense<0.000000e+00> : vector<4x24xf32>
    %379 = tpu.matmul %378, %377, %cst_162 {dimension_numbers = #tpu.dot_dimension_numbers<[1], [0], [0], [1], [0, 0, 1, 1], [], []>} : vector<4x16xf32>, vector<16x24xf32>, vector<4x24xf32> -> vector<4x24xf32>
    %c0_163 = arith.constant 0 : index
    %c0_164 = arith.constant 0 : index
    %380 = vector.load %arg4[%c0_163, %c0_164] : memref<4x16xf32, #tpu.memory_space<vmem>>, vector<4x16xf32>
    %cst_165 = arith.constant dense<0.000000e+00> : vector<4x24xf32>
    %381 = tpu.matmul %380, %377, %cst_165 {dimension_numbers = #tpu.dot_dimension_numbers<[1], [0], [0], [1], [0, 0, 1, 1], [], []>} : vector<4x16xf32>, vector<16x24xf32>, vector<4x24xf32> -> vector<4x24xf32>
    %c0_166 = arith.constant 0 : index
    %c0_167 = arith.constant 0 : index
    %382 = vector.load %arg19[%c0_166, %c0_167] : memref<48x24xf32, #tpu.memory_space<vmem>>, vector<48x24xf32>
    %383 = vector.extract_strided_slice %382 {offsets = [0, 0], sizes = [24, 24], strides = [1, 1]} : vector<48x24xf32> to vector<24x24xf32>
    %cst_168 = arith.constant dense<0.000000e+00> : vector<4x24xf32>
    %384 = tpu.matmul %379, %383, %cst_168 {dimension_numbers = #tpu.dot_dimension_numbers<[1], [0], [0], [1], [0, 0, 1, 1], [], []>} : vector<4x24xf32>, vector<24x24xf32>, vector<4x24xf32> -> vector<4x24xf32>
    %385 = vector.extract_strided_slice %382 {offsets = [24, 0], sizes = [24, 24], strides = [1, 1]} : vector<48x24xf32> to vector<24x24xf32>
    %cst_169 = arith.constant dense<0.000000e+00> : vector<4x24xf32>
    %386 = tpu.matmul %381, %385, %cst_169 {dimension_numbers = #tpu.dot_dimension_numbers<[1], [0], [0], [1], [0, 0, 1, 1], [], []>} : vector<4x24xf32>, vector<24x24xf32>, vector<4x24xf32> -> vector<4x24xf32>
    %387 = arith.addf %384, %386 : vector<4x24xf32>
    %c0_170 = arith.constant 0 : index
    %c0_171 = arith.constant 0 : index
    %388 = vector.load %arg20[%c0_170, %c0_171] : memref<1x24xf32, #tpu.memory_space<vmem>>, vector<1x24xf32>
    %389 = vector.broadcast %388 : vector<1x24xf32> to vector<4x24xf32>
    %390 = arith.addf %387, %389 : vector<4x24xf32>
    %cst_172 = arith.constant 0.000000e+00 : f32
    %391 = vector.broadcast %cst_172 : f32 to vector<4x24xf32>
    %392 = arith.maximumf %390, %391 : vector<4x24xf32>
    %c0_173 = arith.constant 0 : index
    %c0_174 = arith.constant 0 : index
    %393 = vector.load %arg21[%c0_173, %c0_174] : memref<24x1xf32, #tpu.memory_space<vmem>>, vector<24x1xf32>
    %cst_175 = arith.constant dense<0.000000e+00> : vector<4x1xf32>
    %394 = tpu.matmul %392, %393, %cst_175 {dimension_numbers = #tpu.dot_dimension_numbers<[1], [0], [0], [1], [0, 0, 1, 1], [], []>} : vector<4x24xf32>, vector<24x1xf32>, vector<4x1xf32> -> vector<4x1xf32>
    %c0_176 = arith.constant 0 : index
    %c0_177 = arith.constant 0 : index
    %395 = vector.load %arg22[%c0_176, %c0_177] : memref<1x1xf32, #tpu.memory_space<vmem>>, vector<1x1xf32>
    %396 = vector.broadcast %395 : vector<1x1xf32> to vector<4x1xf32>
    %397 = arith.addf %394, %396 : vector<4x1xf32>
    %398 = arith.negf %397 : vector<4x1xf32>
    %399 = math.exp %398 : vector<4x1xf32>
    %cst_178 = arith.constant 1.000000e+00 : f32
    %400 = vector.broadcast %cst_178 : f32 to vector<4x1xf32>
    %401 = arith.addf %400, %399 : vector<4x1xf32>
    %402 = arith.divf %400, %401 : vector<4x1xf32>
    %c0_179 = arith.constant 0 : index
    %c0_180 = arith.constant 0 : index
    %403 = vector.load %arg23[%c0_179, %c0_180] : memref<4x1xf32, #tpu.memory_space<vmem>>, vector<4x1xf32>
    tpu.vector_store %arg23[%c0_179, %c0_180], %402 {strides = array<i32>} : memref<4x1xf32, #tpu.memory_space<vmem>>, vector<4x1xf32>,
    return
  }
}

</mosaic_0001>

<llo_original>
// kernel: graphormer_forward.1
$region0: #{graphormer_forward.1}
  #allocation0 [shape = 'u32[]', space=smem, size = 0x4, offset = 0x4, fixed_abs, tag = 'smem constant byte address 0x4 - core index']
  #allocation1 [shape = 'u32[144,128]{1,0:T(1,128)}', space=vmem, size = 0x12000, scoped, tag = 'internal scratch']
  #allocation2 [shape = 'f32[1,1]{1,0:T(1,128)S(1)}', space=vmem, size = 0x200, scoped, tag = 'scoped memory for graphormer_forward.1']
  %s0 = inlined_call_operand.vmem [shape: f32[16,32], index: 0, kind: input, shape index: {}]
  %s1 = inlined_call_operand.vmem [shape: f32[16,1], index: 1, kind: input, shape index: {}]
  %s2 = inlined_call_operand.vmem [shape: f32[16,24], index: 2, kind: input, shape index: {}]
  %s3 = inlined_call_operand.vmem [shape: f32[4,16], index: 3, kind: input, shape index: {}]
  %s4 = inlined_call_operand.vmem [shape: f32[4,16], index: 4, kind: input, shape index: {}]
  %s5 = inlined_call_operand.vmem [shape: f32[2,1,32], index: 5, kind: input, shape index: {}]
  %s6 = inlined_call_operand.vmem [shape: f32[2,1,32], index: 6, kind: input, shape index: {}]
  %s7 = inlined_call_operand.vmem [shape: f32[2,32,96], index: 7, kind: input, shape index: {}]
  %s8 = inlined_call_operand.vmem [shape: f32[2,1,96], index: 8, kind: input, shape index: {}]
  %s9 = inlined_call_operand.vmem [shape: f32[2,32,32], index: 9, kind: input, shape index: {}]
  %s10 = inlined_call_operand.vmem [shape: f32[2,1,32], index: 10, kind: input, shape index: {}]
  %s11 = inlined_call_operand.vmem [shape: f32[2,1,32], index: 11, kind: input, shape index: {}]
  %s12 = inlined_call_operand.vmem [shape: f32[2,1,32], index: 12, kind: input, shape index: {}]
  %s13 = inlined_call_operand.vmem [shape: f32[2,32,64], index: 13, kind: input, shape index: {}]
  %s14 = inlined_call_operand.vmem [shape: f32[2,1,64], index: 14, kind: input, shape index: {}]
  %s15 = inlined_call_operand.vmem [shape: f32[2,64,32], index: 15, kind: input, shape index: {}]
  %s16 = inlined_call_operand.vmem [shape: f32[2,1,32], index: 16, kind: input, shape index: {}]
  %s17 = inlined_call_operand.vmem [shape: f32[56,24], index: 17, kind: input, shape index: {}]
  %s18 = inlined_call_operand.vmem [shape: f32[1,24], index: 18, kind: input, shape index: {}]
  %s19 = inlined_call_operand.vmem [shape: f32[48,24], index: 19, kind: input, shape index: {}]
  %s20 = inlined_call_operand.vmem [shape: f32[1,24], index: 20, kind: input, shape index: {}]
  %s21 = inlined_call_operand.vmem [shape: f32[24,1], index: 21, kind: input, shape index: {}]
  %s22 = inlined_call_operand.<no memory space> [shape: f32[1,1], index: 22, kind: input, shape index: {}]
  %s23 = inlined_call_operand.vmem [shape: f32[4,1], index: 23, kind: output, shape index: {}]
  %s24 = sld [smem:[#allocation0]]
  $region102: #{graphormer_forward.1} parent=0
    _
  %s26 = ssub.s32 1, %s24
  %s27 = scalar_select 0, %s26, %s24
  %v28 = vstv %s22
  %29 = vst [vmem:[#allocation2] sm:$0x1] %v28
  // Predicated region
  $region2: #{graphormer_forward.1} parent=0 // pred_check
    _
  $region3: #{graphormer_forward.1} parent=0 // pred_check_branch
    %31 = sbr.rel (0) target = $region5
  $region4: #{graphormer_forward.1} parent=0 // pred_region
    _
  $region5: #{graphormer_forward.1} parent=0 // pred_fallthru
    _
  // Predicated region
  $region6: #{graphormer_forward.1} parent=0 // pred_check
    _
  $region7: #{graphormer_forward.1} parent=0 // pred_check_branch
    %33 = sbr.rel (0) target = $region9
  $region8: #{graphormer_forward.1} parent=0 // pred_region
    _
  $region9: #{graphormer_forward.1} parent=0 // pred_fallthru
    _
  // Predicated region
  $region10: #{graphormer_forward.1} parent=0 // pred_check
    _
  $region11: #{graphormer_forward.1} parent=0 // pred_check_branch
    %35 = sbr.rel (0) target = $region13
  $region12: #{graphormer_forward.1} parent=0 // pred_region
    _
  $region13: #{graphormer_forward.1} parent=0 // pred_fallthru
    _
  // Predicated region
  $region14: #{graphormer_forward.1} parent=0 // pred_check
    _
  $region15: #{graphormer_forward.1} parent=0 // pred_check_branch
    %37 = sbr.rel (0) target = $region17
  $region16: #{graphormer_forward.1} parent=0 // pred_region
    _
  $region17: #{graphormer_forward.1} parent=0 // pred_fallthru
    _
  // Predicated region
  $region18: #{graphormer_forward.1} parent=0 // pred_check
    _
  $region19: #{graphormer_forward.1} parent=0 // pred_check_branch
    %39 = sbr.rel (0) target = $region21
  $region20: #{graphormer_forward.1} parent=0 // pred_region
    _
  $region21: #{graphormer_forward.1} parent=0 // pred_fallthru
    _
  // Predicated region
  $region22: #{graphormer_forward.1} parent=0 // pred_check
    _
  $region23: #{graphormer_forward.1} parent=0 // pred_check_branch
    %41 = sbr.rel (0) target = $region25
  $region24: #{graphormer_forward.1} parent=0 // pred_region
    _
  $region25: #{graphormer_forward.1} parent=0 // pred_fallthru
    _
  // Predicated region
  $region26: #{graphormer_forward.1} parent=0 // pred_check
    _
  $region27: #{graphormer_forward.1} parent=0 // pred_check_branch
    %43 = sbr.rel (0) target = $region29
  $region28: #{graphormer_forward.1} parent=0 // pred_region
    _
  $region29: #{graphormer_forward.1} parent=0 // pred_fallthru
    _
  // Predicated region
  $region30: #{graphormer_forward.1} parent=0 // pred_check
    _
  $region31: #{graphormer_forward.1} parent=0 // pred_check_branch
    %45 = sbr.rel (0) target = $region33
  $region32: #{graphormer_forward.1} parent=0 // pred_region
    _
  $region33: #{graphormer_forward.1} parent=0 // pred_fallthru
    _
  // Predicated region
  $region34: #{graphormer_forward.1} parent=0 // pred_check
    _
  $region35: #{graphormer_forward.1} parent=0 // pred_check_branch
    %47 = sbr.rel (0) target = $region37
  $region36: #{graphormer_forward.1} parent=0 // pred_region
    _
  $region37: #{graphormer_forward.1} parent=0 // pred_fallthru
    _
  // Predicated region
  $region38: #{graphormer_forward.1} parent=0 // pred_check
    _
  $region39: #{graphormer_forward.1} parent=0 // pred_check_branch
    %49 = sbr.rel (0) target = $region41
  $region40: #{graphormer_forward.1} parent=0 // pred_region
    _
  $region41: #{graphormer_forward.1} parent=0 // pred_fallthru
    _
  // Predicated region
  $region42: #{graphormer_forward.1} parent=0 // pred_check
    _
  $region43: #{graphormer_forward.1} parent=0 // pred_check_branch
    %51 = sbr.rel (0) target = $region45
  $region44: #{graphormer_forward.1} parent=0 // pred_region
    _
  $region45: #{graphormer_forward.1} parent=0 // pred_fallthru
    _
  // Predicated region
  $region46: #{graphormer_forward.1} parent=0 // pred_check
    _
  $region47: #{graphormer_forward.1} parent=0 // pred_check_branch
    %53 = sbr.rel (0) target = $region49
  $region48: #{graphormer_forward.1} parent=0 // pred_region
    _
  $region49: #{graphormer_forward.1} parent=0 // pred_fallthru
    _
  // Predicated region
  $region50: #{graphormer_forward.1} parent=0 // pred_check
    _
  $region51: #{graphormer_forward.1} parent=0 // pred_check_branch
    %55 = sbr.rel (0) target = $region53
  $region52: #{graphormer_forward.1} parent=0 // pred_region
    _
  $region53: #{graphormer_forward.1} parent=0 // pred_fallthru
    _
  // Predicated region
  $region54: #{graphormer_forward.1} parent=0 // pred_check
    _
  $region55: #{graphormer_forward.1} parent=0 // pred_check_branch
    %57 = sbr.rel (0) target = $region57
  $region56: #{graphormer_forward.1} parent=0 // pred_region
    _
  $region57: #{graphormer_forward.1} parent=0 // pred_fallthru
    _
  // Predicated region
  $region58: #{graphormer_forward.1} parent=0 // pred_check
    _
  $region59: #{graphormer_forward.1} parent=0 // pred_check_branch
    %59 = sbr.rel (0) target = $region61
  $region60: #{graphormer_forward.1} parent=0 // pred_region
    _
  $region61: #{graphormer_forward.1} parent=0 // pred_fallthru
    _
  // Predicated region
  $region62: #{graphormer_forward.1} parent=0 // pred_check
    _
  $region63: #{graphormer_forward.1} parent=0 // pred_check_branch
    %61 = sbr.rel (0) target = $region65
  $region64: #{graphormer_forward.1} parent=0 // pred_region
    _
  $region65: #{graphormer_forward.1} parent=0 // pred_fallthru
    _
  // Predicated region
  $region66: #{graphormer_forward.1} parent=0 // pred_check
    _
  $region67: #{graphormer_forward.1} parent=0 // pred_check_branch
    %63 = sbr.rel (0) target = $region69
  $region68: #{graphormer_forward.1} parent=0 // pred_region
    _
  $region69: #{graphormer_forward.1} parent=0 // pred_fallthru
    _
  // Predicated region
  $region70: #{graphormer_forward.1} parent=0 // pred_check
    _
  $region71: #{graphormer_forward.1} parent=0 // pred_check_branch
    %65 = sbr.rel (0) target = $region73
  $region72: #{graphormer_forward.1} parent=0 // pred_region
    _
  $region73: #{graphormer_forward.1} parent=0 // pred_fallthru
    _
  // Predicated region
  $region74: #{graphormer_forward.1} parent=0 // pred_check
    _
  $region75: #{graphormer_forward.1} parent=0 // pred_check_branch
    %67 = sbr.rel (0) target = $region77
  $region76: #{graphormer_forward.1} parent=0 // pred_region
    _
  $region77: #{graphormer_forward.1} parent=0 // pred_fallthru
    _
  // Predicated region
  $region78: #{graphormer_forward.1} parent=0 // pred_check
    _
  $region79: #{graphormer_forward.1} parent=0 // pred_check_branch
    %69 = sbr.rel (0) target = $region81
  $region80: #{graphormer_forward.1} parent=0 // pred_region
    _
  $region81: #{graphormer_forward.1} parent=0 // pred_fallthru
    _
  // Predicated region
  $region82: #{graphormer_forward.1} parent=0 // pred_check
    _
  $region83: #{graphormer_forward.1} parent=0 // pred_check_branch
    %71 = sbr.rel (0) target = $region85
  $region84: #{graphormer_forward.1} parent=0 // pred_region
    _
  $region85: #{graphormer_forward.1} parent=0 // pred_fallthru
    _
  // Predicated region
  $region86: #{graphormer_forward.1} parent=0 // pred_check
    _
  $region87: #{graphormer_forward.1} parent=0 // pred_check_branch
    %73 = sbr.rel (0) target = $region89
  $region88: #{graphormer_forward.1} parent=0 // pred_region
    _
  $region89: #{graphormer_forward.1} parent=0 // pred_fallthru
    _
  // Predicated region
  $region90: #{graphormer_forward.1} parent=0 // pred_check
    _
  $region91: #{graphormer_forward.1} parent=0 // pred_check_branch
    %75 = sbr.rel (0) target = $region93
  $region92: #{graphormer_forward.1} parent=0 // pred_region
    _
  $region93: #{graphormer_forward.1} parent=0 // pred_fallthru
    _
  %v77 = vld [vmem:[%s0] sm:$0xff]
  %v78 = vld [vmem:[%s0 + $0x8] sm:$0xff]
  %v79 = vld [vmem:[%s1] sm:$0xff]
  %v80 = vld [vmem:[%s1 + $0x8] sm:$0xff]
  %v81 = vld [vmem:[%s5] sm:$0x1]
  %v82 = vld [vmem:[%s6] sm:$0x1]
  %vm83 = vcmask 261120
  %v84 = vsel %vm83, %v77, 0.0
  %85 = vadd.xlane.f32.xlu0 %v84
  %v86 = vpop.xlane.xlu0 %85
  %v87 = vsel %vm83, %v78, 0.0
  %88 = vadd.xlane.f32.xlu0 %v87
  %v89 = vpop.xlane.xlu0 %88
  %v90 = vrcp.pop 32.0
  %v91 = vmul.f32 %v86, %v90
  %v92 = vmul.f32 %v89, %v90
  %v93 = vsub.f32 %v77, %v91
  %v94 = vsub.f32 %v78, %v92
  %v95 = vmul.f32 %v93, %v93
  %v96 = vmul.f32 %v94, %v94
  %v97 = vsel %vm83, %v95, 0.0
  %98 = vadd.xlane.f32.xlu0 %v97
  %v99 = vpop.xlane.xlu0 %98
  %v100 = vsel %vm83, %v96, 0.0
  %101 = vadd.xlane.f32.xlu0 %v100
  %v102 = vpop.xlane.xlu0 %101
  %v103 = vmul.f32 %v99, %v90
  %v104 = vmul.f32 %v102, %v90
  %v105 = vadd.f32 %v103, 1e-05
  %v106 = vadd.f32 %v104, 1e-05
  %v107 = vrsqrt.pop %v105
  %v108 = vrsqrt.pop %v106
  %v109 = vmul.f32 %v93, %v107
  %v110 = vmul.f32 %v94, %v108
  %v112 = vlaneseq
  %v113 = vshrl.u32 %v112, 7
  %v114 = vsub.s32 0, %v113
  %v115 = vrot.slane %v81, %v114
  %v117 = vmul.f32 %v109, %v115
  %v118 = vmul.f32 %v110, %v115
  %v120 = vlaneseq
  %v121 = vshrl.u32 %v120, 7
  %v122 = vsub.s32 0, %v121
  %v123 = vrot.slane %v82, %v122
  %v125 = vadd.f32 %v117, %v123
  %v126 = vadd.f32 %v118, %v123
  %v127 = vld [vmem:[%s7] sm:$0xff]
  %v128 = vld [vmem:[%s7 + $0x8] sm:$0xff]
  %v129 = vld [vmem:[%s7 + $0x10] sm:$0xff]
  %v130 = vld [vmem:[%s7 + $0x18] sm:$0xff]
  %v131 = vpack.c.bf16 %v126, %v125
  %v132 = vpack.c.bf16 %v128, %v127
  %v133 = vpack.c.bf16 %v130, %v129
  %v134 = vld [vmem:[%s8] sm:$0x1]
  %v136 = vlaneseq
  %v137 = vshrl.u32 %v136, 7
  %v138 = vsub.s32 0, %v137
  %v139 = vrot.slane %v134, %v138
  %v142 = vsel %vm83, %v131, 0
  %144 = vmatprep.subr.bf16.mxu0 0
  %145 = vmatpush1.bf16.msra.mxu0 %v132
  %146 = vmatprep.subr.bf16.mxu0 0
  %147 = vmatpush1.bf16.msra.mxu0 %v133
  %148 = vmatprep.subr.bf16.mxu0 0
  %149 = vmatpush1.bf16.msra.mxu0 0
  %150 = vmatprep.subr.bf16.mxu0 0
  %151 = vmatpush1.bf16.msra.mxu0 0
  %152 = vmatprep.subr.bf16.mxu0 0
  %153 = vmatpush1.bf16.msra.mxu0 0
  %154 = vmatprep.subr.bf16.mxu0 0
  %155 = vmatpush1.bf16.msra.mxu0 0
  %156 = vmatprep.subr.bf16.mxu0 0
  %157 = vmatpush1.bf16.msra.mxu0 0
  %158 = vmatprep.subr.bf16.mxu0 0
  %159 = vmatpush1.bf16.msra.mxu0 0
  %160 = vmatprep.subr.bf16.mxu0 0
  %161 = vmatpush1.bf16.msra.mxu0 0
  %162 = vmatprep.subr.bf16.mxu0 0
  %163 = vmatpush1.bf16.msra.mxu0 0
  %164 = vmatprep.subr.bf16.mxu0 0
  %165 = vmatpush1.bf16.msra.mxu0 0
  %166 = vmatprep.subr.bf16.mxu0 0
  %167 = vmatpush1.bf16.msra.mxu0 0
  %168 = vmatprep.subr.bf16.mxu0 0
  %169 = vmatpush1.bf16.msra.mxu0 0
  %170 = vmatprep.subr.bf16.mxu0 0
  %171 = vmatpush1.bf16.msra.mxu0 0
  %172 = vmatprep.subr.bf16.mxu0 0
  %173 = vmatpush1.bf16.msra.mxu0 0
  %174 = vmatprep.subr.bf16.mxu0 0
  %175 = vmatpush1.bf16.msra.mxu0 0
  %176 = vmatprep.mubr.bf16.mxu0 0
  %177 = vmatmul.mubr.bf16.gmra.mrb[0].mxu0 %v142
  %v178 = vpop.f32.mrb[0].mxu0
  %v179 = vadd.f32 %v139, %v178
  %v180 = vpop.f32.mrb[0].mxu0
  %v181 = vpop.f32.mrb[0].mxu0
  %v182 = vadd.f32 %v139, %v181
  %v183 = vpop.f32.mrb[0].mxu0
  %184 = vdwg.mxu0
  %v185 = vld [vmem:[%s9] sm:$0xff]
  %v186 = vld [vmem:[%s9 + $0x8] sm:$0xff]
  %v187 = vld [vmem:[%s9 + $0x10] sm:$0xff]
  %v188 = vld [vmem:[%s9 + $0x18] sm:$0xff]
  %191 = vrot.lane.b32.xlu0 %v179, 96
  %v192 = vpop.permute.xlu0 %191
  %193 = vrot.lane.b32.xlu0 %v182, 96
  %v194 = vpop.permute.xlu0 %193
  %vm195 = vcmask 64512
  %v196 = vsel %vm195, %v179, 0
  %v198 = vsel %vm195, %v182, 0
  %v200 = vsel %vm195, %v192, 0
  %v202 = vsel %vm195, %v194, 0
  %204 = vmatprep.subr.mxu0 0.0
  %205 = vmatpush1.xpose.msra.mxu0 %v200
  %206 = vmatprep.subr.mxu0 0.0
  %207 = vmatpush1.xpose.msra.mxu0 %v202
  %208 = vmatprep.subr.mxu0 0.0
  %209 = vmatpush1.xpose.msra.mxu0 0.0
  %210 = vmatprep.subr.mxu0 0.0
  %211 = vmatpush1.xpose.msra.mxu0 0.0
  %212 = vmatprep.subr.mxu0 0.0
  %213 = vmatpush1.xpose.msra.mxu0 0.0
  %214 = vmatprep.subr.mxu0 0.0
  %215 = vmatpush1.xpose.msra.mxu0 0.0
  %216 = vmatprep.subr.mxu0 0.0
  %217 = vmatpush1.xpose.msra.mxu0 0.0
  %218 = vmatprep.subr.mxu0 0.0
  %219 = vmatpush1.xpose.msra.mxu0 0.0
  %220 = vmatprep.subr.mxu0 0.0
  %221 = vmatpush1.xpose.msra.mxu0 0.0
  %222 = vmatprep.subr.mxu0 0.0
  %223 = vmatpush1.xpose.msra.mxu0 0.0
  %224 = vmatprep.subr.mxu0 0.0
  %225 = vmatpush1.xpose.msra.mxu0 0.0
  %226 = vmatprep.subr.mxu0 0.0
  %227 = vmatpush1.xpose.msra.mxu0 0.0
  %228 = vmatprep.subr.mxu0 0.0
  %229 = vmatpush1.xpose.msra.mxu0 0.0
  %230 = vmatprep.subr.mxu0 0.0
  %231 = vmatpush1.xpose.msra.mxu0 0.0
  %232 = vmatprep.subr.mxu0 0.0
  %233 = vmatpush1.xpose.msra.mxu0 0.0
  %234 = vmatprep.subr.mxu0 0.0
  %235 = vmatpush1.xpose.msra.mxu0 0.0
  %236 = vmatprep.subr.mxu0 0.0
  %237 = vmatpush1.xpose.msra.mxu0 0.0
  %238 = vmatprep.subr.mxu0 0.0
  %239 = vmatpush1.xpose.msra.mxu0 0.0
  %240 = vmatprep.subr.mxu0 0.0
  %241 = vmatpush1.xpose.msra.mxu0 0.0
  %242 = vmatprep.subr.mxu0 0.0
  %243 = vmatpush1.xpose.msra.mxu0 0.0
  %244 = vmatprep.subr.mxu0 0.0
  %245 = vmatpush1.xpose.msra.mxu0 0.0
  %246 = vmatprep.subr.mxu0 0.0
  %247 = vmatpush1.xpose.msra.mxu0 0.0
  %248 = vmatprep.subr.mxu0 0.0
  %249 = vmatpush1.xpose.msra.mxu0 0.0
  %250 = vmatprep.subr.mxu0 0.0
  %251 = vmatpush1.xpose.msra.mxu0 0.0
  %252 = vmatprep.subr.mxu0 0.0
  %253 = vmatpush1.xpose.msra.mxu0 0.0
  %254 = vmatprep.subr.mxu0 0.0
  %255 = vmatpush1.xpose.msra.mxu0 0.0
  %256 = vmatprep.subr.mxu0 0.0
  %257 = vmatpush1.xpose.msra.mxu0 0.0
  %258 = vmatprep.subr.mxu0 0.0
  %259 = vmatpush1.xpose.msra.mxu0 0.0
  %260 = vmatprep.subr.mxu0 0.0
  %261 = vmatpush1.xpose.msra.mxu0 0.0
  %262 = vmatprep.subr.mxu0 0.0
  %263 = vmatpush1.xpose.msra.mxu0 0.0
  %264 = vmatprep.subr.mxu0 0.0
  %265 = vmatpush1.xpose.msra.mxu0 0.0
  %266 = vmatprep.subr.mxu0 0.0
  %267 = vmatpush1.xpose.msra.mxu0 0.0
  %268 = vmatprep.mubr.f32.mxu0 0.0
  %269 = vmatmul.mubr.f32.gmra.mrb[0].mxu0 %v196
  %v270 = vpop.f32.mrb[0].mxu0
  %v271 = vadd.f32 0.0, %v270
  %v272 = vpop.f32.mrb[0].mxu0
  %273 = vmatprep.mubr.f32.mxu0 0.0
  %274 = vmatmul.mubr.f32.gmra.mrb[0].mxu0 %v198
  %v275 = vpop.f32.mrb[0].mxu0
  %v276 = vadd.f32 0.0, %v275
  %v277 = vpop.f32.mrb[0].mxu0
  %278 = vdwg.mxu0
  %v279 = vmul.f32 %v271, 0.35355338
  %v280 = vmul.f32 %v276, 0.35355338
  %vm281 = vcmask 130048
  %v282 = vsel %vm281, %v279, -inf
  %283 = vmax.xlane.f32.xlu0 %v282
  %v284 = vpop.xlane.xlu0 %283
  %v285 = vsel %vm281, %v280, -inf
  %286 = vmax.xlane.f32.xlu0 %v285
  %v287 = vpop.xlane.xlu0 %286
  %v288 = vsub.f32 %v279, %v284
  %v289 = vsub.f32 %v280, %v287
  %v290 = vmul.f32 %v288, 1.442695
  %v291 = vpow.pop %v290
  %v292 = vmul.f32 %v289, 1.442695
  %v293 = vpow.pop %v292
  %v294 = vsel %vm281, %v291, 0.0
  %295 = vadd.xlane.f32.xlu0 %v294
  %v296 = vpop.xlane.xlu0 %295
  %v297 = vsel %vm281, %v293, 0.0
  %298 = vadd.xlane.f32.xlu0 %v297
  %v299 = vpop.xlane.xlu0 %298
  %v300 = vrcp.pop %v296
  %v301 = vrcp.pop %v299
  %v302 = vmul.f32 %v291, %v300
  %v303 = vmul.f32 %v293, %v301
  %304 = vrot.lane.b32.xlu0 %v179, 64
  %v305 = vpop.permute.xlu0 %304
  %306 = vrot.lane.b32.xlu0 %v182, 64
  %v307 = vpop.permute.xlu0 %306
  %v311 = vsel %vm281, %v302, 0
  %v314 = vsel %vm281, %v303, 0
  %316 = vmatprep.subr.mxu0 0.0
  %317 = vmatpush1.msra.mxu0 %v305
  %318 = vmatprep.subr.mxu0 0.0
  %319 = vmatpush1.msra.mxu0 %v307
  %320 = vmatprep.subr.mxu0 0.0
  %321 = vmatpush1.msra.mxu0 0.0
  %322 = vmatprep.subr.mxu0 0.0
  %323 = vmatpush1.msra.mxu0 0.0
  %324 = vmatprep.subr.mxu0 0.0
  %325 = vmatpush1.msra.mxu0 0.0
  %326 = vmatprep.subr.mxu0 0.0
  %327 = vmatpush1.msra.mxu0 0.0
  %328 = vmatprep.subr.mxu0 0.0
  %329 = vmatpush1.msra.mxu0 0.0
  %330 = vmatprep.subr.mxu0 0.0
  %331 = vmatpush1.msra.mxu0 0.0
  %332 = vmatprep.subr.mxu0 0.0
  %333 = vmatpush1.msra.mxu0 0.0
  %334 = vmatprep.subr.mxu0 0.0
  %335 = vmatpush1.msra.mxu0 0.0
  %336 = vmatprep.subr.mxu0 0.0
  %337 = vmatpush1.msra.mxu0 0.0
  %338 = vmatprep.subr.mxu0 0.0
  %339 = vmatpush1.msra.mxu0 0.0
  %340 = vmatprep.subr.mxu0 0.0
  %341 = vmatpush1.msra.mxu0 0.0
  %342 = vmatprep.subr.mxu0 0.0
  %343 = vmatpush1.msra.mxu0 0.0
  %344 = vmatprep.subr.mxu0 0.0
  %345 = vmatpush1.msra.mxu0 0.0
  %346 = vmatprep.subr.mxu0 0.0
  %347 = vmatpush1.msra.mxu0 0.0
  %348 = vmatprep.subr.mxu0 0.0
  %349 = vmatpush1.msra.mxu0 0.0
  %350 = vmatprep.subr.mxu0 0.0
  %351 = vmatpush1.msra.mxu0 0.0
  %352 = vmatprep.subr.mxu0 0.0
  %353 = vmatpush1.msra.mxu0 0.0
  %354 = vmatprep.subr.mxu0 0.0
  %355 = vmatpush1.msra.mxu0 0.0
  %356 = vmatprep.subr.mxu0 0.0
  %357 = vmatpush1.msra.mxu0 0.0
  %358 = vmatprep.subr.mxu0 0.0
  %359 = vmatpush1.msra.mxu0 0.0
  %360 = vmatprep.subr.mxu0 0.0
  %361 = vmatpush1.msra.mxu0 0.0
  %362 = vmatprep.subr.mxu0 0.0
  %363 = vmatpush1.msra.mxu0 0.0
  %364 = vmatprep.subr.mxu0 0.0
  %365 = vmatpush1.msra.mxu0 0.0
  %366 = vmatprep.subr.mxu0 0.0
  %367 = vmatpush1.msra.mxu0 0.0
  %368 = vmatprep.subr.mxu0 0.0
  %369 = vmatpush1.msra.mxu0 0.0
  %370 = vmatprep.subr.mxu0 0.0
  %371 = vmatpush1.msra.mxu0 0.0
  %372 = vmatprep.subr.mxu0 0.0
  %373 = vmatpush1.msra.mxu0 0.0
  %374 = vmatprep.subr.mxu0 0.0
  %375 = vmatpush1.msra.mxu0 0.0
  %376 = vmatprep.subr.mxu0 0.0
  %377 = vmatpush1.msra.mxu0 0.0
  %378 = vmatprep.subr.mxu0 0.0
  %379 = vmatpush1.msra.mxu0 0.0
  %380 = vmatprep.mubr.f32.mxu0 0.0
  %381 = vmatmul.mubr.f32.gmra.mrb[0].mxu0 %v311
  %v382 = vpop.f32.mrb[0].mxu0
  %v383 = vadd.f32 0.0, %v382
  %v384 = vpop.f32.mrb[0].mxu0
  %385 = vmatprep.mubr.f32.mxu0 0.0
  %386 = vmatmul.mubr.f32.gmra.mrb[0].mxu0 %v314
  %v387 = vpop.f32.mrb[0].mxu0
  %v388 = vadd.f32 0.0, %v387
  %v389 = vpop.f32.mrb[0].mxu0
  %390 = vdwg.mxu0
  %v391 = vpack.c.bf16 %v388, %v383
  %v392 = vpack.c.bf16 %v185, %v185
  %393 = vrot.lane.b32.xlu0 %v179, 120
  %v394 = vpop.permute.xlu0 %393
  %395 = vrot.lane.b32.xlu0 %v182, 120
  %v396 = vpop.permute.xlu0 %395
  %397 = vrot.lane.b32.xlu0 %v179, 88
  %v398 = vpop.permute.xlu0 %397
  %399 = vrot.lane.b32.xlu0 %v182, 88
  %v400 = vpop.permute.xlu0 %399
  %v401 = vsel %vm195, %v394, 0
  %v403 = vsel %vm195, %v396, 0
  %v405 = vsel %vm195, %v398, 0
  %v407 = vsel %vm195, %v400, 0
  %409 = vmatprep.subr.mxu0 0.0
  %410 = vmatpush1.xpose.msra.mxu0 %v405
  %411 = vmatprep.subr.mxu0 0.0
  %412 = vmatpush1.xpose.msra.mxu0 %v407
  %413 = vmatprep.subr.mxu0 0.0
  %414 = vmatpush1.xpose.msra.mxu0 0.0
  %415 = vmatprep.subr.mxu0 0.0
  %416 = vmatpush1.xpose.msra.mxu0 0.0
  %417 = vmatprep.subr.mxu0 0.0
  %418 = vmatpush1.xpose.msra.mxu0 0.0
  %419 = vmatprep.subr.mxu0 0.0
  %420 = vmatpush1.xpose.msra.mxu0 0.0
  %421 = vmatprep.subr.mxu0 0.0
  %422 = vmatpush1.xpose.msra.mxu0 0.0
  %423 = vmatprep.subr.mxu0 0.0
  %424 = vmatpush1.xpose.msra.mxu0 0.0
  %425 = vmatprep.subr.mxu0 0.0
  %426 = vmatpush1.xpose.msra.mxu0 0.0
  %427 = vmatprep.subr.mxu0 0.0
  %428 = vmatpush1.xpose.msra.mxu0 0.0
  %429 = vmatprep.subr.mxu0 0.0
  %430 = vmatpush1.xpose.msra.mxu0 0.0
  %431 = vmatprep.subr.mxu0 0.0
  %432 = vmatpush1.xpose.msra.mxu0 0.0
  %433 = vmatprep.subr.mxu0 0.0
  %434 = vmatpush1.xpose.msra.mxu0 0.0
  %435 = vmatprep.subr.mxu0 0.0
  %436 = vmatpush1.xpose.msra.mxu0 0.0
  %437 = vmatprep.subr.mxu0 0.0
  %438 = vmatpush1.xpose.msra.mxu0 0.0
  %439 = vmatprep.subr.mxu0 0.0
  %440 = vmatpush1.xpose.msra.mxu0 0.0
  %441 = vmatprep.subr.mxu0 0.0
  %442 = vmatpush1.xpose.msra.mxu0 0.0
  %443 = vmatprep.subr.mxu0 0.0
  %444 = vmatpush1.xpose.msra.mxu0 0.0
  %445 = vmatprep.subr.mxu0 0.0
  %446 = vmatpush1.xpose.msra.mxu0 0.0
  %447 = vmatprep.subr.mxu0 0.0
  %448 = vmatpush1.xpose.msra.mxu0 0.0
  %449 = vmatprep.subr.mxu0 0.0
  %450 = vmatpush1.xpose.msra.mxu0 0.0
  %451 = vmatprep.subr.mxu0 0.0
  %452 = vmatpush1.xpose.msra.mxu0 0.0
  %453 = vmatprep.subr.mxu0 0.0
  %454 = vmatpush1.xpose.msra.mxu0 0.0
  %455 = vmatprep.subr.mxu0 0.0
  %456 = vmatpush1.xpose.msra.mxu0 0.0
  %457 = vmatprep.subr.mxu0 0.0
  %458 = vmatpush1.xpose.msra.mxu0 0.0
  %459 = vmatprep.subr.mxu0 0.0
  %460 = vmatpush1.xpose.msra.mxu0 0.0
  %461 = vmatprep.subr.mxu0 0.0
  %462 = vmatpush1.xpose.msra.mxu0 0.0
  %463 = vmatprep.subr.mxu0 0.0
  %464 = vmatpush1.xpose.msra.mxu0 0.0
  %465 = vmatprep.subr.mxu0 0.0
  %466 = vmatpush1.xpose.msra.mxu0 0.0
  %467 = vmatprep.subr.mxu0 0.0
  %468 = vmatpush1.xpose.msra.mxu0 0.0
  %469 = vmatprep.subr.mxu0 0.0
  %470 = vmatpush1.xpose.msra.mxu0 0.0
  %471 = vmatprep.subr.mxu0 0.0
  %472 = vmatpush1.xpose.msra.mxu0 0.0
  %473 = vmatprep.mubr.f32.mxu0 0.0
  %474 = vmatmul.mubr.f32.gmra.mrb[0].mxu0 %v401
  %v475 = vpop.f32.mrb[0].mxu0
  %v476 = vadd.f32 0.0, %v475
  %v477 = vpop.f32.mrb[0].mxu0
  %478 = vmatprep.mubr.f32.mxu0 0.0
  %479 = vmatmul.mubr.f32.gmra.mrb[0].mxu0 %v403
  %v480 = vpop.f32.mrb[0].mxu0
  %v481 = vadd.f32 0.0, %v480
  %v482 = vpop.f32.mrb[0].mxu0
  %483 = vdwg.mxu0
  %v484 = vmul.f32 %v476, 0.35355338
  %v485 = vmul.f32 %v481, 0.35355338
  %v486 = vsel %vm281, %v484, -inf
  %487 = vmax.xlane.f32.xlu0 %v486
  %v488 = vpop.xlane.xlu0 %487
  %v489 = vsel %vm281, %v485, -inf
  %490 = vmax.xlane.f32.xlu0 %v489
  %v491 = vpop.xlane.xlu0 %490
  %v492 = vsub.f32 %v484, %v488
  %v493 = vsub.f32 %v485, %v491
  %v494 = vmul.f32 %v492, 1.442695
  %v495 = vpow.pop %v494
  %v496 = vmul.f32 %v493, 1.442695
  %v497 = vpow.pop %v496
  %v498 = vsel %vm281, %v495, 0.0
  %499 = vadd.xlane.f32.xlu0 %v498
  %v500 = vpop.xlane.xlu0 %499
  %v501 = vsel %vm281, %v497, 0.0
  %502 = vadd.xlane.f32.xlu0 %v501
  %v503 = vpop.xlane.xlu0 %502
  %v504 = vrcp.pop %v500
  %v505 = vrcp.pop %v503
  %v506 = vmul.f32 %v495, %v504
  %v507 = vmul.f32 %v497, %v505
  %508 = vrot.lane.b32.xlu0 %v179, 56
  %v509 = vpop.permute.xlu0 %508
  %510 = vrot.lane.b32.xlu0 %v182, 56
  %v511 = vpop.permute.xlu0 %510
  %v515 = vsel %vm281, %v506, 0
  %v518 = vsel %vm281, %v507, 0
  %520 = vmatprep.subr.mxu0 0.0
  %521 = vmatpush1.msra.mxu0 %v509
  %522 = vmatprep.subr.mxu0 0.0
  %523 = vmatpush1.msra.mxu0 %v511
  %524 = vmatprep.subr.mxu0 0.0
  %525 = vmatpush1.msra.mxu0 0.0
  %526 = vmatprep.subr.mxu0 0.0
  %527 = vmatpush1.msra.mxu0 0.0
  %528 = vmatprep.subr.mxu0 0.0
  %529 = vmatpush1.msra.mxu0 0.0
  %530 = vmatprep.subr.mxu0 0.0
  %531 = vmatpush1.msra.mxu0 0.0
  %532 = vmatprep.subr.mxu0 0.0
  %533 = vmatpush1.msra.mxu0 0.0
  %534 = vmatprep.subr.mxu0 0.0
  %535 = vmatpush1.msra.mxu0 0.0
  %536 = vmatprep.subr.mxu0 0.0
  %537 = vmatpush1.msra.mxu0 0.0
  %538 = vmatprep.subr.mxu0 0.0
  %539 = vmatpush1.msra.mxu0 0.0
  %540 = vmatprep.subr.mxu0 0.0
  %541 = vmatpush1.msra.mxu0 0.0
  %542 = vmatprep.subr.mxu0 0.0
  %543 = vmatpush1.msra.mxu0 0.0
  %544 = vmatprep.subr.mxu0 0.0
  %545 = vmatpush1.msra.mxu0 0.0
  %546 = vmatprep.subr.mxu0 0.0
  %547 = vmatpush1.msra.mxu0 0.0
  %548 = vmatprep.subr.mxu0 0.0
  %549 = vmatpush1.msra.mxu0 0.0
  %550 = vmatprep.subr.mxu0 0.0
  %551 = vmatpush1.msra.mxu0 0.0
  %552 = vmatprep.subr.mxu0 0.0
  %553 = vmatpush1.msra.mxu0 0.0
  %554 = vmatprep.subr.mxu0 0.0
  %555 = vmatpush1.msra.mxu0 0.0
  %556 = vmatprep.subr.mxu0 0.0
  %557 = vmatpush1.msra.mxu0 0.0
  %558 = vmatprep.subr.mxu0 0.0
  %559 = vmatpush1.msra.mxu0 0.0
  %560 = vmatprep.subr.mxu0 0.0
  %561 = vmatpush1.msra.mxu0 0.0
  %562 = vmatprep.subr.mxu0 0.0
  %563 = vmatpush1.msra.mxu0 0.0
  %564 = vmatprep.subr.mxu0 0.0
  %565 = vmatpush1.msra.mxu0 0.0
  %566 = vmatprep.subr.mxu0 0.0
  %567 = vmatpush1.msra.mxu0 0.0
  %568 = vmatprep.subr.mxu0 0.0
  %569 = vmatpush1.msra.mxu0 0.0
  %570 = vmatprep.subr.mxu0 0.0
  %571 = vmatpush1.msra.mxu0 0.0
  %572 = vmatprep.subr.mxu0 0.0
  %573 = vmatpush1.msra.mxu0 0.0
  %574 = vmatprep.subr.mxu0 0.0
  %575 = vmatpush1.msra.mxu0 0.0
  %576 = vmatprep.subr.mxu0 0.0
  %577 = vmatpush1.msra.mxu0 0.0
  %578 = vmatprep.subr.mxu0 0.0
  %579 = vmatpush1.msra.mxu0 0.0
  %580 = vmatprep.subr.mxu0 0.0
  %581 = vmatpush1.msra.mxu0 0.0
  %582 = vmatprep.subr.mxu0 0.0
  %583 = vmatpush1.msra.mxu0 0.0
  %584 = vmatprep.mubr.f32.mxu0 0.0
  %585 = vmatmul.mubr.f32.gmra.mrb[0].mxu0 %v515
  %v586 = vpop.f32.mrb[0].mxu0
  %v587 = vadd.f32 0.0, %v586
  %v588 = vpop.f32.mrb[0].mxu0
  %589 = vmatprep.mubr.f32.mxu0 0.0
  %590 = vmatmul.mubr.f32.gmra.mrb[0].mxu0 %v518
  %v591 = vpop.f32.mrb[0].mxu0
  %v592 = vadd.f32 0.0, %v591
  %v593 = vpop.f32.mrb[0].mxu0
  %594 = vdwg.mxu0
  %v595 = vpack.c.bf16 %v592, %v587
  %v596 = vpack.c.bf16 %v186, %v186
  %v598 = vsel %vm195, %v595, 0
  %vm600 = vcmask 1043456
  %v602 = vsel %vm600, %v596, 0
  %604 = vmatprep.subr.bf16.mxu0 0
  %605 = vmatpush1.bf16.msra.mxu0 %v602
  %606 = vmatprep.subr.bf16.mxu0 0
  %607 = vmatpush1.bf16.msra.mxu0 0
  %608 = vmatprep.subr.bf16.mxu0 0
  %609 = vmatpush1.bf16.msra.mxu0 0
  %610 = vmatprep.subr.bf16.mxu0 0
  %611 = vmatpush1.bf16.msra.mxu0 0
  %612 = vmatprep.subr.bf16.mxu0 0
  %613 = vmatpush1.bf16.msra.mxu0 0
  %614 = vmatprep.subr.bf16.mxu0 0
  %615 = vmatpush1.bf16.msra.mxu0 0
  %616 = vmatprep.subr.bf16.mxu0 0
  %617 = vmatpush1.bf16.msra.mxu0 0
  %618 = vmatprep.subr.bf16.mxu0 0
  %619 = vmatpush1.bf16.msra.mxu0 0
  %620 = vmatprep.subr.bf16.mxu0 0
  %621 = vmatpush1.bf16.msra.mxu0 0
  %622 = vmatprep.subr.bf16.mxu0 0
  %623 = vmatpush1.bf16.msra.mxu0 0
  %624 = vmatprep.subr.bf16.mxu0 0
  %625 = vmatpush1.bf16.msra.mxu0 0
  %626 = vmatprep.subr.bf16.mxu0 0
  %627 = vmatpush1.bf16.msra.mxu0 0
  %628 = vmatprep.subr.bf16.mxu0 0
  %629 = vmatpush1.bf16.msra.mxu0 0
  %630 = vmatprep.subr.bf16.mxu0 0
  %631 = vmatpush1.bf16.msra.mxu0 0
  %632 = vmatprep.subr.bf16.mxu0 0
  %633 = vmatpush1.bf16.msra.mxu0 0
  %634 = vmatprep.subr.bf16.mxu0 0
  %635 = vmatpush1.bf16.msra.mxu0 0
  %636 = vmatprep.mubr.bf16.mxu0 0
  %637 = vmatmul.mubr.bf16.gmra.mrb[0].mxu0 %v598
  %v638 = vpop.f32.mrb[0].mxu0
  %v639 = vadd.f32 0.0, %v638
  %v640 = vpop.f32.mrb[0].mxu0
  %v641 = vpop.f32.mrb[0].mxu0
  %v642 = vadd.f32 0.0, %v641
  %v643 = vpop.f32.mrb[0].mxu0
  %644 = vdwg.mxu0
  %v646 = vsel %vm195, %v391, 0
  %v649 = vsel %vm600, %v392, 0
  %651 = vmatprep.subr.bf16.mxu0 0
  %652 = vmatpush1.bf16.msra.mxu0 %v649
  %653 = vmatprep.subr.bf16.mxu0 0
  %654 = vmatpush1.bf16.msra.mxu0 0
  %655 = vmatprep.subr.bf16.mxu0 0
  %656 = vmatpush1.bf16.msra.mxu0 0
  %657 = vmatprep.subr.bf16.mxu0 0
  %658 = vmatpush1.bf16.msra.mxu0 0
  %659 = vmatprep.subr.bf16.mxu0 0
  %660 = vmatpush1.bf16.msra.mxu0 0
  %661 = vmatprep.subr.bf16.mxu0 0
  %662 = vmatpush1.bf16.msra.mxu0 0
  %663 = vmatprep.subr.bf16.mxu0 0
  %664 = vmatpush1.bf16.msra.mxu0 0
  %665 = vmatprep.subr.bf16.mxu0 0
  %666 = vmatpush1.bf16.msra.mxu0 0
  %667 = vmatprep.subr.bf16.mxu0 0
  %668 = vmatpush1.bf16.msra.mxu0 0
  %669 = vmatprep.subr.bf16.mxu0 0
  %670 = vmatpush1.bf16.msra.mxu0 0
  %671 = vmatprep.subr.bf16.mxu0 0
  %672 = vmatpush1.bf16.msra.mxu0 0
  %673 = vmatprep.subr.bf16.mxu0 0
  %674 = vmatpush1.bf16.msra.mxu0 0
  %675 = vmatprep.subr.bf16.mxu0 0
  %676 = vmatpush1.bf16.msra.mxu0 0
  %677 = vmatprep.subr.bf16.mxu0 0
  %678 = vmatpush1.bf16.msra.mxu0 0
  %679 = vmatprep.subr.bf16.mxu0 0
  %680 = vmatpush1.bf16.msra.mxu0 0
  %681 = vmatprep.subr.bf16.mxu0 0
  %682 = vmatpush1.bf16.msra.mxu0 0
  %683 = vmatprep.mubr.bf16.mxu0 0
  %684 = vmatmul.mubr.bf16.gmra.mrb[0].mxu0 %v646
  %v685 = vpop.f32.mrb[0].mxu0
  %v686 = vadd.f32 %v639, %v685
  %v687 = vpop.f32.mrb[0].mxu0
  %v688 = vpop.f32.mrb[0].mxu0
  %v689 = vadd.f32 %v642, %v688
  %v690 = vpop.f32.mrb[0].mxu0
  %691 = vdwg.mxu0
  %692 = vrot.lane.b32.xlu0 %v179, 112
  %v693 = vpop.permute.xlu0 %692
  %694 = vrot.lane.b32.xlu0 %v182, 112
  %v695 = vpop.permute.xlu0 %694
  %696 = vrot.lane.b32.xlu0 %v179, 80
  %v697 = vpop.permute.xlu0 %696
  %698 = vrot.lane.b32.xlu0 %v182, 80
  %v699 = vpop.permute.xlu0 %698
  %v700 = vsel %vm195, %v693, 0
  %v702 = vsel %vm195, %v695, 0
  %v704 = vsel %vm195, %v697, 0
  %v706 = vsel %vm195, %v699, 0
  %708 = vmatprep.subr.mxu0 0.0
  %709 = vmatpush1.xpose.msra.mxu0 %v704
  %710 = vmatprep.subr.mxu0 0.0
  %711 = vmatpush1.xpose.msra.mxu0 %v706
  %712 = vmatprep.subr.mxu0 0.0
  %713 = vmatpush1.xpose.msra.mxu0 0.0
  %714 = vmatprep.subr.mxu0 0.0
  %715 = vmatpush1.xpose.msra.mxu0 0.0
  %716 = vmatprep.subr.mxu0 0.0
  %717 = vmatpush1.xpose.msra.mxu0 0.0
  %718 = vmatprep.subr.mxu0 0.0
  %719 = vmatpush1.xpose.msra.mxu0 0.0
  %720 = vmatprep.subr.mxu0 0.0
  %721 = vmatpush1.xpose.msra.mxu0 0.0
  %722 = vmatprep.subr.mxu0 0.0
  %723 = vmatpush1.xpose.msra.mxu0 0.0
  %724 = vmatprep.subr.mxu0 0.0
  %725 = vmatpush1.xpose.msra.mxu0 0.0
  %726 = vmatprep.subr.mxu0 0.0
  %727 = vmatpush1.xpose.msra.mxu0 0.0
  %728 = vmatprep.subr.mxu0 0.0
  %729 = vmatpush1.xpose.msra.mxu0 0.0
  %730 = vmatprep.subr.mxu0 0.0
  %731 = vmatpush1.xpose.msra.mxu0 0.0
  %732 = vmatprep.subr.mxu0 0.0
  %733 = vmatpush1.xpose.msra.mxu0 0.0
  %734 = vmatprep.subr.mxu0 0.0
  %735 = vmatpush1.xpose.msra.mxu0 0.0
  %736 = vmatprep.subr.mxu0 0.0
  %737 = vmatpush1.xpose.msra.mxu0 0.0
  %738 = vmatprep.subr.mxu0 0.0
  %739 = vmatpush1.xpose.msra.mxu0 0.0
  %740 = vmatprep.subr.mxu0 0.0
  %741 = vmatpush1.xpose.msra.mxu0 0.0
  %742 = vmatprep.subr.mxu0 0.0
  %743 = vmatpush1.xpose.msra.mxu0 0.0
  %744 = vmatprep.subr.mxu0 0.0
  %745 = vmatpush1.xpose.msra.mxu0 0.0
  %746 = vmatprep.subr.mxu0 0.0
  %747 = vmatpush1.xpose.msra.mxu0 0.0
  %748 = vmatprep.subr.mxu0 0.0
  %749 = vmatpush1.xpose.msra.mxu0 0.0
  %750 = vmatprep.subr.mxu0 0.0
  %751 = vmatpush1.xpose.msra.mxu0 0.0
  %752 = vmatprep.subr.mxu0 0.0
  %753 = vmatpush1.xpose.msra.mxu0 0.0
  %754 = vmatprep.subr.mxu0 0.0
  %755 = vmatpush1.xpose.msra.mxu0 0.0
  %756 = vmatprep.subr.mxu0 0.0
  %757 = vmatpush1.xpose.msra.mxu0 0.0
  %758 = vmatprep.subr.mxu0 0.0
  %759 = vmatpush1.xpose.msra.mxu0 0.0
  %760 = vmatprep.subr.mxu0 0.0
  %761 = vmatpush1.xpose.msra.mxu0 0.0
  %762 = vmatprep.subr.mxu0 0.0
  %763 = vmatpush1.xpose.msra.mxu0 0.0
  %764 = vmatprep.subr.mxu0 0.0
  %765 = vmatpush1.xpose.msra.mxu0 0.0
  %766 = vmatprep.subr.mxu0 0.0
  %767 = vmatpush1.xpose.msra.mxu0 0.0
  %768 = vmatprep.subr.mxu0 0.0
  %769 = vmatpush1.xpose.msra.mxu0 0.0
  %770 = vmatprep.subr.mxu0 0.0
  %771 = vmatpush1.xpose.msra.mxu0 0.0
  %772 = vmatprep.mubr.f32.mxu0 0.0
  %773 = vmatmul.mubr.f32.gmra.mrb[0].mxu0 %v700
  %v774 = vpop.f32.mrb[0].mxu0
  %v775 = vadd.f32 0.0, %v774
  %v776 = vpop.f32.mrb[0].mxu0
  %777 = vmatprep.mubr.f32.mxu0 0.0
  %778 = vmatmul.mubr.f32.gmra.mrb[0].mxu0 %v702
  %v779 = vpop.f32.mrb[0].mxu0
  %v780 = vadd.f32 0.0, %v779
  %v781 = vpop.f32.mrb[0].mxu0
  %782 = vdwg.mxu0
  %v783 = vmul.f32 %v775, 0.35355338
  %v784 = vmul.f32 %v780, 0.35355338
  %v785 = vsel %vm281, %v783, -inf
  %786 = vmax.xlane.f32.xlu0 %v785
  %v787 = vpop.xlane.xlu0 %786
  %v788 = vsel %vm281, %v784, -inf
  %789 = vmax.xlane.f32.xlu0 %v788
  %v790 = vpop.xlane.xlu0 %789
  %v791 = vsub.f32 %v783, %v787
  %v792 = vsub.f32 %v784, %v790
  %v793 = vmul.f32 %v791, 1.442695
  %v794 = vpow.pop %v793
  %v795 = vmul.f32 %v792, 1.442695
  %v796 = vpow.pop %v795
  %v797 = vsel %vm281, %v794, 0.0
  %798 = vadd.xlane.f32.xlu0 %v797
  %v799 = vpop.xlane.xlu0 %798
  %v800 = vsel %vm281, %v796, 0.0
  %801 = vadd.xlane.f32.xlu0 %v800
  %v802 = vpop.xlane.xlu0 %801
  %v803 = vrcp.pop %v799
  %v804 = vrcp.pop %v802
  %v805 = vmul.f32 %v794, %v803
  %v806 = vmul.f32 %v796, %v804
  %807 = vrot.lane.b32.xlu0 %v179, 48
  %v808 = vpop.permute.xlu0 %807
  %809 = vrot.lane.b32.xlu0 %v182, 48
  %v810 = vpop.permute.xlu0 %809
  %v814 = vsel %vm281, %v805, 0
  %v817 = vsel %vm281, %v806, 0
  %819 = vmatprep.subr.mxu0 0.0
  %820 = vmatpush1.msra.mxu0 %v808
  %821 = vmatprep.subr.mxu0 0.0
  %822 = vmatpush1.msra.mxu0 %v810
  %823 = vmatprep.subr.mxu0 0.0
  %824 = vmatpush1.msra.mxu0 0.0
  %825 = vmatprep.subr.mxu0 0.0
  %826 = vmatpush1.msra.mxu0 0.0
  %827 = vmatprep.subr.mxu0 0.0
  %828 = vmatpush1.msra.mxu0 0.0
  %829 = vmatprep.subr.mxu0 0.0
  %830 = vmatpush1.msra.mxu0 0.0
  %831 = vmatprep.subr.mxu0 0.0
  %832 = vmatpush1.msra.mxu0 0.0
  %833 = vmatprep.subr.mxu0 0.0
  %834 = vmatpush1.msra.mxu0 0.0
  %835 = vmatprep.subr.mxu0 0.0
  %836 = vmatpush1.msra.mxu0 0.0
  %837 = vmatprep.subr.mxu0 0.0
  %838 = vmatpush1.msra.mxu0 0.0
  %839 = vmatprep.subr.mxu0 0.0
  %840 = vmatpush1.msra.mxu0 0.0
  %841 = vmatprep.subr.mxu0 0.0
  %842 = vmatpush1.msra.mxu0 0.0
  %843 = vmatprep.subr.mxu0 0.0
  %844 = vmatpush1.msra.mxu0 0.0
  %845 = vmatprep.subr.mxu0 0.0
  %846 = vmatpush1.msra.mxu0 0.0
  %847 = vmatprep.subr.mxu0 0.0
  %848 = vmatpush1.msra.mxu0 0.0
  %849 = vmatprep.subr.mxu0 0.0
  %850 = vmatpush1.msra.mxu0 0.0
  %851 = vmatprep.subr.mxu0 0.0
  %852 = vmatpush1.msra.mxu0 0.0
  %853 = vmatprep.subr.mxu0 0.0
  %854 = vmatpush1.msra.mxu0 0.0
  %855 = vmatprep.subr.mxu0 0.0
  %856 = vmatpush1.msra.mxu0 0.0
  %857 = vmatprep.subr.mxu0 0.0
  %858 = vmatpush1.msra.mxu0 0.0
  %859 = vmatprep.subr.mxu0 0.0
  %860 = vmatpush1.msra.mxu0 0.0
  %861 = vmatprep.subr.mxu0 0.0
  %862 = vmatpush1.msra.mxu0 0.0
  %863 = vmatprep.subr.mxu0 0.0
  %864 = vmatpush1.msra.mxu0 0.0
  %865 = vmatprep.subr.mxu0 0.0
  %866 = vmatpush1.msra.mxu0 0.0
  %867 = vmatprep.subr.mxu0 0.0
  %868 = vmatpush1.msra.mxu0 0.0
  %869 = vmatprep.subr.mxu0 0.0
  %870 = vmatpush1.msra.mxu0 0.0
  %871 = vmatprep.subr.mxu0 0.0
  %872 = vmatpush1.msra.mxu0 0.0
  %873 = vmatprep.subr.mxu0 0.0
  %874 = vmatpush1.msra.mxu0 0.0
  %875 = vmatprep.subr.mxu0 0.0
  %876 = vmatpush1.msra.mxu0 0.0
  %877 = vmatprep.subr.mxu0 0.0
  %878 = vmatpush1.msra.mxu0 0.0
  %879 = vmatprep.subr.mxu0 0.0
  %880 = vmatpush1.msra.mxu0 0.0
  %881 = vmatprep.subr.mxu0 0.0
  %882 = vmatpush1.msra.mxu0 0.0
  %883 = vmatprep.mubr.f32.mxu0 0.0
  %884 = vmatmul.mubr.f32.gmra.mrb[0].mxu0 %v814
  %v885 = vpop.f32.mrb[0].mxu0
  %v886 = vadd.f32 0.0, %v885
  %v887 = vpop.f32.mrb[0].mxu0
  %888 = vmatprep.mubr.f32.mxu0 0.0
  %889 = vmatmul.mubr.f32.gmra.mrb[0].mxu0 %v817
  %v890 = vpop.f32.mrb[0].mxu0
  %v891 = vadd.f32 0.0, %v890
  %v892 = vpop.f32.mrb[0].mxu0
  %893 = vdwg.mxu0
  %v894 = vpack.c.bf16 %v891, %v886
  %v895 = vpack.c.bf16 %v187, %v187
  %v897 = vsel %vm195, %v894, 0
  %v900 = vsel %vm600, %v895, 0
  %902 = vmatprep.subr.bf16.mxu0 0
  %903 = vmatpush1.bf16.msra.mxu0 %v900
  %904 = vmatprep.subr.bf16.mxu0 0
  %905 = vmatpush1.bf16.msra.mxu0 0
  %906 = vmatprep.subr.bf16.mxu0 0
  %907 = vmatpush1.bf16.msra.mxu0 0
  %908 = vmatprep.subr.bf16.mxu0 0
  %909 = vmatpush1.bf16.msra.mxu0 0
  %910 = vmatprep.subr.bf16.mxu0 0
  %911 = vmatpush1.bf16.msra.mxu0 0
  %912 = vmatprep.subr.bf16.mxu0 0
  %913 = vmatpush1.bf16.msra.mxu0 0
  %914 = vmatprep.subr.bf16.mxu0 0
  %915 = vmatpush1.bf16.msra.mxu0 0
  %916 = vmatprep.subr.bf16.mxu0 0
  %917 = vmatpush1.bf16.msra.mxu0 0
  %918 = vmatprep.subr.bf16.mxu0 0
  %919 = vmatpush1.bf16.msra.mxu0 0
  %920 = vmatprep.subr.bf16.mxu0 0
  %921 = vmatpush1.bf16.msra.mxu0 0
  %922 = vmatprep.subr.bf16.mxu0 0
  %923 = vmatpush1.bf16.msra.mxu0 0
  %924 = vmatprep.subr.bf16.mxu0 0
  %925 = vmatpush1.bf16.msra.mxu0 0
  %926 = vmatprep.subr.bf16.mxu0 0
  %927 = vmatpush1.bf16.msra.mxu0 0
  %928 = vmatprep.subr.bf16.mxu0 0
  %929 = vmatpush1.bf16.msra.mxu0 0
  %930 = vmatprep.subr.bf16.mxu0 0
  %931 = vmatpush1.bf16.msra.mxu0 0
  %932 = vmatprep.subr.bf16.mxu0 0
  %933 = vmatpush1.bf16.msra.mxu0 0
  %934 = vmatprep.mubr.bf16.mxu0 0
  %935 = vmatmul.mubr.bf16.gmra.mrb[0].mxu0 %v897
  %v936 = vpop.f32.mrb[0].mxu0
  %v937 = vadd.f32 0.0, %v936
  %v938 = vpop.f32.mrb[0].mxu0
  %v939 = vpop.f32.mrb[0].mxu0
  %v940 = vadd.f32 0.0, %v939
  %v941 = vpop.f32.mrb[0].mxu0
  %942 = vdwg.mxu0
  %v943 = vadd.f32 %v686, %v937
  %v944 = vadd.f32 %v689, %v940
  %945 = vrot.lane.b32.xlu0 %v179, 104
  %v946 = vpop.permute.xlu0 %945
  %947 = vrot.lane.b32.xlu0 %v182, 104
  %v948 = vpop.permute.xlu0 %947
  %949 = vrot.lane.b32.xlu0 %v179, 72
  %v950 = vpop.permute.xlu0 %949
  %951 = vrot.lane.b32.xlu0 %v182, 72
  %v952 = vpop.permute.xlu0 %951
  %v953 = vsel %vm195, %v946, 0
  %v955 = vsel %vm195, %v948, 0
  %v957 = vsel %vm195, %v950, 0
  %v959 = vsel %vm195, %v952, 0
  %961 = vmatprep.subr.mxu0 0.0
  %962 = vmatpush1.xpose.msra.mxu0 %v957
  %963 = vmatprep.subr.mxu0 0.0
  %964 = vmatpush1.xpose.msra.mxu0 %v959
  %965 = vmatprep.subr.mxu0 0.0
  %966 = vmatpush1.xpose.msra.mxu0 0.0
  %967 = vmatprep.subr.mxu0 0.0
  %968 = vmatpush1.xpose.msra.mxu0 0.0
  %969 = vmatprep.subr.mxu0 0.0
  %970 = vmatpush1.xpose.msra.mxu0 0.0
  %971 = vmatprep.subr.mxu0 0.0
  %972 = vmatpush1.xpose.msra.mxu0 0.0
  %973 = vmatprep.subr.mxu0 0.0
  %974 = vmatpush1.xpose.msra.mxu0 0.0
  %975 = vmatprep.subr.mxu0 0.0
  %976 = vmatpush1.xpose.msra.mxu0 0.0
  %977 = vmatprep.subr.mxu0 0.0
  %978 = vmatpush1.xpose.msra.mxu0 0.0
  %979 = vmatprep.subr.mxu0 0.0
  %980 = vmatpush1.xpose.msra.mxu0 0.0
  %981 = vmatprep.subr.mxu0 0.0
  %982 = vmatpush1.xpose.msra.mxu0 0.0
  %983 = vmatprep.subr.mxu0 0.0
  %984 = vmatpush1.xpose.msra.mxu0 0.0
  %985 = vmatprep.subr.mxu0 0.0
  %986 = vmatpush1.xpose.msra.mxu0 0.0
  %987 = vmatprep.subr.mxu0 0.0
  %988 = vmatpush1.xpose.msra.mxu0 0.0
  %989 = vmatprep.subr.mxu0 0.0
  %990 = vmatpush1.xpose.msra.mxu0 0.0
  %991 = vmatprep.subr.mxu0 0.0
  %992 = vmatpush1.xpose.msra.mxu0 0.0
  %993 = vmatprep.subr.mxu0 0.0
  %994 = vmatpush1.xpose.msra.mxu0 0.0
  %995 = vmatprep.subr.mxu0 0.0
  %996 = vmatpush1.xpose.msra.mxu0 0.0
  %997 = vmatprep.subr.mxu0 0.0
  %998 = vmatpush1.xpose.msra.mxu0 0.0
  %999 = vmatprep.subr.mxu0 0.0
  %1000 = vmatpush1.xpose.msra.mxu0 0.0
  %1001 = vmatprep.subr.mxu0 0.0
  %1002 = vmatpush1.xpose.msra.mxu0 0.0
  %1003 = vmatprep.subr.mxu0 0.0
  %1004 = vmatpush1.xpose.msra.mxu0 0.0
  %1005 = vmatprep.subr.mxu0 0.0
  %1006 = vmatpush1.xpose.msra.mxu0 0.0
  %1007 = vmatprep.subr.mxu0 0.0
  %1008 = vmatpush1.xpose.msra.mxu0 0.0
  %1009 = vmatprep.subr.mxu0 0.0
  %1010 = vmatpush1.xpose.msra.mxu0 0.0
  %1011 = vmatprep.subr.mxu0 0.0
  %1012 = vmatpush1.xpose.msra.mxu0 0.0
  %1013 = vmatprep.subr.mxu0 0.0
  %1014 = vmatpush1.xpose.msra.mxu0 0.0
  %1015 = vmatprep.subr.mxu0 0.0
  %1016 = vmatpush1.xpose.msra.mxu0 0.0
  %1017 = vmatprep.subr.mxu0 0.0
  %1018 = vmatpush1.xpose.msra.mxu0 0.0
  %1019 = vmatprep.subr.mxu0 0.0
  %1020 = vmatpush1.xpose.msra.mxu0 0.0
  %1021 = vmatprep.subr.mxu0 0.0
  %1022 = vmatpush1.xpose.msra.mxu0 0.0
  %1023 = vmatprep.subr.mxu0 0.0
  %1024 = vmatpush1.xpose.msra.mxu0 0.0
  %1025 = vmatprep.mubr.f32.mxu0 0.0
  %1026 = vmatmul.mubr.f32.gmra.mrb[0].mxu0 %v953
  %v1027 = vpop.f32.mrb[0].mxu0
  %v1028 = vadd.f32 0.0, %v1027
  %v1029 = vpop.f32.mrb[0].mxu0
  %1030 = vmatprep.mubr.f32.mxu0 0.0
  %1031 = vmatmul.mubr.f32.gmra.mrb[0].mxu0 %v955
  %v1032 = vpop.f32.mrb[0].mxu0
  %v1033 = vadd.f32 0.0, %v1032
  %v1034 = vpop.f32.mrb[0].mxu0
  %1035 = vdwg.mxu0
  %v1036 = vmul.f32 %v1028, 0.35355338
  %v1037 = vmul.f32 %v1033, 0.35355338
  %v1038 = vsel %vm281, %v1036, -inf
  %1039 = vmax.xlane.f32.xlu0 %v1038
  %v1040 = vpop.xlane.xlu0 %1039
  %v1041 = vsel %vm281, %v1037, -inf
  %1042 = vmax.xlane.f32.xlu0 %v1041
  %v1043 = vpop.xlane.xlu0 %1042
  %v1044 = vsub.f32 %v1036, %v1040
  %v1045 = vsub.f32 %v1037, %v1043
  %v1046 = vmul.f32 %v1044, 1.442695
  %v1047 = vpow.pop %v1046
  %v1048 = vmul.f32 %v1045, 1.442695
  %v1049 = vpow.pop %v1048
  %v1050 = vsel %vm281, %v1047, 0.0
  %1051 = vadd.xlane.f32.xlu0 %v1050
  %v1052 = vpop.xlane.xlu0 %1051
  %v1053 = vsel %vm281, %v1049, 0.0
  %1054 = vadd.xlane.f32.xlu0 %v1053
  %v1055 = vpop.xlane.xlu0 %1054
  %v1056 = vrcp.pop %v1052
  %v1057 = vrcp.pop %v1055
  %v1058 = vmul.f32 %v1047, %v1056
  %v1059 = vmul.f32 %v1049, %v1057
  %1060 = vrot.lane.b32.xlu0 %v179, 40
  %v1061 = vpop.permute.xlu0 %1060
  %1062 = vrot.lane.b32.xlu0 %v182, 40
  %v1063 = vpop.permute.xlu0 %1062
  %v1067 = vsel %vm281, %v1058, 0
  %v1070 = vsel %vm281, %v1059, 0
  %1072 = vmatprep.subr.mxu0 0.0
  %1073 = vmatpush1.msra.mxu0 %v1061
  %1074 = vmatprep.subr.mxu0 0.0
  %1075 = vmatpush1.msra.mxu0 %v1063
  %1076 = vmatprep.subr.mxu0 0.0
  %1077 = vmatpush1.msra.mxu0 0.0
  %1078 = vmatprep.subr.mxu0 0.0
  %1079 = vmatpush1.msra.mxu0 0.0
  %1080 = vmatprep.subr.mxu0 0.0
  %1081 = vmatpush1.msra.mxu0 0.0
  %1082 = vmatprep.subr.mxu0 0.0
  %1083 = vmatpush1.msra.mxu0 0.0
  %1084 = vmatprep.subr.mxu0 0.0
  %1085 = vmatpush1.msra.mxu0 0.0
  %1086 = vmatprep.subr.mxu0 0.0
  %1087 = vmatpush1.msra.mxu0 0.0
  %1088 = vmatprep.subr.mxu0 0.0
  %1089 = vmatpush1.msra.mxu0 0.0
  %1090 = vmatprep.subr.mxu0 0.0
  %1091 = vmatpush1.msra.mxu0 0.0
  %1092 = vmatprep.subr.mxu0 0.0
  %1093 = vmatpush1.msra.mxu0 0.0
  %1094 = vmatprep.subr.mxu0 0.0
  %1095 = vmatpush1.msra.mxu0 0.0
  %1096 = vmatprep.subr.mxu0 0.0
  %1097 = vmatpush1.msra.mxu0 0.0
  %1098 = vmatprep.subr.mxu0 0.0
  %1099 = vmatpush1.msra.mxu0 0.0
  %1100 = vmatprep.subr.mxu0 0.0
  %1101 = vmatpush1.msra.mxu0 0.0
  %1102 = vmatprep.subr.mxu0 0.0
  %1103 = vmatpush1.msra.mxu0 0.0
  %1104 = vmatprep.subr.mxu0 0.0
  %1105 = vmatpush1.msra.mxu0 0.0
  %1106 = vmatprep.subr.mxu0 0.0
  %1107 = vmatpush1.msra.mxu0 0.0
  %1108 = vmatprep.subr.mxu0 0.0
  %1109 = vmatpush1.msra.mxu0 0.0
  %1110 = vmatprep.subr.mxu0 0.0
  %1111 = vmatpush1.msra.mxu0 0.0
  %1112 = vmatprep.subr.mxu0 0.0
  %1113 = vmatpush1.msra.mxu0 0.0
  %1114 = vmatprep.subr.mxu0 0.0
  %1115 = vmatpush1.msra.mxu0 0.0
  %1116 = vmatprep.subr.mxu0 0.0
  %1117 = vmatpush1.msra.mxu0 0.0
  %1118 = vmatprep.subr.mxu0 0.0
  %1119 = vmatpush1.msra.mxu0 0.0
  %1120 = vmatprep.subr.mxu0 0.0
  %1121 = vmatpush1.msra.mxu0 0.0
  %1122 = vmatprep.subr.mxu0 0.0
  %1123 = vmatpush1.msra.mxu0 0.0
  %1124 = vmatprep.subr.mxu0 0.0
  %1125 = vmatpush1.msra.mxu0 0.0
  %1126 = vmatprep.subr.mxu0 0.0
  %1127 = vmatpush1.msra.mxu0 0.0
  %1128 = vmatprep.subr.mxu0 0.0
  %1129 = vmatpush1.msra.mxu0 0.0
  %1130 = vmatprep.subr.mxu0 0.0
  %1131 = vmatpush1.msra.mxu0 0.0
  %1132 = vmatprep.subr.mxu0 0.0
  %1133 = vmatpush1.msra.mxu0 0.0
  %1134 = vmatprep.subr.mxu0 0.0
  %1135 = vmatpush1.msra.mxu0 0.0
  %1136 = vmatprep.mubr.f32.mxu0 0.0
  %1137 = vmatmul.mubr.f32.gmra.mrb[0].mxu0 %v1067
  %v1138 = vpop.f32.mrb[0].mxu0
  %v1139 = vadd.f32 0.0, %v1138
  %v1140 = vpop.f32.mrb[0].mxu0
  %1141 = vmatprep.mubr.f32.mxu0 0.0
  %1142 = vmatmul.mubr.f32.gmra.mrb[0].mxu0 %v1070
  %v1143 = vpop.f32.mrb[0].mxu0
  %v1144 = vadd.f32 0.0, %v1143
  %v1145 = vpop.f32.mrb[0].mxu0
  %1146 = vdwg.mxu0
  %v1147 = vpack.c.bf16 %v1144, %v1139
  %v1148 = vpack.c.bf16 %v188, %v188
  %v1150 = vsel %vm195, %v1147, 0
  %v1153 = vsel %vm600, %v1148, 0
  %1155 = vmatprep.subr.bf16.mxu0 0
  %1156 = vmatpush1.bf16.msra.mxu0 %v1153
  %1157 = vmatprep.subr.bf16.mxu0 0
  %1158 = vmatpush1.bf16.msra.mxu0 0
  %1159 = vmatprep.subr.bf16.mxu0 0
  %1160 = vmatpush1.bf16.msra.mxu0 0
  %1161 = vmatprep.subr.bf16.mxu0 0
  %1162 = vmatpush1.bf16.msra.mxu0 0
  %1163 = vmatprep.subr.bf16.mxu0 0
  %1164 = vmatpush1.bf16.msra.mxu0 0
  %1165 = vmatprep.subr.bf16.mxu0 0
  %1166 = vmatpush1.bf16.msra.mxu0 0
  %1167 = vmatprep.subr.bf16.mxu0 0
  %1168 = vmatpush1.bf16.msra.mxu0 0
  %1169 = vmatprep.subr.bf16.mxu0 0
  %1170 = vmatpush1.bf16.msra.mxu0 0
  %1171 = vmatprep.subr.bf16.mxu0 0
  %1172 = vmatpush1.bf16.msra.mxu0 0
  %1173 = vmatprep.subr.bf16.mxu0 0
  %1174 = vmatpush1.bf16.msra.mxu0 0
  %1175 = vmatprep.subr.bf16.mxu0 0
  %1176 = vmatpush1.bf16.msra.mxu0 0
  %1177 = vmatprep.subr.bf16.mxu0 0
  %1178 = vmatpush1.bf16.msra.mxu0 0
  %1179 = vmatprep.subr.bf16.mxu0 0
  %1180 = vmatpush1.bf16.msra.mxu0 0
  %1181 = vmatprep.subr.bf16.mxu0 0
  %1182 = vmatpush1.bf16.msra.mxu0 0
  %1183 = vmatprep.subr.bf16.mxu0 0
  %1184 = vmatpush1.bf16.msra.mxu0 0
  %1185 = vmatprep.subr.bf16.mxu0 0
  %1186 = vmatpush1.bf16.msra.mxu0 0
  %1187 = vmatprep.mubr.bf16.mxu0 0
  %1188 = vmatmul.mubr.bf16.gmra.mrb[0].mxu0 %v1150
  %v1189 = vpop.f32.mrb[0].mxu0
  %v1190 = vadd.f32 0.0, %v1189
  %v1191 = vpop.f32.mrb[0].mxu0
  %v1192 = vpop.f32.mrb[0].mxu0
  %v1193 = vadd.f32 0.0, %v1192
  %v1194 = vpop.f32.mrb[0].mxu0
  %1195 = vdwg.mxu0
  %v1196 = vadd.f32 %v943, %v1190
  %v1197 = vadd.f32 %v944, %v1193
  %v1198 = vadd.f32 %v77, %v1196
  %v1199 = vadd.f32 %v78, %v1197
  %v1200 = vld [vmem:[%s10] sm:$0x1]
  %v1202 = vlaneseq
  %v1203 = vshrl.u32 %v1202, 7
  %v1204 = vsub.s32 0, %v1203
  %v1205 = vrot.slane %v1200, %v1204
  %v1207 = vadd.f32 %v1198, %v1205
  %v1208 = vadd.f32 %v1199, %v1205
  %v1209 = vld [vmem:[%s11] sm:$0x1]
  %v1210 = vld [vmem:[%s12] sm:$0x1]
  %v1211 = vsel %vm83, %v1207, 0.0
  %1212 = vadd.xlane.f32.xlu0 %v1211
  %v1213 = vpop.xlane.xlu0 %1212
  %v1214 = vsel %vm83, %v1208, 0.0
  %1215 = vadd.xlane.f32.xlu0 %v1214
  %v1216 = vpop.xlane.xlu0 %1215
  %v1217 = vmul.f32 %v1213, %v90
  %v1218 = vmul.f32 %v1216, %v90
  %v1219 = vsub.f32 %v1207, %v1217
  %v1220 = vsub.f32 %v1208, %v1218
  %v1221 = vmul.f32 %v1219, %v1219
  %v1222 = vmul.f32 %v1220, %v1220
  %v1223 = vsel %vm83, %v1221, 0.0
  %1224 = vadd.xlane.f32.xlu0 %v1223
  %v1225 = vpop.xlane.xlu0 %1224
  %v1226 = vsel %vm83, %v1222, 0.0
  %1227 = vadd.xlane.f32.xlu0 %v1226
  %v1228 = vpop.xlane.xlu0 %1227
  %v1229 = vmul.f32 %v1225, %v90
  %v1230 = vmul.f32 %v1228, %v90
  %v1231 = vadd.f32 %v1229, 1e-05
  %v1232 = vadd.f32 %v1230, 1e-05
  %v1233 = vrsqrt.pop %v1231
  %v1234 = vrsqrt.pop %v1232
  %v1235 = vmul.f32 %v1219, %v1233
  %v1236 = vmul.f32 %v1220, %v1234
  %v1238 = vlaneseq
  %v1239 = vshrl.u32 %v1238, 7
  %v1240 = vsub.s32 0, %v1239
  %v1241 = vrot.slane %v1209, %v1240
  %v1243 = vmul.f32 %v1235, %v1241
  %v1244 = vmul.f32 %v1236, %v1241
  %v1246 = vlaneseq
  %v1247 = vshrl.u32 %v1246, 7
  %v1248 = vsub.s32 0, %v1247
  %v1249 = vrot.slane %v1210, %v1248
  %v1251 = vadd.f32 %v1243, %v1249
  %v1252 = vadd.f32 %v1244, %v1249
  %v1253 = vld [vmem:[%s13] sm:$0xff]
  %v1254 = vld [vmem:[%s13 + $0x8] sm:$0xff]
  %v1255 = vld [vmem:[%s13 + $0x10] sm:$0xff]
  %v1256 = vld [vmem:[%s13 + $0x18] sm:$0xff]
  %v1257 = vpack.c.bf16 %v1252, %v1251
  %v1258 = vpack.c.bf16 %v1254, %v1253
  %v1259 = vpack.c.bf16 %v1256, %v1255
  %v1260 = vld [vmem:[%s14] sm:$0x1]
  %v1262 = vlaneseq
  %v1263 = vshrl.u32 %v1262, 7
  %v1264 = vsub.s32 0, %v1263
  %v1265 = vrot.slane %v1260, %v1264
  %v1268 = vsel %vm83, %v1257, 0
  %1270 = vmatprep.subr.bf16.mxu0 0
  %1271 = vmatpush1.bf16.msra.mxu0 %v1258
  %1272 = vmatprep.subr.bf16.mxu0 0
  %1273 = vmatpush1.bf16.msra.mxu0 %v1259
  %1274 = vmatprep.subr.bf16.mxu0 0
  %1275 = vmatpush1.bf16.msra.mxu0 0
  %1276 = vmatprep.subr.bf16.mxu0 0
  %1277 = vmatpush1.bf16.msra.mxu0 0
  %1278 = vmatprep.subr.bf16.mxu0 0
  %1279 = vmatpush1.bf16.msra.mxu0 0
  %1280 = vmatprep.subr.bf16.mxu0 0
  %1281 = vmatpush1.bf16.msra.mxu0 0
  %1282 = vmatprep.subr.bf16.mxu0 0
  %1283 = vmatpush1.bf16.msra.mxu0 0
  %1284 = vmatprep.subr.bf16.mxu0 0
  %1285 = vmatpush1.bf16.msra.mxu0 0
  %1286 = vmatprep.subr.bf16.mxu0 0
  %1287 = vmatpush1.bf16.msra.mxu0 0
  %1288 = vmatprep.subr.bf16.mxu0 0
  %1289 = vmatpush1.bf16.msra.mxu0 0
  %1290 = vmatprep.subr.bf16.mxu0 0
  %1291 = vmatpush1.bf16.msra.mxu0 0
  %1292 = vmatprep.subr.bf16.mxu0 0
  %1293 = vmatpush1.bf16.msra.mxu0 0
  %1294 = vmatprep.subr.bf16.mxu0 0
  %1295 = vmatpush1.bf16.msra.mxu0 0
  %1296 = vmatprep.subr.bf16.mxu0 0
  %1297 = vmatpush1.bf16.msra.mxu0 0
  %1298 = vmatprep.subr.bf16.mxu0 0
  %1299 = vmatpush1.bf16.msra.mxu0 0
  %1300 = vmatprep.subr.bf16.mxu0 0
  %1301 = vmatpush1.bf16.msra.mxu0 0
  %1302 = vmatprep.mubr.bf16.mxu0 0
  %1303 = vmatmul.mubr.bf16.gmra.mrb[0].mxu0 %v1268
  %v1304 = vpop.f32.mrb[0].mxu0
  %v1305 = vadd.f32 %v1265, %v1304
  %v1306 = vpop.f32.mrb[0].mxu0
  %v1307 = vpop.f32.mrb[0].mxu0
  %v1308 = vadd.f32 %v1265, %v1307
  %v1309 = vpop.f32.mrb[0].mxu0
  %1310 = vdwg.mxu0
  %v1311 = vmax.f32 %v1305, 0.0
  %v1312 = vmax.f32 %v1308, 0.0
  %v1313 = vld [vmem:[%s15] sm:$0xff]
  %v1314 = vld [vmem:[%s15 + $0x8] sm:$0xff]
  %v1315 = vld [vmem:[%s15 + $0x10] sm:$0xff]
  %v1316 = vld [vmem:[%s15 + $0x18] sm:$0xff]
  %v1317 = vld [vmem:[%s15 + $0x20] sm:$0xff]
  %v1318 = vld [vmem:[%s15 + $0x28] sm:$0xff]
  %v1319 = vld [vmem:[%s15 + $0x30] sm:$0xff]
  %v1320 = vld [vmem:[%s15 + $0x38] sm:$0xff]
  %v1321 = vpack.c.bf16 %v1312, %v1311
  %v1322 = vpack.c.bf16 %v1314, %v1313
  %v1323 = vpack.c.bf16 %v1316, %v1315
  %v1324 = vpack.c.bf16 %v1318, %v1317
  %v1325 = vpack.c.bf16 %v1320, %v1319
  %vm1326 = vcmask 523264
  %v1328 = vsel %vm1326, %v1321, 0
  %1330 = vmatprep.subr.bf16.mxu0 0
  %1331 = vmatpush1.bf16.msra.mxu0 %v1322
  %1332 = vmatprep.subr.bf16.mxu0 0
  %1333 = vmatpush1.bf16.msra.mxu0 %v1323
  %1334 = vmatprep.subr.bf16.mxu0 0
  %1335 = vmatpush1.bf16.msra.mxu0 %v1324
  %1336 = vmatprep.subr.bf16.mxu0 0
  %1337 = vmatpush1.bf16.msra.mxu0 %v1325
  %1338 = vmatprep.subr.bf16.mxu0 0
  %1339 = vmatpush1.bf16.msra.mxu0 0
  %1340 = vmatprep.subr.bf16.mxu0 0
  %1341 = vmatpush1.bf16.msra.mxu0 0
  %1342 = vmatprep.subr.bf16.mxu0 0
  %1343 = vmatpush1.bf16.msra.mxu0 0
  %1344 = vmatprep.subr.bf16.mxu0 0
  %1345 = vmatpush1.bf16.msra.mxu0 0
  %1346 = vmatprep.subr.bf16.mxu0 0
  %1347 = vmatpush1.bf16.msra.mxu0 0
  %1348 = vmatprep.subr.bf16.mxu0 0
  %1349 = vmatpush1.bf16.msra.mxu0 0
  %1350 = vmatprep.subr.bf16.mxu0 0
  %1351 = vmatpush1.bf16.msra.mxu0 0
  %1352 = vmatprep.subr.bf16.mxu0 0
  %1353 = vmatpush1.bf16.msra.mxu0 0
  %1354 = vmatprep.subr.bf16.mxu0 0
  %1355 = vmatpush1.bf16.msra.mxu0 0
  %1356 = vmatprep.subr.bf16.mxu0 0
  %1357 = vmatpush1.bf16.msra.mxu0 0
  %1358 = vmatprep.subr.bf16.mxu0 0
  %1359 = vmatpush1.bf16.msra.mxu0 0
  %1360 = vmatprep.subr.bf16.mxu0 0
  %1361 = vmatpush1.bf16.msra.mxu0 0
  %1362 = vmatprep.mubr.bf16.mxu0 0
  %1363 = vmatmul.mubr.bf16.gmra.mrb[0].mxu0 %v1328
  %v1364 = vpop.f32.mrb[0].mxu0
  %v1365 = vadd.f32 0.0, %v1364
  %v1366 = vpop.f32.mrb[0].mxu0
  %v1367 = vpop.f32.mrb[0].mxu0
  %v1368 = vadd.f32 0.0, %v1367
  %v1369 = vpop.f32.mrb[0].mxu0
  %1370 = vdwg.mxu0
  %v1371 = vadd.f32 %v1207, %v1365
  %v1372 = vadd.f32 %v1208, %v1368
  %v1373 = vld [vmem:[%s16] sm:$0x1]
  %v1375 = vlaneseq
  %v1376 = vshrl.u32 %v1375, 7
  %v1377 = vsub.s32 0, %v1376
  %v1378 = vrot.slane %v1373, %v1377
  %v1380 = vadd.f32 %v1371, %v1378
  %v1381 = vadd.f32 %v1372, %v1378
  %1383 = vset.pattern.permute.xlu0 0
  %1384 = vperm.xlu0 %1383, %v79
  %v1385 = vpop.permute.xlu0 %1384
  %1388 = vset.pattern.permute.xlu0 0
  %1389 = vperm.xlu0 %1388, %v80
  %v1390 = vpop.permute.xlu0 %1389
  %v1392 = vmul.f32 %v1380, %v1385
  %v1393 = vmul.f32 %v1381, %v1390
  %s1394 = scalar_lea.vmem %s5, 1
  %v1395 = vld [vmem:[%s1394] sm:$0x1]
  %s1396 = scalar_lea.vmem %s6, 1
  %v1397 = vld [vmem:[%s1396] sm:$0x1]
  %v1398 = vsel %vm83, %v1392, 0.0
  %1399 = vadd.xlane.f32.xlu0 %v1398
  %v1400 = vpop.xlane.xlu0 %1399
  %v1401 = vsel %vm83, %v1393, 0.0
  %1402 = vadd.xlane.f32.xlu0 %v1401
  %v1403 = vpop.xlane.xlu0 %1402
  %v1404 = vmul.f32 %v1400, %v90
  %v1405 = vmul.f32 %v1403, %v90
  %v1406 = vsub.f32 %v1392, %v1404
  %v1407 = vsub.f32 %v1393, %v1405
  %v1408 = vmul.f32 %v1406, %v1406
  %v1409 = vmul.f32 %v1407, %v1407
  %v1410 = vsel %vm83, %v1408, 0.0
  %1411 = vadd.xlane.f32.xlu0 %v1410
  %v1412 = vpop.xlane.xlu0 %1411
  %v1413 = vsel %vm83, %v1409, 0.0
  %1414 = vadd.xlane.f32.xlu0 %v1413
  %v1415 = vpop.xlane.xlu0 %1414
  %v1416 = vmul.f32 %v1412, %v90
  %v1417 = vmul.f32 %v1415, %v90
  %v1418 = vadd.f32 %v1416, 1e-05
  %v1419 = vadd.f32 %v1417, 1e-05
  %v1420 = vrsqrt.pop %v1418
  %v1421 = vrsqrt.pop %v1419
  %v1422 = vmul.f32 %v1406, %v1420
  %v1423 = vmul.f32 %v1407, %v1421
  %v1425 = vlaneseq
  %v1426 = vshrl.u32 %v1425, 7
  %v1427 = vsub.s32 0, %v1426
  %v1428 = vrot.slane %v1395, %v1427
  %v1430 = vmul.f32 %v1422, %v1428
  %v1431 = vmul.f32 %v1423, %v1428
  %v1433 = vlaneseq
  %v1434 = vshrl.u32 %v1433, 7
  %v1435 = vsub.s32 0, %v1434
  %v1436 = vrot.slane %v1397, %v1435
  %v1438 = vadd.f32 %v1430, %v1436
  %v1439 = vadd.f32 %v1431, %v1436
  %s1440 = scalar_lea.vmem %s7, 32
  %v1441 = vld [vmem:[%s1440] sm:$0xff]
  %v1442 = vld [vmem:[%s1440 + $0x8] sm:$0xff]
  %v1443 = vld [vmem:[%s1440 + $0x10] sm:$0xff]
  %v1444 = vld [vmem:[%s1440 + $0x18] sm:$0xff]
  %v1445 = vpack.c.bf16 %v1439, %v1438
  %v1446 = vpack.c.bf16 %v1442, %v1441
  %v1447 = vpack.c.bf16 %v1444, %v1443
  %s1448 = scalar_lea.vmem %s8, 1
  %v1449 = vld [vmem:[%s1448] sm:$0x1]
  %v1451 = vlaneseq
  %v1452 = vshrl.u32 %v1451, 7
  %v1453 = vsub.s32 0, %v1452
  %v1454 = vrot.slane %v1449, %v1453
  %v1457 = vsel %vm83, %v1445, 0
  %1459 = vmatprep.subr.bf16.mxu0 0
  %1460 = vmatpush1.bf16.msra.mxu0 %v1446
  %1461 = vmatprep.subr.bf16.mxu0 0
  %1462 = vmatpush1.bf16.msra.mxu0 %v1447
  %1463 = vmatprep.subr.bf16.mxu0 0
  %1464 = vmatpush1.bf16.msra.mxu0 0
  %1465 = vmatprep.subr.bf16.mxu0 0
  %1466 = vmatpush1.bf16.msra.mxu0 0
  %1467 = vmatprep.subr.bf16.mxu0 0
  %1468 = vmatpush1.bf16.msra.mxu0 0
  %1469 = vmatprep.subr.bf16.mxu0 0
  %1470 = vmatpush1.bf16.msra.mxu0 0
  %1471 = vmatprep.subr.bf16.mxu0 0
  %1472 = vmatpush1.bf16.msra.mxu0 0
  %1473 = vmatprep.subr.bf16.mxu0 0
  %1474 = vmatpush1.bf16.msra.mxu0 0
  %1475 = vmatprep.subr.bf16.mxu0 0
  %1476 = vmatpush1.bf16.msra.mxu0 0
  %1477 = vmatprep.subr.bf16.mxu0 0
  %1478 = vmatpush1.bf16.msra.mxu0 0
  %1479 = vmatprep.subr.bf16.mxu0 0
  %1480 = vmatpush1.bf16.msra.mxu0 0
  %1481 = vmatprep.subr.bf16.mxu0 0
  %1482 = vmatpush1.bf16.msra.mxu0 0
  %1483 = vmatprep.subr.bf16.mxu0 0
  %1484 = vmatpush1.bf16.msra.mxu0 0
  %1485 = vmatprep.subr.bf16.mxu0 0
  %1486 = vmatpush1.bf16.msra.mxu0 0
  %1487 = vmatprep.subr.bf16.mxu0 0
  %1488 = vmatpush1.bf16.msra.mxu0 0
  %1489 = vmatprep.subr.bf16.mxu0 0
  %1490 = vmatpush1.bf16.msra.mxu0 0
  %1491 = vmatprep.mubr.bf16.mxu0 0
  %1492 = vmatmul.mubr.bf16.gmra.mrb[0].mxu0 %v1457
  %v1493 = vpop.f32.mrb[0].mxu0
  %v1494 = vadd.f32 %v1454, %v1493
  %v1495 = vpop.f32.mrb[0].mxu0
  %v1496 = vpop.f32.mrb[0].mxu0
  %v1497 = vadd.f32 %v1454, %v1496
  %v1498 = vpop.f32.mrb[0].mxu0
  %1499 = vdwg.mxu0
  %s1500 = scalar_lea.vmem %s9, 32
  %v1501 = vld [vmem:[%s1500] sm:$0xff]
  %v1502 = vld [vmem:[%s1500 + $0x8] sm:$0xff]
  %v1503 = vld [vmem:[%s1500 + $0x10] sm:$0xff]
  %v1504 = vld [vmem:[%s1500 + $0x18] sm:$0xff]
  %1507 = vrot.lane.b32.xlu0 %v1494, 96
  %v1508 = vpop.permute.xlu0 %1507
  %1509 = vrot.lane.b32.xlu0 %v1497, 96
  %v1510 = vpop.permute.xlu0 %1509
  %v1511 = vsel %vm195, %v1494, 0
  %v1513 = vsel %vm195, %v1497, 0
  %v1515 = vsel %vm195, %v1508, 0
  %v1517 = vsel %vm195, %v1510, 0
  %1519 = vmatprep.subr.mxu0 0.0
  %1520 = vmatpush1.xpose.msra.mxu0 %v1515
  %1521 = vmatprep.subr.mxu0 0.0
  %1522 = vmatpush1.xpose.msra.mxu0 %v1517
  %1523 = vmatprep.subr.mxu0 0.0
  %1524 = vmatpush1.xpose.msra.mxu0 0.0
  %1525 = vmatprep.subr.mxu0 0.0
  %1526 = vmatpush1.xpose.msra.mxu0 0.0
  %1527 = vmatprep.subr.mxu0 0.0
  %1528 = vmatpush1.xpose.msra.mxu0 0.0
  %1529 = vmatprep.subr.mxu0 0.0
  %1530 = vmatpush1.xpose.msra.mxu0 0.0
  %1531 = vmatprep.subr.mxu0 0.0
  %1532 = vmatpush1.xpose.msra.mxu0 0.0
  %1533 = vmatprep.subr.mxu0 0.0
  %1534 = vmatpush1.xpose.msra.mxu0 0.0
  %1535 = vmatprep.subr.mxu0 0.0
  %1536 = vmatpush1.xpose.msra.mxu0 0.0
  %1537 = vmatprep.subr.mxu0 0.0
  %1538 = vmatpush1.xpose.msra.mxu0 0.0
  %1539 = vmatprep.subr.mxu0 0.0
  %1540 = vmatpush1.xpose.msra.mxu0 0.0
  %1541 = vmatprep.subr.mxu0 0.0
  %1542 = vmatpush1.xpose.msra.mxu0 0.0
  %1543 = vmatprep.subr.mxu0 0.0
  %1544 = vmatpush1.xpose.msra.mxu0 0.0
  %1545 = vmatprep.subr.mxu0 0.0
  %1546 = vmatpush1.xpose.msra.mxu0 0.0
  %1547 = vmatprep.subr.mxu0 0.0
  %1548 = vmatpush1.xpose.msra.mxu0 0.0
  %1549 = vmatprep.subr.mxu0 0.0
  %1550 = vmatpush1.xpose.msra.mxu0 0.0
  %1551 = vmatprep.subr.mxu0 0.0
  %1552 = vmatpush1.xpose.msra.mxu0 0.0
  %1553 = vmatprep.subr.mxu0 0.0
  %1554 = vmatpush1.xpose.msra.mxu0 0.0
  %1555 = vmatprep.subr.mxu0 0.0
  %1556 = vmatpush1.xpose.msra.mxu0 0.0
  %1557 = vmatprep.subr.mxu0 0.0
  %1558 = vmatpush1.xpose.msra.mxu0 0.0
  %1559 = vmatprep.subr.mxu0 0.0
  %1560 = vmatpush1.xpose.msra.mxu0 0.0
  %1561 = vmatprep.subr.mxu0 0.0
  %1562 = vmatpush1.xpose.msra.mxu0 0.0
  %1563 = vmatprep.subr.mxu0 0.0
  %1564 = vmatpush1.xpose.msra.mxu0 0.0
  %1565 = vmatprep.subr.mxu0 0.0
  %1566 = vmatpush1.xpose.msra.mxu0 0.0
  %1567 = vmatprep.subr.mxu0 0.0
  %1568 = vmatpush1.xpose.msra.mxu0 0.0
  %1569 = vmatprep.subr.mxu0 0.0
  %1570 = vmatpush1.xpose.msra.mxu0 0.0
  %1571 = vmatprep.subr.mxu0 0.0
  %1572 = vmatpush1.xpose.msra.mxu0 0.0
  %1573 = vmatprep.subr.mxu0 0.0
  %1574 = vmatpush1.xpose.msra.mxu0 0.0
  %1575 = vmatprep.subr.mxu0 0.0
  %1576 = vmatpush1.xpose.msra.mxu0 0.0
  %1577 = vmatprep.subr.mxu0 0.0
  %1578 = vmatpush1.xpose.msra.mxu0 0.0
  %1579 = vmatprep.subr.mxu0 0.0
  %1580 = vmatpush1.xpose.msra.mxu0 0.0
  %1581 = vmatprep.subr.mxu0 0.0
  %1582 = vmatpush1.xpose.msra.mxu0 0.0
  %1583 = vmatprep.mubr.f32.mxu0 0.0
  %1584 = vmatmul.mubr.f32.gmra.mrb[0].mxu0 %v1511
  %v1585 = vpop.f32.mrb[0].mxu0
  %v1586 = vadd.f32 0.0, %v1585
  %v1587 = vpop.f32.mrb[0].mxu0
  %1588 = vmatprep.mubr.f32.mxu0 0.0
  %1589 = vmatmul.mubr.f32.gmra.mrb[0].mxu0 %v1513
  %v1590 = vpop.f32.mrb[0].mxu0
  %v1591 = vadd.f32 0.0, %v1590
  %v1592 = vpop.f32.mrb[0].mxu0
  %1593 = vdwg.mxu0
  %v1594 = vmul.f32 %v1586, 0.35355338
  %v1595 = vmul.f32 %v1591, 0.35355338
  %v1596 = vsel %vm281, %v1594, -inf
  %1597 = vmax.xlane.f32.xlu0 %v1596
  %v1598 = vpop.xlane.xlu0 %1597
  %v1599 = vsel %vm281, %v1595, -inf
  %1600 = vmax.xlane.f32.xlu0 %v1599
  %v1601 = vpop.xlane.xlu0 %1600
  %v1602 = vsub.f32 %v1594, %v1598
  %v1603 = vsub.f32 %v1595, %v1601
  %v1604 = vmul.f32 %v1602, 1.442695
  %v1605 = vpow.pop %v1604
  %v1606 = vmul.f32 %v1603, 1.442695
  %v1607 = vpow.pop %v1606
  %v1608 = vsel %vm281, %v1605, 0.0
  %1609 = vadd.xlane.f32.xlu0 %v1608
  %v1610 = vpop.xlane.xlu0 %1609
  %v1611 = vsel %vm281, %v1607, 0.0
  %1612 = vadd.xlane.f32.xlu0 %v1611
  %v1613 = vpop.xlane.xlu0 %1612
  %v1614 = vrcp.pop %v1610
  %v1615 = vrcp.pop %v1613
  %v1616 = vmul.f32 %v1605, %v1614
  %v1617 = vmul.f32 %v1607, %v1615
  %1618 = vrot.lane.b32.xlu0 %v1494, 64
  %v1619 = vpop.permute.xlu0 %1618
  %1620 = vrot.lane.b32.xlu0 %v1497, 64
  %v1621 = vpop.permute.xlu0 %1620
  %v1625 = vsel %vm281, %v1616, 0
  %v1628 = vsel %vm281, %v1617, 0
  %1630 = vmatprep.subr.mxu0 0.0
  %1631 = vmatpush1.msra.mxu0 %v1619
  %1632 = vmatprep.subr.mxu0 0.0
  %1633 = vmatpush1.msra.mxu0 %v1621
  %1634 = vmatprep.subr.mxu0 0.0
  %1635 = vmatpush1.msra.mxu0 0.0
  %1636 = vmatprep.subr.mxu0 0.0
  %1637 = vmatpush1.msra.mxu0 0.0
  %1638 = vmatprep.subr.mxu0 0.0
  %1639 = vmatpush1.msra.mxu0 0.0
  %1640 = vmatprep.subr.mxu0 0.0
  %1641 = vmatpush1.msra.mxu0 0.0
  %1642 = vmatprep.subr.mxu0 0.0
  %1643 = vmatpush1.msra.mxu0 0.0
  %1644 = vmatprep.subr.mxu0 0.0
  %1645 = vmatpush1.msra.mxu0 0.0
  %1646 = vmatprep.subr.mxu0 0.0
  %1647 = vmatpush1.msra.mxu0 0.0
  %1648 = vmatprep.subr.mxu0 0.0
  %1649 = vmatpush1.msra.mxu0 0.0
  %1650 = vmatprep.subr.mxu0 0.0
  %1651 = vmatpush1.msra.mxu0 0.0
  %1652 = vmatprep.subr.mxu0 0.0
  %1653 = vmatpush1.msra.mxu0 0.0
  %1654 = vmatprep.subr.mxu0 0.0
  %1655 = vmatpush1.msra.mxu0 0.0
  %1656 = vmatprep.subr.mxu0 0.0
  %1657 = vmatpush1.msra.mxu0 0.0
  %1658 = vmatprep.subr.mxu0 0.0
  %1659 = vmatpush1.msra.mxu0 0.0
  %1660 = vmatprep.subr.mxu0 0.0
  %1661 = vmatpush1.msra.mxu0 0.0
  %1662 = vmatprep.subr.mxu0 0.0
  %1663 = vmatpush1.msra.mxu0 0.0
  %1664 = vmatprep.subr.mxu0 0.0
  %1665 = vmatpush1.msra.mxu0 0.0
  %1666 = vmatprep.subr.mxu0 0.0
  %1667 = vmatpush1.msra.mxu0 0.0
  %1668 = vmatprep.subr.mxu0 0.0
  %1669 = vmatpush1.msra.mxu0 0.0
  %1670 = vmatprep.subr.mxu0 0.0
  %1671 = vmatpush1.msra.mxu0 0.0
  %1672 = vmatprep.subr.mxu0 0.0
  %1673 = vmatpush1.msra.mxu0 0.0
  %1674 = vmatprep.subr.mxu0 0.0
  %1675 = vmatpush1.msra.mxu0 0.0
  %1676 = vmatprep.subr.mxu0 0.0
  %1677 = vmatpush1.msra.mxu0 0.0
  %1678 = vmatprep.subr.mxu0 0.0
  %1679 = vmatpush1.msra.mxu0 0.0
  %1680 = vmatprep.subr.mxu0 0.0
  %1681 = vmatpush1.msra.mxu0 0.0
  %1682 = vmatprep.subr.mxu0 0.0
  %1683 = vmatpush1.msra.mxu0 0.0
  %1684 = vmatprep.subr.mxu0 0.0
  %1685 = vmatpush1.msra.mxu0 0.0
  %1686 = vmatprep.subr.mxu0 0.0
  %1687 = vmatpush1.msra.mxu0 0.0
  %1688 = vmatprep.subr.mxu0 0.0
  %1689 = vmatpush1.msra.mxu0 0.0
  %1690 = vmatprep.subr.mxu0 0.0
  %1691 = vmatpush1.msra.mxu0 0.0
  %1692 = vmatprep.subr.mxu0 0.0
  %1693 = vmatpush1.msra.mxu0 0.0
  %1694 = vmatprep.mubr.f32.mxu0 0.0
  %1695 = vmatmul.mubr.f32.gmra.mrb[0].mxu0 %v1625
  %v1696 = vpop.f32.mrb[0].mxu0
  %v1697 = vadd.f32 0.0, %v1696
  %v1698 = vpop.f32.mrb[0].mxu0
  %1699 = vmatprep.mubr.f32.mxu0 0.0
  %1700 = vmatmul.mubr.f32.gmra.mrb[0].mxu0 %v1628
  %v1701 = vpop.f32.mrb[0].mxu0
  %v1702 = vadd.f32 0.0, %v1701
  %v1703 = vpop.f32.mrb[0].mxu0
  %1704 = vdwg.mxu0
  %v1705 = vpack.c.bf16 %v1702, %v1697
  %v1706 = vpack.c.bf16 %v1501, %v1501
  %1707 = vrot.lane.b32.xlu0 %v1494, 120
  %v1708 = vpop.permute.xlu0 %1707
  %1709 = vrot.lane.b32.xlu0 %v1497, 120
  %v1710 = vpop.permute.xlu0 %1709
  %1711 = vrot.lane.b32.xlu0 %v1494, 88
  %v1712 = vpop.permute.xlu0 %1711
  %1713 = vrot.lane.b32.xlu0 %v1497, 88
  %v1714 = vpop.permute.xlu0 %1713
  %v1715 = vsel %vm195, %v1708, 0
  %v1717 = vsel %vm195, %v1710, 0
  %v1719 = vsel %vm195, %v1712, 0
  %v1721 = vsel %vm195, %v1714, 0
  %1723 = vmatprep.subr.mxu0 0.0
  %1724 = vmatpush1.xpose.msra.mxu0 %v1719
  %1725 = vmatprep.subr.mxu0 0.0
  %1726 = vmatpush1.xpose.msra.mxu0 %v1721
  %1727 = vmatprep.subr.mxu0 0.0
  %1728 = vmatpush1.xpose.msra.mxu0 0.0
  %1729 = vmatprep.subr.mxu0 0.0
  %1730 = vmatpush1.xpose.msra.mxu0 0.0
  %1731 = vmatprep.subr.mxu0 0.0
  %1732 = vmatpush1.xpose.msra.mxu0 0.0
  %1733 = vmatprep.subr.mxu0 0.0
  %1734 = vmatpush1.xpose.msra.mxu0 0.0
  %1735 = vmatprep.subr.mxu0 0.0
  %1736 = vmatpush1.xpose.msra.mxu0 0.0
  %1737 = vmatprep.subr.mxu0 0.0
  %1738 = vmatpush1.xpose.msra.mxu0 0.0
  %1739 = vmatprep.subr.mxu0 0.0
  %1740 = vmatpush1.xpose.msra.mxu0 0.0
  %1741 = vmatprep.subr.mxu0 0.0
  %1742 = vmatpush1.xpose.msra.mxu0 0.0
  %1743 = vmatprep.subr.mxu0 0.0
  %1744 = vmatpush1.xpose.msra.mxu0 0.0
  %1745 = vmatprep.subr.mxu0 0.0
  %1746 = vmatpush1.xpose.msra.mxu0 0.0
  %1747 = vmatprep.subr.mxu0 0.0
  %1748 = vmatpush1.xpose.msra.mxu0 0.0
  %1749 = vmatprep.subr.mxu0 0.0
  %1750 = vmatpush1.xpose.msra.mxu0 0.0
  %1751 = vmatprep.subr.mxu0 0.0
  %1752 = vmatpush1.xpose.msra.mxu0 0.0
  %1753 = vmatprep.subr.mxu0 0.0
  %1754 = vmatpush1.xpose.msra.mxu0 0.0
  %1755 = vmatprep.subr.mxu0 0.0
  %1756 = vmatpush1.xpose.msra.mxu0 0.0
  %1757 = vmatprep.subr.mxu0 0.0
  %1758 = vmatpush1.xpose.msra.mxu0 0.0
  %1759 = vmatprep.subr.mxu0 0.0
  %1760 = vmatpush1.xpose.msra.mxu0 0.0
  %1761 = vmatprep.subr.mxu0 0.0
  %1762 = vmatpush1.xpose.msra.mxu0 0.0
  %1763 = vmatprep.subr.mxu0 0.0
  %1764 = vmatpush1.xpose.msra.mxu0 0.0
  %1765 = vmatprep.subr.mxu0 0.0
  %1766 = vmatpush1.xpose.msra.mxu0 0.0
  %1767 = vmatprep.subr.mxu0 0.0
  %1768 = vmatpush1.xpose.msra.mxu0 0.0
  %1769 = vmatprep.subr.mxu0 0.0
  %1770 = vmatpush1.xpose.msra.mxu0 0.0
  %1771 = vmatprep.subr.mxu0 0.0
  %1772 = vmatpush1.xpose.msra.mxu0 0.0
  %1773 = vmatprep.subr.mxu0 0.0
  %1774 = vmatpush1.xpose.msra.mxu0 0.0
  %1775 = vmatprep.subr.mxu0 0.0
  %1776 = vmatpush1.xpose.msra.mxu0 0.0
  %1777 = vmatprep.subr.mxu0 0.0
  %1778 = vmatpush1.xpose.msra.mxu0 0.0
  %1779 = vmatprep.subr.mxu0 0.0
  %1780 = vmatpush1.xpose.msra.mxu0 0.0
  %1781 = vmatprep.subr.mxu0 0.0
  %1782 = vmatpush1.xpose.msra.mxu0 0.0
  %1783 = vmatprep.subr.mxu0 0.0
  %1784 = vmatpush1.xpose.msra.mxu0 0.0
  %1785 = vmatprep.subr.mxu0 0.0
  %1786 = vmatpush1.xpose.msra.mxu0 0.0
  %1787 = vmatprep.mubr.f32.mxu0 0.0
  %1788 = vmatmul.mubr.f32.gmra.mrb[0].mxu0 %v1715
  %v1789 = vpop.f32.mrb[0].mxu0
  %v1790 = vadd.f32 0.0, %v1789
  %v1791 = vpop.f32.mrb[0].mxu0
  %1792 = vmatprep.mubr.f32.mxu0 0.0
  %1793 = vmatmul.mubr.f32.gmra.mrb[0].mxu0 %v1717
  %v1794 = vpop.f32.mrb[0].mxu0
  %v1795 = vadd.f32 0.0, %v1794
  %v1796 = vpop.f32.mrb[0].mxu0
  %1797 = vdwg.mxu0
  %v1798 = vmul.f32 %v1790, 0.35355338
  %v1799 = vmul.f32 %v1795, 0.35355338
  %v1800 = vsel %vm281, %v1798, -inf
  %1801 = vmax.xlane.f32.xlu0 %v1800
  %v1802 = vpop.xlane.xlu0 %1801
  %v1803 = vsel %vm281, %v1799, -inf
  %1804 = vmax.xlane.f32.xlu0 %v1803
  %v1805 = vpop.xlane.xlu0 %1804
  %v1806 = vsub.f32 %v1798, %v1802
  %v1807 = vsub.f32 %v1799, %v1805
  %v1808 = vmul.f32 %v1806, 1.442695
  %v1809 = vpow.pop %v1808
  %v1810 = vmul.f32 %v1807, 1.442695
  %v1811 = vpow.pop %v1810
  %v1812 = vsel %vm281, %v1809, 0.0
  %1813 = vadd.xlane.f32.xlu0 %v1812
  %v1814 = vpop.xlane.xlu0 %1813
  %v1815 = vsel %vm281, %v1811, 0.0
  %1816 = vadd.xlane.f32.xlu0 %v1815
  %v1817 = vpop.xlane.xlu0 %1816
  %v1818 = vrcp.pop %v1814
  %v1819 = vrcp.pop %v1817
  %v1820 = vmul.f32 %v1809, %v1818
  %v1821 = vmul.f32 %v1811, %v1819
  %1822 = vrot.lane.b32.xlu0 %v1494, 56
  %v1823 = vpop.permute.xlu0 %1822
  %1824 = vrot.lane.b32.xlu0 %v1497, 56
  %v1825 = vpop.permute.xlu0 %1824
  %v1829 = vsel %vm281, %v1820, 0
  %v1832 = vsel %vm281, %v1821, 0
  %1834 = vmatprep.subr.mxu0 0.0
  %1835 = vmatpush1.msra.mxu0 %v1823
  %1836 = vmatprep.subr.mxu0 0.0
  %1837 = vmatpush1.msra.mxu0 %v1825
  %1838 = vmatprep.subr.mxu0 0.0
  %1839 = vmatpush1.msra.mxu0 0.0
  %1840 = vmatprep.subr.mxu0 0.0
  %1841 = vmatpush1.msra.mxu0 0.0
  %1842 = vmatprep.subr.mxu0 0.0
  %1843 = vmatpush1.msra.mxu0 0.0
  %1844 = vmatprep.subr.mxu0 0.0
  %1845 = vmatpush1.msra.mxu0 0.0
  %1846 = vmatprep.subr.mxu0 0.0
  %1847 = vmatpush1.msra.mxu0 0.0
  %1848 = vmatprep.subr.mxu0 0.0
  %1849 = vmatpush1.msra.mxu0 0.0
  %1850 = vmatprep.subr.mxu0 0.0
  %1851 = vmatpush1.msra.mxu0 0.0
  %1852 = vmatprep.subr.mxu0 0.0
  %1853 = vmatpush1.msra.mxu0 0.0
  %1854 = vmatprep.subr.mxu0 0.0
  %1855 = vmatpush1.msra.mxu0 0.0
  %1856 = vmatprep.subr.mxu0 0.0
  %1857 = vmatpush1.msra.mxu0 0.0
  %1858 = vmatprep.subr.mxu0 0.0
  %1859 = vmatpush1.msra.mxu0 0.0
  %1860 = vmatprep.subr.mxu0 0.0
  %1861 = vmatpush1.msra.mxu0 0.0
  %1862 = vmatprep.subr.mxu0 0.0
  %1863 = vmatpush1.msra.mxu0 0.0
  %1864 = vmatprep.subr.mxu0 0.0
  %1865 = vmatpush1.msra.mxu0 0.0
  %1866 = vmatprep.subr.mxu0 0.0
  %1867 = vmatpush1.msra.mxu0 0.0
  %1868 = vmatprep.subr.mxu0 0.0
  %1869 = vmatpush1.msra.mxu0 0.0
  %1870 = vmatprep.subr.mxu0 0.0
  %1871 = vmatpush1.msra.mxu0 0.0
  %1872 = vmatprep.subr.mxu0 0.0
  %1873 = vmatpush1.msra.mxu0 0.0
  %1874 = vmatprep.subr.mxu0 0.0
  %1875 = vmatpush1.msra.mxu0 0.0
  %1876 = vmatprep.subr.mxu0 0.0
  %1877 = vmatpush1.msra.mxu0 0.0
  %1878 = vmatprep.subr.mxu0 0.0
  %1879 = vmatpush1.msra.mxu0 0.0
  %1880 = vmatprep.subr.mxu0 0.0
  %1881 = vmatpush1.msra.mxu0 0.0
  %1882 = vmatprep.subr.mxu0 0.0
  %1883 = vmatpush1.msra.mxu0 0.0
  %1884 = vmatprep.subr.mxu0 0.0
  %1885 = vmatpush1.msra.mxu0 0.0
  %1886 = vmatprep.subr.mxu0 0.0
  %1887 = vmatpush1.msra.mxu0 0.0
  %1888 = vmatprep.subr.mxu0 0.0
  %1889 = vmatpush1.msra.mxu0 0.0
  %1890 = vmatprep.subr.mxu0 0.0
  %1891 = vmatpush1.msra.mxu0 0.0
  %1892 = vmatprep.subr.mxu0 0.0
  %1893 = vmatpush1.msra.mxu0 0.0
  %1894 = vmatprep.subr.mxu0 0.0
  %1895 = vmatpush1.msra.mxu0 0.0
  %1896 = vmatprep.subr.mxu0 0.0
  %1897 = vmatpush1.msra.mxu0 0.0
  %1898 = vmatprep.mubr.f32.mxu0 0.0
  %1899 = vmatmul.mubr.f32.gmra.mrb[0].mxu0 %v1829
  %v1900 = vpop.f32.mrb[0].mxu0
  %v1901 = vadd.f32 0.0, %v1900
  %v1902 = vpop.f32.mrb[0].mxu0
  %1903 = vmatprep.mubr.f32.mxu0 0.0
  %1904 = vmatmul.mubr.f32.gmra.mrb[0].mxu0 %v1832
  %v1905 = vpop.f32.mrb[0].mxu0
  %v1906 = vadd.f32 0.0, %v1905
  %v1907 = vpop.f32.mrb[0].mxu0
  %1908 = vdwg.mxu0
  %v1909 = vpack.c.bf16 %v1906, %v1901
  %v1910 = vpack.c.bf16 %v1502, %v1502
  %v1912 = vsel %vm195, %v1909, 0
  %v1915 = vsel %vm600, %v1910, 0
  %1917 = vmatprep.subr.bf16.mxu0 0
  %1918 = vmatpush1.bf16.msra.mxu0 %v1915
  %1919 = vmatprep.subr.bf16.mxu0 0
  %1920 = vmatpush1.bf16.msra.mxu0 0
  %1921 = vmatprep.subr.bf16.mxu0 0
  %1922 = vmatpush1.bf16.msra.mxu0 0
  %1923 = vmatprep.subr.bf16.mxu0 0
  %1924 = vmatpush1.bf16.msra.mxu0 0
  %1925 = vmatprep.subr.bf16.mxu0 0
  %1926 = vmatpush1.bf16.msra.mxu0 0
  %1927 = vmatprep.subr.bf16.mxu0 0
  %1928 = vmatpush1.bf16.msra.mxu0 0
  %1929 = vmatprep.subr.bf16.mxu0 0
  %1930 = vmatpush1.bf16.msra.mxu0 0
  %1931 = vmatprep.subr.bf16.mxu0 0
  %1932 = vmatpush1.bf16.msra.mxu0 0
  %1933 = vmatprep.subr.bf16.mxu0 0
  %1934 = vmatpush1.bf16.msra.mxu0 0
  %1935 = vmatprep.subr.bf16.mxu0 0
  %1936 = vmatpush1.bf16.msra.mxu0 0
  %1937 = vmatprep.subr.bf16.mxu0 0
  %1938 = vmatpush1.bf16.msra.mxu0 0
  %1939 = vmatprep.subr.bf16.mxu0 0
  %1940 = vmatpush1.bf16.msra.mxu0 0
  %1941 = vmatprep.subr.bf16.mxu0 0
  %1942 = vmatpush1.bf16.msra.mxu0 0
  %1943 = vmatprep.subr.bf16.mxu0 0
  %1944 = vmatpush1.bf16.msra.mxu0 0
  %1945 = vmatprep.subr.bf16.mxu0 0
  %1946 = vmatpush1.bf16.msra.mxu0 0
  %1947 = vmatprep.subr.bf16.mxu0 0
  %1948 = vmatpush1.bf16.msra.mxu0 0
  %1949 = vmatprep.mubr.bf16.mxu0 0
  %1950 = vmatmul.mubr.bf16.gmra.mrb[0].mxu0 %v1912
  %v1951 = vpop.f32.mrb[0].mxu0
  %v1952 = vadd.f32 0.0, %v1951
  %v1953 = vpop.f32.mrb[0].mxu0
  %v1954 = vpop.f32.mrb[0].mxu0
  %v1955 = vadd.f32 0.0, %v1954
  %v1956 = vpop.f32.mrb[0].mxu0
  %1957 = vdwg.mxu0
  %v1959 = vsel %vm195, %v1705, 0
  %v1962 = vsel %vm600, %v1706, 0
  %1964 = vmatprep.subr.bf16.mxu0 0
  %1965 = vmatpush1.bf16.msra.mxu0 %v1962
  %1966 = vmatprep.subr.bf16.mxu0 0
  %1967 = vmatpush1.bf16.msra.mxu0 0
  %1968 = vmatprep.subr.bf16.mxu0 0
  %1969 = vmatpush1.bf16.msra.mxu0 0
  %1970 = vmatprep.subr.bf16.mxu0 0
  %1971 = vmatpush1.bf16.msra.mxu0 0
  %1972 = vmatprep.subr.bf16.mxu0 0
  %1973 = vmatpush1.bf16.msra.mxu0 0
  %1974 = vmatprep.subr.bf16.mxu0 0
  %1975 = vmatpush1.bf16.msra.mxu0 0
  %1976 = vmatprep.subr.bf16.mxu0 0
  %1977 = vmatpush1.bf16.msra.mxu0 0
  %1978 = vmatprep.subr.bf16.mxu0 0
  %1979 = vmatpush1.bf16.msra.mxu0 0
  %1980 = vmatprep.subr.bf16.mxu0 0
  %1981 = vmatpush1.bf16.msra.mxu0 0
  %1982 = vmatprep.subr.bf16.mxu0 0
  %1983 = vmatpush1.bf16.msra.mxu0 0
  %1984 = vmatprep.subr.bf16.mxu0 0
  %1985 = vmatpush1.bf16.msra.mxu0 0
  %1986 = vmatprep.subr.bf16.mxu0 0
  %1987 = vmatpush1.bf16.msra.mxu0 0
  %1988 = vmatprep.subr.bf16.mxu0 0
  %1989 = vmatpush1.bf16.msra.mxu0 0
  %1990 = vmatprep.subr.bf16.mxu0 0
  %1991 = vmatpush1.bf16.msra.mxu0 0
  %1992 = vmatprep.subr.bf16.mxu0 0
  %1993 = vmatpush1.bf16.msra.mxu0 0
  %1994 = vmatprep.subr.bf16.mxu0 0
  %1995 = vmatpush1.bf16.msra.mxu0 0
  %1996 = vmatprep.mubr.bf16.mxu0 0
  %1997 = vmatmul.mubr.bf16.gmra.mrb[0].mxu0 %v1959
  %v1998 = vpop.f32.mrb[0].mxu0
  %v1999 = vadd.f32 %v1952, %v1998
  %v2000 = vpop.f32.mrb[0].mxu0
  %v2001 = vpop.f32.mrb[0].mxu0
  %v2002 = vadd.f32 %v1955, %v2001
  %v2003 = vpop.f32.mrb[0].mxu0
  %2004 = vdwg.mxu0
  %2005 = vrot.lane.b32.xlu0 %v1494, 112
  %v2006 = vpop.permute.xlu0 %2005
  %2007 = vrot.lane.b32.xlu0 %v1497, 112
  %v2008 = vpop.permute.xlu0 %2007
  %2009 = vrot.lane.b32.xlu0 %v1494, 80
  %v2010 = vpop.permute.xlu0 %2009
  %2011 = vrot.lane.b32.xlu0 %v1497, 80
  %v2012 = vpop.permute.xlu0 %2011
  %v2013 = vsel %vm195, %v2006, 0
  %v2015 = vsel %vm195, %v2008, 0
  %v2017 = vsel %vm195, %v2010, 0
  %v2019 = vsel %vm195, %v2012, 0
  %2021 = vmatprep.subr.mxu0 0.0
  %2022 = vmatpush1.xpose.msra.mxu0 %v2017
  %2023 = vmatprep.subr.mxu0 0.0
  %2024 = vmatpush1.xpose.msra.mxu0 %v2019
  %2025 = vmatprep.subr.mxu0 0.0
  %2026 = vmatpush1.xpose.msra.mxu0 0.0
  %2027 = vmatprep.subr.mxu0 0.0
  %2028 = vmatpush1.xpose.msra.mxu0 0.0
  %2029 = vmatprep.subr.mxu0 0.0
  %2030 = vmatpush1.xpose.msra.mxu0 0.0
  %2031 = vmatprep.subr.mxu0 0.0
  %2032 = vmatpush1.xpose.msra.mxu0 0.0
  %2033 = vmatprep.subr.mxu0 0.0
  %2034 = vmatpush1.xpose.msra.mxu0 0.0
  %2035 = vmatprep.subr.mxu0 0.0
  %2036 = vmatpush1.xpose.msra.mxu0 0.0
  %2037 = vmatprep.subr.mxu0 0.0
  %2038 = vmatpush1.xpose.msra.mxu0 0.0
  %2039 = vmatprep.subr.mxu0 0.0
  %2040 = vmatpush1.xpose.msra.mxu0 0.0
  %2041 = vmatprep.subr.mxu0 0.0
  %2042 = vmatpush1.xpose.msra.mxu0 0.0
  %2043 = vmatprep.subr.mxu0 0.0
  %2044 = vmatpush1.xpose.msra.mxu0 0.0
  %2045 = vmatprep.subr.mxu0 0.0
  %2046 = vmatpush1.xpose.msra.mxu0 0.0
  %2047 = vmatprep.subr.mxu0 0.0
  %2048 = vmatpush1.xpose.msra.mxu0 0.0
  %2049 = vmatprep.subr.mxu0 0.0
  %2050 = vmatpush1.xpose.msra.mxu0 0.0
  %2051 = vmatprep.subr.mxu0 0.0
  %2052 = vmatpush1.xpose.msra.mxu0 0.0
  %2053 = vmatprep.subr.mxu0 0.0
  %2054 = vmatpush1.xpose.msra.mxu0 0.0
  %2055 = vmatprep.subr.mxu0 0.0
  %2056 = vmatpush1.xpose.msra.mxu0 0.0
  %2057 = vmatprep.subr.mxu0 0.0
  %2058 = vmatpush1.xpose.msra.mxu0 0.0
  %2059 = vmatprep.subr.mxu0 0.0
  %2060 = vmatpush1.xpose.msra.mxu0 0.0
  %2061 = vmatprep.subr.mxu0 0.0
  %2062 = vmatpush1.xpose.msra.mxu0 0.0
  %2063 = vmatprep.subr.mxu0 0.0
  %2064 = vmatpush1.xpose.msra.mxu0 0.0
  %2065 = vmatprep.subr.mxu0 0.0
  %2066 = vmatpush1.xpose.msra.mxu0 0.0
  %2067 = vmatprep.subr.mxu0 0.0
  %2068 = vmatpush1.xpose.msra.mxu0 0.0
  %2069 = vmatprep.subr.mxu0 0.0
  %2070 = vmatpush1.xpose.msra.mxu0 0.0
  %2071 = vmatprep.subr.mxu0 0.0
  %2072 = vmatpush1.xpose.msra.mxu0 0.0
  %2073 = vmatprep.subr.mxu0 0.0
  %2074 = vmatpush1.xpose.msra.mxu0 0.0
  %2075 = vmatprep.subr.mxu0 0.0
  %2076 = vmatpush1.xpose.msra.mxu0 0.0
  %2077 = vmatprep.subr.mxu0 0.0
  %2078 = vmatpush1.xpose.msra.mxu0 0.0
  %2079 = vmatprep.subr.mxu0 0.0
  %2080 = vmatpush1.xpose.msra.mxu0 0.0
  %2081 = vmatprep.subr.mxu0 0.0
  %2082 = vmatpush1.xpose.msra.mxu0 0.0
  %2083 = vmatprep.subr.mxu0 0.0
  %2084 = vmatpush1.xpose.msra.mxu0 0.0
  %2085 = vmatprep.mubr.f32.mxu0 0.0
  %2086 = vmatmul.mubr.f32.gmra.mrb[0].mxu0 %v2013
  %v2087 = vpop.f32.mrb[0].mxu0
  %v2088 = vadd.f32 0.0, %v2087
  %v2089 = vpop.f32.mrb[0].mxu0
  %2090 = vmatprep.mubr.f32.mxu0 0.0
  %2091 = vmatmul.mubr.f32.gmra.mrb[0].mxu0 %v2015
  %v2092 = vpop.f32.mrb[0].mxu0
  %v2093 = vadd.f32 0.0, %v2092
  %v2094 = vpop.f32.mrb[0].mxu0
  %2095 = vdwg.mxu0
  %v2096 = vmul.f32 %v2088, 0.35355338
  %v2097 = vmul.f32 %v2093, 0.35355338
  %v2098 = vsel %vm281, %v2096, -inf
  %2099 = vmax.xlane.f32.xlu0 %v2098
  %v2100 = vpop.xlane.xlu0 %2099
  %v2101 = vsel %vm281, %v2097, -inf
  %2102 = vmax.xlane.f32.xlu0 %v2101
  %v2103 = vpop.xlane.xlu0 %2102
  %v2104 = vsub.f32 %v2096, %v2100
  %v2105 = vsub.f32 %v2097, %v2103
  %v2106 = vmul.f32 %v2104, 1.442695
  %v2107 = vpow.pop %v2106
  %v2108 = vmul.f32 %v2105, 1.442695
  %v2109 = vpow.pop %v2108
  %v2110 = vsel %vm281, %v2107, 0.0
  %2111 = vadd.xlane.f32.xlu0 %v2110
  %v2112 = vpop.xlane.xlu0 %2111
  %v2113 = vsel %vm281, %v2109, 0.0
  %2114 = vadd.xlane.f32.xlu0 %v2113
  %v2115 = vpop.xlane.xlu0 %2114
  %v2116 = vrcp.pop %v2112
  %v2117 = vrcp.pop %v2115
  %v2118 = vmul.f32 %v2107, %v2116
  %v2119 = vmul.f32 %v2109, %v2117
  %2120 = vrot.lane.b32.xlu0 %v1494, 48
  %v2121 = vpop.permute.xlu0 %2120
  %2122 = vrot.lane.b32.xlu0 %v1497, 48
  %v2123 = vpop.permute.xlu0 %2122
  %v2127 = vsel %vm281, %v2118, 0
  %v2130 = vsel %vm281, %v2119, 0
  %2132 = vmatprep.subr.mxu0 0.0
  %2133 = vmatpush1.msra.mxu0 %v2121
  %2134 = vmatprep.subr.mxu0 0.0
  %2135 = vmatpush1.msra.mxu0 %v2123
  %2136 = vmatprep.subr.mxu0 0.0
  %2137 = vmatpush1.msra.mxu0 0.0
  %2138 = vmatprep.subr.mxu0 0.0
  %2139 = vmatpush1.msra.mxu0 0.0
  %2140 = vmatprep.subr.mxu0 0.0
  %2141 = vmatpush1.msra.mxu0 0.0
  %2142 = vmatprep.subr.mxu0 0.0
  %2143 = vmatpush1.msra.mxu0 0.0
  %2144 = vmatprep.subr.mxu0 0.0
  %2145 = vmatpush1.msra.mxu0 0.0
  %2146 = vmatprep.subr.mxu0 0.0
  %2147 = vmatpush1.msra.mxu0 0.0
  %2148 = vmatprep.subr.mxu0 0.0
  %2149 = vmatpush1.msra.mxu0 0.0
  %2150 = vmatprep.subr.mxu0 0.0
  %2151 = vmatpush1.msra.mxu0 0.0
  %2152 = vmatprep.subr.mxu0 0.0
  %2153 = vmatpush1.msra.mxu0 0.0
  %2154 = vmatprep.subr.mxu0 0.0
  %2155 = vmatpush1.msra.mxu0 0.0
  %2156 = vmatprep.subr.mxu0 0.0
  %2157 = vmatpush1.msra.mxu0 0.0
  %2158 = vmatprep.subr.mxu0 0.0
  %2159 = vmatpush1.msra.mxu0 0.0
  %2160 = vmatprep.subr.mxu0 0.0
  %2161 = vmatpush1.msra.mxu0 0.0
  %2162 = vmatprep.subr.mxu0 0.0
  %2163 = vmatpush1.msra.mxu0 0.0
  %2164 = vmatprep.subr.mxu0 0.0
  %2165 = vmatpush1.msra.mxu0 0.0
  %2166 = vmatprep.subr.mxu0 0.0
  %2167 = vmatpush1.msra.mxu0 0.0
  %2168 = vmatprep.subr.mxu0 0.0
  %2169 = vmatpush1.msra.mxu0 0.0
  %2170 = vmatprep.subr.mxu0 0.0
  %2171 = vmatpush1.msra.mxu0 0.0
  %2172 = vmatprep.subr.mxu0 0.0
  %2173 = vmatpush1.msra.mxu0 0.0
  %2174 = vmatprep.subr.mxu0 0.0
  %2175 = vmatpush1.msra.mxu0 0.0
  %2176 = vmatprep.subr.mxu0 0.0
  %2177 = vmatpush1.msra.mxu0 0.0
  %2178 = vmatprep.subr.mxu0 0.0
  %2179 = vmatpush1.msra.mxu0 0.0
  %2180 = vmatprep.subr.mxu0 0.0
  %2181 = vmatpush1.msra.mxu0 0.0
  %2182 = vmatprep.subr.mxu0 0.0
  %2183 = vmatpush1.msra.mxu0 0.0
  %2184 = vmatprep.subr.mxu0 0.0
  %2185 = vmatpush1.msra.mxu0 0.0
  %2186 = vmatprep.subr.mxu0 0.0
  %2187 = vmatpush1.msra.mxu0 0.0
  %2188 = vmatprep.subr.mxu0 0.0
  %2189 = vmatpush1.msra.mxu0 0.0
  %2190 = vmatprep.subr.mxu0 0.0
  %2191 = vmatpush1.msra.mxu0 0.0
  %2192 = vmatprep.subr.mxu0 0.0
  %2193 = vmatpush1.msra.mxu0 0.0
  %2194 = vmatprep.subr.mxu0 0.0
  %2195 = vmatpush1.msra.mxu0 0.0
  %2196 = vmatprep.mubr.f32.mxu0 0.0
  %2197 = vmatmul.mubr.f32.gmra.mrb[0].mxu0 %v2127
  %v2198 = vpop.f32.mrb[0].mxu0
  %v2199 = vadd.f32 0.0, %v2198
  %v2200 = vpop.f32.mrb[0].mxu0
  %2201 = vmatprep.mubr.f32.mxu0 0.0
  %2202 = vmatmul.mubr.f32.gmra.mrb[0].mxu0 %v2130
  %v2203 = vpop.f32.mrb[0].mxu0
  %v2204 = vadd.f32 0.0, %v2203
  %v2205 = vpop.f32.mrb[0].mxu0
  %2206 = vdwg.mxu0
  %v2207 = vpack.c.bf16 %v2204, %v2199
  %v2208 = vpack.c.bf16 %v1503, %v1503
  %v2210 = vsel %vm195, %v2207, 0
  %v2213 = vsel %vm600, %v2208, 0
  %2215 = vmatprep.subr.bf16.mxu0 0
  %2216 = vmatpush1.bf16.msra.mxu0 %v2213
  %2217 = vmatprep.subr.bf16.mxu0 0
  %2218 = vmatpush1.bf16.msra.mxu0 0
  %2219 = vmatprep.subr.bf16.mxu0 0
  %2220 = vmatpush1.bf16.msra.mxu0 0
  %2221 = vmatprep.subr.bf16.mxu0 0
  %2222 = vmatpush1.bf16.msra.mxu0 0
  %2223 = vmatprep.subr.bf16.mxu0 0
  %2224 = vmatpush1.bf16.msra.mxu0 0
  %2225 = vmatprep.subr.bf16.mxu0 0
  %2226 = vmatpush1.bf16.msra.mxu0 0
  %2227 = vmatprep.subr.bf16.mxu0 0
  %2228 = vmatpush1.bf16.msra.mxu0 0
  %2229 = vmatprep.subr.bf16.mxu0 0
  %2230 = vmatpush1.bf16.msra.mxu0 0
  %2231 = vmatprep.subr.bf16.mxu0 0
  %2232 = vmatpush1.bf16.msra.mxu0 0
  %2233 = vmatprep.subr.bf16.mxu0 0
  %2234 = vmatpush1.bf16.msra.mxu0 0
  %2235 = vmatprep.subr.bf16.mxu0 0
  %2236 = vmatpush1.bf16.msra.mxu0 0
  %2237 = vmatprep.subr.bf16.mxu0 0
  %2238 = vmatpush1.bf16.msra.mxu0 0
  %2239 = vmatprep.subr.bf16.mxu0 0
  %2240 = vmatpush1.bf16.msra.mxu0 0
  %2241 = vmatprep.subr.bf16.mxu0 0
  %2242 = vmatpush1.bf16.msra.mxu0 0
  %2243 = vmatprep.subr.bf16.mxu0 0
  %2244 = vmatpush1.bf16.msra.mxu0 0
  %2245 = vmatprep.subr.bf16.mxu0 0
  %2246 = vmatpush1.bf16.msra.mxu0 0
  %2247 = vmatprep.mubr.bf16.mxu0 0
  %2248 = vmatmul.mubr.bf16.gmra.mrb[0].mxu0 %v2210
  %v2249 = vpop.f32.mrb[0].mxu0
  %v2250 = vadd.f32 0.0, %v2249
  %v2251 = vpop.f32.mrb[0].mxu0
  %v2252 = vpop.f32.mrb[0].mxu0
  %v2253 = vadd.f32 0.0, %v2252
  %v2254 = vpop.f32.mrb[0].mxu0
  %2255 = vdwg.mxu0
  %v2256 = vadd.f32 %v1999, %v2250
  %v2257 = vadd.f32 %v2002, %v2253
  %2258 = vrot.lane.b32.xlu0 %v1494, 104
  %v2259 = vpop.permute.xlu0 %2258
  %2260 = vrot.lane.b32.xlu0 %v1497, 104
  %v2261 = vpop.permute.xlu0 %2260
  %2262 = vrot.lane.b32.xlu0 %v1494, 72
  %v2263 = vpop.permute.xlu0 %2262
  %2264 = vrot.lane.b32.xlu0 %v1497, 72
  %v2265 = vpop.permute.xlu0 %2264
  %v2266 = vsel %vm195, %v2259, 0
  %v2268 = vsel %vm195, %v2261, 0
  %v2270 = vsel %vm195, %v2263, 0
  %v2272 = vsel %vm195, %v2265, 0
  %2274 = vmatprep.subr.mxu0 0.0
  %2275 = vmatpush1.xpose.msra.mxu0 %v2270
  %2276 = vmatprep.subr.mxu0 0.0
  %2277 = vmatpush1.xpose.msra.mxu0 %v2272
  %2278 = vmatprep.subr.mxu0 0.0
  %2279 = vmatpush1.xpose.msra.mxu0 0.0
  %2280 = vmatprep.subr.mxu0 0.0
  %2281 = vmatpush1.xpose.msra.mxu0 0.0
  %2282 = vmatprep.subr.mxu0 0.0
  %2283 = vmatpush1.xpose.msra.mxu0 0.0
  %2284 = vmatprep.subr.mxu0 0.0
  %2285 = vmatpush1.xpose.msra.mxu0 0.0
  %2286 = vmatprep.subr.mxu0 0.0
  %2287 = vmatpush1.xpose.msra.mxu0 0.0
  %2288 = vmatprep.subr.mxu0 0.0
  %2289 = vmatpush1.xpose.msra.mxu0 0.0
  %2290 = vmatprep.subr.mxu0 0.0
  %2291 = vmatpush1.xpose.msra.mxu0 0.0
  %2292 = vmatprep.subr.mxu0 0.0
  %2293 = vmatpush1.xpose.msra.mxu0 0.0
  %2294 = vmatprep.subr.mxu0 0.0
  %2295 = vmatpush1.xpose.msra.mxu0 0.0
  %2296 = vmatprep.subr.mxu0 0.0
  %2297 = vmatpush1.xpose.msra.mxu0 0.0
  %2298 = vmatprep.subr.mxu0 0.0
  %2299 = vmatpush1.xpose.msra.mxu0 0.0
  %2300 = vmatprep.subr.mxu0 0.0
  %2301 = vmatpush1.xpose.msra.mxu0 0.0
  %2302 = vmatprep.subr.mxu0 0.0
  %2303 = vmatpush1.xpose.msra.mxu0 0.0
  %2304 = vmatprep.subr.mxu0 0.0
  %2305 = vmatpush1.xpose.msra.mxu0 0.0
  %2306 = vmatprep.subr.mxu0 0.0
  %2307 = vmatpush1.xpose.msra.mxu0 0.0
  %2308 = vmatprep.subr.mxu0 0.0
  %2309 = vmatpush1.xpose.msra.mxu0 0.0
  %2310 = vmatprep.subr.mxu0 0.0
  %2311 = vmatpush1.xpose.msra.mxu0 0.0
  %2312 = vmatprep.subr.mxu0 0.0
  %2313 = vmatpush1.xpose.msra.mxu0 0.0
  %2314 = vmatprep.subr.mxu0 0.0
  %2315 = vmatpush1.xpose.msra.mxu0 0.0
  %2316 = vmatprep.subr.mxu0 0.0
  %2317 = vmatpush1.xpose.msra.mxu0 0.0
  %2318 = vmatprep.subr.mxu0 0.0
  %2319 = vmatpush1.xpose.msra.mxu0 0.0
  %2320 = vmatprep.subr.mxu0 0.0
  %2321 = vmatpush1.xpose.msra.mxu0 0.0
  %2322 = vmatprep.subr.mxu0 0.0
  %2323 = vmatpush1.xpose.msra.mxu0 0.0
  %2324 = vmatprep.subr.mxu0 0.0
  %2325 = vmatpush1.xpose.msra.mxu0 0.0
  %2326 = vmatprep.subr.mxu0 0.0
  %2327 = vmatpush1.xpose.msra.mxu0 0.0
  %2328 = vmatprep.subr.mxu0 0.0
  %2329 = vmatpush1.xpose.msra.mxu0 0.0
  %2330 = vmatprep.subr.mxu0 0.0
  %2331 = vmatpush1.xpose.msra.mxu0 0.0
  %2332 = vmatprep.subr.mxu0 0.0
  %2333 = vmatpush1.xpose.msra.mxu0 0.0
  %2334 = vmatprep.subr.mxu0 0.0
  %2335 = vmatpush1.xpose.msra.mxu0 0.0
  %2336 = vmatprep.subr.mxu0 0.0
  %2337 = vmatpush1.xpose.msra.mxu0 0.0
  %2338 = vmatprep.mubr.f32.mxu0 0.0
  %2339 = vmatmul.mubr.f32.gmra.mrb[0].mxu0 %v2266
  %v2340 = vpop.f32.mrb[0].mxu0
  %v2341 = vadd.f32 0.0, %v2340
  %v2342 = vpop.f32.mrb[0].mxu0
  %2343 = vmatprep.mubr.f32.mxu0 0.0
  %2344 = vmatmul.mubr.f32.gmra.mrb[0].mxu0 %v2268
  %v2345 = vpop.f32.mrb[0].mxu0
  %v2346 = vadd.f32 0.0, %v2345
  %v2347 = vpop.f32.mrb[0].mxu0
  %2348 = vdwg.mxu0
  %v2349 = vmul.f32 %v2341, 0.35355338
  %v2350 = vmul.f32 %v2346, 0.35355338
  %v2351 = vsel %vm281, %v2349, -inf
  %2352 = vmax.xlane.f32.xlu0 %v2351
  %v2353 = vpop.xlane.xlu0 %2352
  %v2354 = vsel %vm281, %v2350, -inf
  %2355 = vmax.xlane.f32.xlu0 %v2354
  %v2356 = vpop.xlane.xlu0 %2355
  %v2357 = vsub.f32 %v2349, %v2353
  %v2358 = vsub.f32 %v2350, %v2356
  %v2359 = vmul.f32 %v2357, 1.442695
  %v2360 = vpow.pop %v2359
  %v2361 = vmul.f32 %v2358, 1.442695
  %v2362 = vpow.pop %v2361
  %v2363 = vsel %vm281, %v2360, 0.0
  %2364 = vadd.xlane.f32.xlu0 %v2363
  %v2365 = vpop.xlane.xlu0 %2364
  %v2366 = vsel %vm281, %v2362, 0.0
  %2367 = vadd.xlane.f32.xlu0 %v2366
  %v2368 = vpop.xlane.xlu0 %2367
  %v2369 = vrcp.pop %v2365
  %v2370 = vrcp.pop %v2368
  %v2371 = vmul.f32 %v2360, %v2369
  %v2372 = vmul.f32 %v2362, %v2370
  %2373 = vrot.lane.b32.xlu0 %v1494, 40
  %v2374 = vpop.permute.xlu0 %2373
  %2375 = vrot.lane.b32.xlu0 %v1497, 40
  %v2376 = vpop.permute.xlu0 %2375
  %v2380 = vsel %vm281, %v2371, 0
  %v2383 = vsel %vm281, %v2372, 0
  %2385 = vmatprep.subr.mxu0 0.0
  %2386 = vmatpush1.msra.mxu0 %v2374
  %2387 = vmatprep.subr.mxu0 0.0
  %2388 = vmatpush1.msra.mxu0 %v2376
  %2389 = vmatprep.subr.mxu0 0.0
  %2390 = vmatpush1.msra.mxu0 0.0
  %2391 = vmatprep.subr.mxu0 0.0
  %2392 = vmatpush1.msra.mxu0 0.0
  %2393 = vmatprep.subr.mxu0 0.0
  %2394 = vmatpush1.msra.mxu0 0.0
  %2395 = vmatprep.subr.mxu0 0.0
  %2396 = vmatpush1.msra.mxu0 0.0
  %2397 = vmatprep.subr.mxu0 0.0
  %2398 = vmatpush1.msra.mxu0 0.0
  %2399 = vmatprep.subr.mxu0 0.0
  %2400 = vmatpush1.msra.mxu0 0.0
  %2401 = vmatprep.subr.mxu0 0.0
  %2402 = vmatpush1.msra.mxu0 0.0
  %2403 = vmatprep.subr.mxu0 0.0
  %2404 = vmatpush1.msra.mxu0 0.0
  %2405 = vmatprep.subr.mxu0 0.0
  %2406 = vmatpush1.msra.mxu0 0.0
  %2407 = vmatprep.subr.mxu0 0.0
  %2408 = vmatpush1.msra.mxu0 0.0
  %2409 = vmatprep.subr.mxu0 0.0
  %2410 = vmatpush1.msra.mxu0 0.0
  %2411 = vmatprep.subr.mxu0 0.0
  %2412 = vmatpush1.msra.mxu0 0.0
  %2413 = vmatprep.subr.mxu0 0.0
  %2414 = vmatpush1.msra.mxu0 0.0
  %2415 = vmatprep.subr.mxu0 0.0
  %2416 = vmatpush1.msra.mxu0 0.0
  %2417 = vmatprep.subr.mxu0 0.0
  %2418 = vmatpush1.msra.mxu0 0.0
  %2419 = vmatprep.subr.mxu0 0.0
  %2420 = vmatpush1.msra.mxu0 0.0
  %2421 = vmatprep.subr.mxu0 0.0
  %2422 = vmatpush1.msra.mxu0 0.0
  %2423 = vmatprep.subr.mxu0 0.0
  %2424 = vmatpush1.msra.mxu0 0.0
  %2425 = vmatprep.subr.mxu0 0.0
  %2426 = vmatpush1.msra.mxu0 0.0
  %2427 = vmatprep.subr.mxu0 0.0
  %2428 = vmatpush1.msra.mxu0 0.0
  %2429 = vmatprep.subr.mxu0 0.0
  %2430 = vmatpush1.msra.mxu0 0.0
  %2431 = vmatprep.subr.mxu0 0.0
  %2432 = vmatpush1.msra.mxu0 0.0
  %2433 = vmatprep.subr.mxu0 0.0
  %2434 = vmatpush1.msra.mxu0 0.0
  %2435 = vmatprep.subr.mxu0 0.0
  %2436 = vmatpush1.msra.mxu0 0.0
  %2437 = vmatprep.subr.mxu0 0.0
  %2438 = vmatpush1.msra.mxu0 0.0
  %2439 = vmatprep.subr.mxu0 0.0
  %2440 = vmatpush1.msra.mxu0 0.0
  %2441 = vmatprep.subr.mxu0 0.0
  %2442 = vmatpush1.msra.mxu0 0.0
  %2443 = vmatprep.subr.mxu0 0.0
  %2444 = vmatpush1.msra.mxu0 0.0
  %2445 = vmatprep.subr.mxu0 0.0
  %2446 = vmatpush1.msra.mxu0 0.0
  %2447 = vmatprep.subr.mxu0 0.0
  %2448 = vmatpush1.msra.mxu0 0.0
  %2449 = vmatprep.mubr.f32.mxu0 0.0
  %2450 = vmatmul.mubr.f32.gmra.mrb[0].mxu0 %v2380
  %v2451 = vpop.f32.mrb[0].mxu0
  %v2452 = vadd.f32 0.0, %v2451
  %v2453 = vpop.f32.mrb[0].mxu0
  %2454 = vmatprep.mubr.f32.mxu0 0.0
  %2455 = vmatmul.mubr.f32.gmra.mrb[0].mxu0 %v2383
  %v2456 = vpop.f32.mrb[0].mxu0
  %v2457 = vadd.f32 0.0, %v2456
  %v2458 = vpop.f32.mrb[0].mxu0
  %2459 = vdwg.mxu0
  %v2460 = vpack.c.bf16 %v2457, %v2452
  %v2461 = vpack.c.bf16 %v1504, %v1504
  %v2463 = vsel %vm195, %v2460, 0
  %v2466 = vsel %vm600, %v2461, 0
  %2468 = vmatprep.subr.bf16.mxu0 0
  %2469 = vmatpush1.bf16.msra.mxu0 %v2466
  %2470 = vmatprep.subr.bf16.mxu0 0
  %2471 = vmatpush1.bf16.msra.mxu0 0
  %2472 = vmatprep.subr.bf16.mxu0 0
  %2473 = vmatpush1.bf16.msra.mxu0 0
  %2474 = vmatprep.subr.bf16.mxu0 0
  %2475 = vmatpush1.bf16.msra.mxu0 0
  %2476 = vmatprep.subr.bf16.mxu0 0
  %2477 = vmatpush1.bf16.msra.mxu0 0
  %2478 = vmatprep.subr.bf16.mxu0 0
  %2479 = vmatpush1.bf16.msra.mxu0 0
  %2480 = vmatprep.subr.bf16.mxu0 0
  %2481 = vmatpush1.bf16.msra.mxu0 0
  %2482 = vmatprep.subr.bf16.mxu0 0
  %2483 = vmatpush1.bf16.msra.mxu0 0
  %2484 = vmatprep.subr.bf16.mxu0 0
  %2485 = vmatpush1.bf16.msra.mxu0 0
  %2486 = vmatprep.subr.bf16.mxu0 0
  %2487 = vmatpush1.bf16.msra.mxu0 0
  %2488 = vmatprep.subr.bf16.mxu0 0
  %2489 = vmatpush1.bf16.msra.mxu0 0
  %2490 = vmatprep.subr.bf16.mxu0 0
  %2491 = vmatpush1.bf16.msra.mxu0 0
  %2492 = vmatprep.subr.bf16.mxu0 0
  %2493 = vmatpush1.bf16.msra.mxu0 0
  %2494 = vmatprep.subr.bf16.mxu0 0
  %2495 = vmatpush1.bf16.msra.mxu0 0
  %2496 = vmatprep.subr.bf16.mxu0 0
  %2497 = vmatpush1.bf16.msra.mxu0 0
  %2498 = vmatprep.subr.bf16.mxu0 0
  %2499 = vmatpush1.bf16.msra.mxu0 0
  %2500 = vmatprep.mubr.bf16.mxu0 0
  %2501 = vmatmul.mubr.bf16.gmra.mrb[0].mxu0 %v2463
  %v2502 = vpop.f32.mrb[0].mxu0
  %v2503 = vadd.f32 0.0, %v2502
  %v2504 = vpop.f32.mrb[0].mxu0
  %v2505 = vpop.f32.mrb[0].mxu0
  %v2506 = vadd.f32 0.0, %v2505
  %v2507 = vpop.f32.mrb[0].mxu0
  %2508 = vdwg.mxu0
  %v2509 = vadd.f32 %v2256, %v2503
  %v2510 = vadd.f32 %v2257, %v2506
  %v2511 = vadd.f32 %v1392, %v2509
  %v2512 = vadd.f32 %v1393, %v2510
  %s2513 = scalar_lea.vmem %s10, 1
  %v2514 = vld [vmem:[%s2513] sm:$0x1]
  %v2516 = vlaneseq
  %v2517 = vshrl.u32 %v2516, 7
  %v2518 = vsub.s32 0, %v2517
  %v2519 = vrot.slane %v2514, %v2518
  %v2521 = vadd.f32 %v2511, %v2519
  %v2522 = vadd.f32 %v2512, %v2519
  %s2523 = scalar_lea.vmem %s11, 1
  %v2524 = vld [vmem:[%s2523] sm:$0x1]
  %s2525 = scalar_lea.vmem %s12, 1
  %v2526 = vld [vmem:[%s2525] sm:$0x1]
  %v2527 = vsel %vm83, %v2521, 0.0
  %2528 = vadd.xlane.f32.xlu0 %v2527
  %v2529 = vpop.xlane.xlu0 %2528
  %v2530 = vsel %vm83, %v2522, 0.0
  %2531 = vadd.xlane.f32.xlu0 %v2530
  %v2532 = vpop.xlane.xlu0 %2531
  %v2533 = vmul.f32 %v2529, %v90
  %v2534 = vmul.f32 %v2532, %v90
  %v2535 = vsub.f32 %v2521, %v2533
  %v2536 = vsub.f32 %v2522, %v2534
  %v2537 = vmul.f32 %v2535, %v2535
  %v2538 = vmul.f32 %v2536, %v2536
  %v2539 = vsel %vm83, %v2537, 0.0
  %2540 = vadd.xlane.f32.xlu0 %v2539
  %v2541 = vpop.xlane.xlu0 %2540
  %v2542 = vsel %vm83, %v2538, 0.0
  %2543 = vadd.xlane.f32.xlu0 %v2542
  %v2544 = vpop.xlane.xlu0 %2543
  %v2545 = vmul.f32 %v2541, %v90
  %v2546 = vmul.f32 %v2544, %v90
  %v2547 = vadd.f32 %v2545, 1e-05
  %v2548 = vadd.f32 %v2546, 1e-05
  %v2549 = vrsqrt.pop %v2547
  %v2550 = vrsqrt.pop %v2548
  %v2551 = vmul.f32 %v2535, %v2549
  %v2552 = vmul.f32 %v2536, %v2550
  %v2554 = vlaneseq
  %v2555 = vshrl.u32 %v2554, 7
  %v2556 = vsub.s32 0, %v2555
  %v2557 = vrot.slane %v2524, %v2556
  %v2559 = vmul.f32 %v2551, %v2557
  %v2560 = vmul.f32 %v2552, %v2557
  %v2562 = vlaneseq
  %v2563 = vshrl.u32 %v2562, 7
  %v2564 = vsub.s32 0, %v2563
  %v2565 = vrot.slane %v2526, %v2564
  %v2567 = vadd.f32 %v2559, %v2565
  %v2568 = vadd.f32 %v2560, %v2565
  %s2569 = scalar_lea.vmem %s13, 32
  %v2570 = vld [vmem:[%s2569] sm:$0xff]
  %v2571 = vld [vmem:[%s2569 + $0x8] sm:$0xff]
  %v2572 = vld [vmem:[%s2569 + $0x10] sm:$0xff]
  %v2573 = vld [vmem:[%s2569 + $0x18] sm:$0xff]
  %v2574 = vpack.c.bf16 %v2568, %v2567
  %v2575 = vpack.c.bf16 %v2571, %v2570
  %v2576 = vpack.c.bf16 %v2573, %v2572
  %s2577 = scalar_lea.vmem %s14, 1
  %v2578 = vld [vmem:[%s2577] sm:$0x1]
  %v2580 = vlaneseq
  %v2581 = vshrl.u32 %v2580, 7
  %v2582 = vsub.s32 0, %v2581
  %v2583 = vrot.slane %v2578, %v2582
  %v2586 = vsel %vm83, %v2574, 0
  %2588 = vmatprep.subr.bf16.mxu0 0
  %2589 = vmatpush1.bf16.msra.mxu0 %v2575
  %2590 = vmatprep.subr.bf16.mxu0 0
  %2591 = vmatpush1.bf16.msra.mxu0 %v2576
  %2592 = vmatprep.subr.bf16.mxu0 0
  %2593 = vmatpush1.bf16.msra.mxu0 0
  %2594 = vmatprep.subr.bf16.mxu0 0
  %2595 = vmatpush1.bf16.msra.mxu0 0
  %2596 = vmatprep.subr.bf16.mxu0 0
  %2597 = vmatpush1.bf16.msra.mxu0 0
  %2598 = vmatprep.subr.bf16.mxu0 0
  %2599 = vmatpush1.bf16.msra.mxu0 0
  %2600 = vmatprep.subr.bf16.mxu0 0
  %2601 = vmatpush1.bf16.msra.mxu0 0
  %2602 = vmatprep.subr.bf16.mxu0 0
  %2603 = vmatpush1.bf16.msra.mxu0 0
  %2604 = vmatprep.subr.bf16.mxu0 0
  %2605 = vmatpush1.bf16.msra.mxu0 0
  %2606 = vmatprep.subr.bf16.mxu0 0
  %2607 = vmatpush1.bf16.msra.mxu0 0
  %2608 = vmatprep.subr.bf16.mxu0 0
  %2609 = vmatpush1.bf16.msra.mxu0 0
  %2610 = vmatprep.subr.bf16.mxu0 0
  %2611 = vmatpush1.bf16.msra.mxu0 0
  %2612 = vmatprep.subr.bf16.mxu0 0
  %2613 = vmatpush1.bf16.msra.mxu0 0
  %2614 = vmatprep.subr.bf16.mxu0 0
  %2615 = vmatpush1.bf16.msra.mxu0 0
  %2616 = vmatprep.subr.bf16.mxu0 0
  %2617 = vmatpush1.bf16.msra.mxu0 0
  %2618 = vmatprep.subr.bf16.mxu0 0
  %2619 = vmatpush1.bf16.msra.mxu0 0
  %2620 = vmatprep.mubr.bf16.mxu0 0
  %2621 = vmatmul.mubr.bf16.gmra.mrb[0].mxu0 %v2586
  %v2622 = vpop.f32.mrb[0].mxu0
  %v2623 = vadd.f32 %v2583, %v2622
  %v2624 = vpop.f32.mrb[0].mxu0
  %v2625 = vpop.f32.mrb[0].mxu0
  %v2626 = vadd.f32 %v2583, %v2625
  %v2627 = vpop.f32.mrb[0].mxu0
  %2628 = vdwg.mxu0
  %v2629 = vmax.f32 %v2623, 0.0
  %v2630 = vmax.f32 %v2626, 0.0
  %s2631 = scalar_lea.vmem %s15, 64
  %v2632 = vld [vmem:[%s2631] sm:$0xff]
  %v2633 = vld [vmem:[%s2631 + $0x8] sm:$0xff]
  %v2634 = vld [vmem:[%s2631 + $0x10] sm:$0xff]
  %v2635 = vld [vmem:[%s2631 + $0x18] sm:$0xff]
  %v2636 = vld [vmem:[%s2631 + $0x20] sm:$0xff]
  %v2637 = vld [vmem:[%s2631 + $0x28] sm:$0xff]
  %v2638 = vld [vmem:[%s2631 + $0x30] sm:$0xff]
  %v2639 = vld [vmem:[%s2631 + $0x38] sm:$0xff]
  %v2640 = vpack.c.bf16 %v2630, %v2629
  %v2641 = vpack.c.bf16 %v2633, %v2632
  %v2642 = vpack.c.bf16 %v2635, %v2634
  %v2643 = vpack.c.bf16 %v2637, %v2636
  %v2644 = vpack.c.bf16 %v2639, %v2638
  %v2646 = vsel %vm1326, %v2640, 0
  %2648 = vmatprep.subr.bf16.mxu0 0
  %2649 = vmatpush1.bf16.msra.mxu0 %v2641
  %2650 = vmatprep.subr.bf16.mxu0 0
  %2651 = vmatpush1.bf16.msra.mxu0 %v2642
  %2652 = vmatprep.subr.bf16.mxu0 0
  %2653 = vmatpush1.bf16.msra.mxu0 %v2643
  %2654 = vmatprep.subr.bf16.mxu0 0
  %2655 = vmatpush1.bf16.msra.mxu0 %v2644
  %2656 = vmatprep.subr.bf16.mxu0 0
  %2657 = vmatpush1.bf16.msra.mxu0 0
  %2658 = vmatprep.subr.bf16.mxu0 0
  %2659 = vmatpush1.bf16.msra.mxu0 0
  %2660 = vmatprep.subr.bf16.mxu0 0
  %2661 = vmatpush1.bf16.msra.mxu0 0
  %2662 = vmatprep.subr.bf16.mxu0 0
  %2663 = vmatpush1.bf16.msra.mxu0 0
  %2664 = vmatprep.subr.bf16.mxu0 0
  %2665 = vmatpush1.bf16.msra.mxu0 0
  %2666 = vmatprep.subr.bf16.mxu0 0
  %2667 = vmatpush1.bf16.msra.mxu0 0
  %2668 = vmatprep.subr.bf16.mxu0 0
  %2669 = vmatpush1.bf16.msra.mxu0 0
  %2670 = vmatprep.subr.bf16.mxu0 0
  %2671 = vmatpush1.bf16.msra.mxu0 0
  %2672 = vmatprep.subr.bf16.mxu0 0
  %2673 = vmatpush1.bf16.msra.mxu0 0
  %2674 = vmatprep.subr.bf16.mxu0 0
  %2675 = vmatpush1.bf16.msra.mxu0 0
  %2676 = vmatprep.subr.bf16.mxu0 0
  %2677 = vmatpush1.bf16.msra.mxu0 0
  %2678 = vmatprep.subr.bf16.mxu0 0
  %2679 = vmatpush1.bf16.msra.mxu0 0
  %2680 = vmatprep.mubr.bf16.mxu0 0
  %2681 = vmatmul.mubr.bf16.gmra.mrb[0].mxu0 %v2646
  %v2682 = vpop.f32.mrb[0].mxu0
  %v2683 = vadd.f32 0.0, %v2682
  %v2684 = vpop.f32.mrb[0].mxu0
  %v2685 = vpop.f32.mrb[0].mxu0
  %v2686 = vadd.f32 0.0, %v2685
  %v2687 = vpop.f32.mrb[0].mxu0
  %2688 = vdwg.mxu0
  %v2689 = vadd.f32 %v2521, %v2683
  %v2690 = vadd.f32 %v2522, %v2686
  %s2691 = scalar_lea.vmem %s16, 1
  %v2692 = vld [vmem:[%s2691] sm:$0x1]
  %v2694 = vlaneseq
  %v2695 = vshrl.u32 %v2694, 7
  %v2696 = vsub.s32 0, %v2695
  %v2697 = vrot.slane %v2692, %v2696
  %v2699 = vadd.f32 %v2689, %v2697
  %v2700 = vadd.f32 %v2690, %v2697
  %v2701 = vmul.f32 %v2699, %v1385
  %v2702 = vmul.f32 %v2700, %v1390
  %v2703 = vld [vmem:[%s2] sm:$0xff]
  %v2704 = vld [vmem:[%s2 + $0x8] sm:$0xff]
  %v2705 = vld [vmem:[%s17] sm:$0xff]
  %v2706 = vld [vmem:[%s17 + $0x8] sm:$0xff]
  %v2707 = vld [vmem:[%s17 + $0x10] sm:$0xff]
  %v2708 = vld [vmem:[%s17 + $0x18] sm:$0xff]
  %v2709 = vld [vmem:[%s17 + $0x20] sm:$0xff]
  %v2710 = vld [vmem:[%s17 + $0x28] sm:$0xff]
  %v2711 = vld [vmem:[%s17 + $0x30] sm:$0xff]
  %v2712 = vpack.c.bf16 %v2702, %v2701
  %v2713 = vpack.c.bf16 %v2706, %v2705
  %v2714 = vpack.c.bf16 %v2708, %v2707
  %v2715 = vpack.c.bf16 %v2704, %v2703
  %v2716 = vpack.c.bf16 %v2710, %v2709
  %v2717 = vpack.c.bf16 %v2711, %v2711
  %vm2718 = vcmask 195584
  %v2720 = vsel %vm2718, %v2715, 0
  %v2723 = vsel %vm600, %v2717, 0
  %2725 = vmatprep.subr.bf16.mxu0 0
  %2726 = vmatpush1.bf16.msra.mxu0 %v2716
  %2727 = vmatprep.subr.bf16.mxu0 0
  %2728 = vmatpush1.bf16.msra.mxu0 %v2723
  %2729 = vmatprep.subr.bf16.mxu0 0
  %2730 = vmatpush1.bf16.msra.mxu0 0
  %2731 = vmatprep.subr.bf16.mxu0 0
  %2732 = vmatpush1.bf16.msra.mxu0 0
  %2733 = vmatprep.subr.bf16.mxu0 0
  %2734 = vmatpush1.bf16.msra.mxu0 0
  %2735 = vmatprep.subr.bf16.mxu0 0
  %2736 = vmatpush1.bf16.msra.mxu0 0
  %2737 = vmatprep.subr.bf16.mxu0 0
  %2738 = vmatpush1.bf16.msra.mxu0 0
  %2739 = vmatprep.subr.bf16.mxu0 0
  %2740 = vmatpush1.bf16.msra.mxu0 0
  %2741 = vmatprep.subr.bf16.mxu0 0
  %2742 = vmatpush1.bf16.msra.mxu0 0
  %2743 = vmatprep.subr.bf16.mxu0 0
  %2744 = vmatpush1.bf16.msra.mxu0 0
  %2745 = vmatprep.subr.bf16.mxu0 0
  %2746 = vmatpush1.bf16.msra.mxu0 0
  %2747 = vmatprep.subr.bf16.mxu0 0
  %2748 = vmatpush1.bf16.msra.mxu0 0
  %2749 = vmatprep.subr.bf16.mxu0 0
  %2750 = vmatpush1.bf16.msra.mxu0 0
  %2751 = vmatprep.subr.bf16.mxu0 0
  %2752 = vmatpush1.bf16.msra.mxu0 0
  %2753 = vmatprep.subr.bf16.mxu0 0
  %2754 = vmatpush1.bf16.msra.mxu0 0
  %2755 = vmatprep.subr.bf16.mxu0 0
  %2756 = vmatpush1.bf16.msra.mxu0 0
  %2757 = vmatprep.mubr.bf16.mxu0 0
  %2758 = vmatmul.mubr.bf16.gmra.mrb[0].mxu0 %v2720
  %v2759 = vpop.f32.mrb[0].mxu0
  %v2760 = vadd.f32 0.0, %v2759
  %v2761 = vpop.f32.mrb[0].mxu0
  %v2762 = vpop.f32.mrb[0].mxu0
  %v2763 = vadd.f32 0.0, %v2762
  %v2764 = vpop.f32.mrb[0].mxu0
  %2765 = vdwg.mxu0
  %v2767 = vsel %vm83, %v2712, 0
  %2769 = vmatprep.subr.bf16.mxu0 0
  %2770 = vmatpush1.bf16.msra.mxu0 %v2713
  %2771 = vmatprep.subr.bf16.mxu0 0
  %2772 = vmatpush1.bf16.msra.mxu0 %v2714
  %2773 = vmatprep.subr.bf16.mxu0 0
  %2774 = vmatpush1.bf16.msra.mxu0 0
  %2775 = vmatprep.subr.bf16.mxu0 0
  %2776 = vmatpush1.bf16.msra.mxu0 0
  %2777 = vmatprep.subr.bf16.mxu0 0
  %2778 = vmatpush1.bf16.msra.mxu0 0
  %2779 = vmatprep.subr.bf16.mxu0 0
  %2780 = vmatpush1.bf16.msra.mxu0 0
  %2781 = vmatprep.subr.bf16.mxu0 0
  %2782 = vmatpush1.bf16.msra.mxu0 0
  %2783 = vmatprep.subr.bf16.mxu0 0
  %2784 = vmatpush1.bf16.msra.mxu0 0
  %2785 = vmatprep.subr.bf16.mxu0 0
  %2786 = vmatpush1.bf16.msra.mxu0 0
  %2787 = vmatprep.subr.bf16.mxu0 0
  %2788 = vmatpush1.bf16.msra.mxu0 0
  %2789 = vmatprep.subr.bf16.mxu0 0
  %2790 = vmatpush1.bf16.msra.mxu0 0
  %2791 = vmatprep.subr.bf16.mxu0 0
  %2792 = vmatpush1.bf16.msra.mxu0 0
  %2793 = vmatprep.subr.bf16.mxu0 0
  %2794 = vmatpush1.bf16.msra.mxu0 0
  %2795 = vmatprep.subr.bf16.mxu0 0
  %2796 = vmatpush1.bf16.msra.mxu0 0
  %2797 = vmatprep.subr.bf16.mxu0 0
  %2798 = vmatpush1.bf16.msra.mxu0 0
  %2799 = vmatprep.subr.bf16.mxu0 0
  %2800 = vmatpush1.bf16.msra.mxu0 0
  %2801 = vmatprep.mubr.bf16.mxu0 0
  %2802 = vmatmul.mubr.bf16.gmra.mrb[0].mxu0 %v2767
  %v2803 = vpop.f32.mrb[0].mxu0
  %v2804 = vadd.f32 %v2760, %v2803
  %v2805 = vpop.f32.mrb[0].mxu0
  %v2806 = vpop.f32.mrb[0].mxu0
  %v2807 = vadd.f32 %v2763, %v2806
  %v2808 = vpop.f32.mrb[0].mxu0
  %2809 = vdwg.mxu0
  %v2810 = vld [vmem:[%s18] sm:$0x1]
  %v2812 = vlaneseq
  %v2813 = vshrl.u32 %v2812, 7
  %v2814 = vsub.s32 0, %v2813
  %v2815 = vrot.slane %v2810, %v2814
  %v2817 = vadd.f32 %v2804, %v2815
  %v2818 = vadd.f32 %v2807, %v2815
  %v2819 = vmax.f32 %v2817, 0.0
  %v2820 = vmax.f32 %v2818, 0.0
  %v2821 = vld [vmem:[%s3] sm:$0xf]
  %v2823 = vsel %vm281, %v2821, 0
  %2825 = vmatprep.subr.mxu0 0.0
  %2826 = vmatpush1.msra.mxu0 %v2819
  %2827 = vmatprep.subr.mxu0 0.0
  %2828 = vmatpush1.msra.mxu0 %v2820
  %2829 = vmatprep.subr.mxu0 0.0
  %2830 = vmatpush1.msra.mxu0 0.0
  %2831 = vmatprep.subr.mxu0 0.0
  %2832 = vmatpush1.msra.mxu0 0.0
  %2833 = vmatprep.subr.mxu0 0.0
  %2834 = vmatpush1.msra.mxu0 0.0
  %2835 = vmatprep.subr.mxu0 0.0
  %2836 = vmatpush1.msra.mxu0 0.0
  %2837 = vmatprep.subr.mxu0 0.0
  %2838 = vmatpush1.msra.mxu0 0.0
  %2839 = vmatprep.subr.mxu0 0.0
  %2840 = vmatpush1.msra.mxu0 0.0
  %2841 = vmatprep.subr.mxu0 0.0
  %2842 = vmatpush1.msra.mxu0 0.0
  %2843 = vmatprep.subr.mxu0 0.0
  %2844 = vmatpush1.msra.mxu0 0.0
  %2845 = vmatprep.subr.mxu0 0.0
  %2846 = vmatpush1.msra.mxu0 0.0
  %2847 = vmatprep.subr.mxu0 0.0
  %2848 = vmatpush1.msra.mxu0 0.0
  %2849 = vmatprep.subr.mxu0 0.0
  %2850 = vmatpush1.msra.mxu0 0.0
  %2851 = vmatprep.subr.mxu0 0.0
  %2852 = vmatpush1.msra.mxu0 0.0
  %2853 = vmatprep.subr.mxu0 0.0
  %2854 = vmatpush1.msra.mxu0 0.0
  %2855 = vmatprep.subr.mxu0 0.0
  %2856 = vmatpush1.msra.mxu0 0.0
  %2857 = vmatprep.subr.mxu0 0.0
  %2858 = vmatpush1.msra.mxu0 0.0
  %2859 = vmatprep.subr.mxu0 0.0
  %2860 = vmatpush1.msra.mxu0 0.0
  %2861 = vmatprep.subr.mxu0 0.0
  %2862 = vmatpush1.msra.mxu0 0.0
  %2863 = vmatprep.subr.mxu0 0.0
  %2864 = vmatpush1.msra.mxu0 0.0
  %2865 = vmatprep.subr.mxu0 0.0
  %2866 = vmatpush1.msra.mxu0 0.0
  %2867 = vmatprep.subr.mxu0 0.0
  %2868 = vmatpush1.msra.mxu0 0.0
  %2869 = vmatprep.subr.mxu0 0.0
  %2870 = vmatpush1.msra.mxu0 0.0
  %2871 = vmatprep.subr.mxu0 0.0
  %2872 = vmatpush1.msra.mxu0 0.0
  %2873 = vmatprep.subr.mxu0 0.0
  %2874 = vmatpush1.msra.mxu0 0.0
  %2875 = vmatprep.subr.mxu0 0.0
  %2876 = vmatpush1.msra.mxu0 0.0
  %2877 = vmatprep.subr.mxu0 0.0
  %2878 = vmatpush1.msra.mxu0 0.0
  %2879 = vmatprep.subr.mxu0 0.0
  %2880 = vmatpush1.msra.mxu0 0.0
  %2881 = vmatprep.subr.mxu0 0.0
  %2882 = vmatpush1.msra.mxu0 0.0
  %2883 = vmatprep.subr.mxu0 0.0
  %2884 = vmatpush1.msra.mxu0 0.0
  %2885 = vmatprep.subr.mxu0 0.0
  %2886 = vmatpush1.msra.mxu0 0.0
  %2887 = vmatprep.subr.mxu0 0.0
  %2888 = vmatpush1.msra.mxu0 0.0
  %2889 = vmatprep.mubr.f32.mxu0 0.0
  %2890 = vmatmul.mubr.f32.gmra.mrb[0].mxu0 %v2823
  %v2891 = vpop.f32.mrb[0].mxu0
  %v2892 = vadd.f32 0.0, %v2891
  %v2893 = vpop.f32.mrb[0].mxu0
  %2894 = vdwg.mxu0
  %v2895 = vld [vmem:[%s4] sm:$0xf]
  %v2897 = vsel %vm281, %v2895, 0
  %2899 = vmatprep.subr.mxu0 0.0
  %2900 = vmatpush1.msra.mxu0 %v2819
  %2901 = vmatprep.subr.mxu0 0.0
  %2902 = vmatpush1.msra.mxu0 %v2820
  %2903 = vmatprep.subr.mxu0 0.0
  %2904 = vmatpush1.msra.mxu0 0.0
  %2905 = vmatprep.subr.mxu0 0.0
  %2906 = vmatpush1.msra.mxu0 0.0
  %2907 = vmatprep.subr.mxu0 0.0
  %2908 = vmatpush1.msra.mxu0 0.0
  %2909 = vmatprep.subr.mxu0 0.0
  %2910 = vmatpush1.msra.mxu0 0.0
  %2911 = vmatprep.subr.mxu0 0.0
  %2912 = vmatpush1.msra.mxu0 0.0
  %2913 = vmatprep.subr.mxu0 0.0
  %2914 = vmatpush1.msra.mxu0 0.0
  %2915 = vmatprep.subr.mxu0 0.0
  %2916 = vmatpush1.msra.mxu0 0.0
  %2917 = vmatprep.subr.mxu0 0.0
  %2918 = vmatpush1.msra.mxu0 0.0
  %2919 = vmatprep.subr.mxu0 0.0
  %2920 = vmatpush1.msra.mxu0 0.0
  %2921 = vmatprep.subr.mxu0 0.0
  %2922 = vmatpush1.msra.mxu0 0.0
  %2923 = vmatprep.subr.mxu0 0.0
  %2924 = vmatpush1.msra.mxu0 0.0
  %2925 = vmatprep.subr.mxu0 0.0
  %2926 = vmatpush1.msra.mxu0 0.0
  %2927 = vmatprep.subr.mxu0 0.0
  %2928 = vmatpush1.msra.mxu0 0.0
  %2929 = vmatprep.subr.mxu0 0.0
  %2930 = vmatpush1.msra.mxu0 0.0
  %2931 = vmatprep.subr.mxu0 0.0
  %2932 = vmatpush1.msra.mxu0 0.0
  %2933 = vmatprep.subr.mxu0 0.0
  %2934 = vmatpush1.msra.mxu0 0.0
  %2935 = vmatprep.subr.mxu0 0.0
  %2936 = vmatpush1.msra.mxu0 0.0
  %2937 = vmatprep.subr.mxu0 0.0
  %2938 = vmatpush1.msra.mxu0 0.0
  %2939 = vmatprep.subr.mxu0 0.0
  %2940 = vmatpush1.msra.mxu0 0.0
  %2941 = vmatprep.subr.mxu0 0.0
  %2942 = vmatpush1.msra.mxu0 0.0
  %2943 = vmatprep.subr.mxu0 0.0
  %2944 = vmatpush1.msra.mxu0 0.0
  %2945 = vmatprep.subr.mxu0 0.0
  %2946 = vmatpush1.msra.mxu0 0.0
  %2947 = vmatprep.subr.mxu0 0.0
  %2948 = vmatpush1.msra.mxu0 0.0
  %2949 = vmatprep.subr.mxu0 0.0
  %2950 = vmatpush1.msra.mxu0 0.0
  %2951 = vmatprep.subr.mxu0 0.0
  %2952 = vmatpush1.msra.mxu0 0.0
  %2953 = vmatprep.subr.mxu0 0.0
  %2954 = vmatpush1.msra.mxu0 0.0
  %2955 = vmatprep.subr.mxu0 0.0
  %2956 = vmatpush1.msra.mxu0 0.0
  %2957 = vmatprep.subr.mxu0 0.0
  %2958 = vmatpush1.msra.mxu0 0.0
  %2959 = vmatprep.subr.mxu0 0.0
  %2960 = vmatpush1.msra.mxu0 0.0
  %2961 = vmatprep.subr.mxu0 0.0
  %2962 = vmatpush1.msra.mxu0 0.0
  %2963 = vmatprep.mubr.f32.mxu0 0.0
  %2964 = vmatmul.mubr.f32.gmra.mrb[0].mxu0 %v2897
  %v2965 = vpop.f32.mrb[0].mxu0
  %v2966 = vadd.f32 0.0, %v2965
  %v2967 = vpop.f32.mrb[0].mxu0
  %2968 = vdwg.mxu0
  %v2969 = vld [vmem:[%s19] sm:$0xff]
  %v2970 = vld [vmem:[%s19 + $0x8] sm:$0xff]
  %v2971 = vld [vmem:[%s19 + $0x10] sm:$0xff]
  %v2972 = vld [vmem:[%s19 + $0x18] sm:$0xff]
  %v2973 = vld [vmem:[%s19 + $0x20] sm:$0xff]
  %v2974 = vld [vmem:[%s19 + $0x28] sm:$0xff]
  %v2976 = vsel %vm2718, %v2966, 0
  %2978 = vmatprep.subr.mxu0 0.0
  %2979 = vmatpush1.msra.mxu0 %v2972
  %2980 = vmatprep.subr.mxu0 0.0
  %2981 = vmatpush1.msra.mxu0 %v2973
  %2982 = vmatprep.subr.mxu0 0.0
  %2983 = vmatpush1.msra.mxu0 %v2974
  %2984 = vmatprep.subr.mxu0 0.0
  %2985 = vmatpush1.msra.mxu0 0.0
  %2986 = vmatprep.subr.mxu0 0.0
  %2987 = vmatpush1.msra.mxu0 0.0
  %2988 = vmatprep.subr.mxu0 0.0
  %2989 = vmatpush1.msra.mxu0 0.0
  %2990 = vmatprep.subr.mxu0 0.0
  %2991 = vmatpush1.msra.mxu0 0.0
  %2992 = vmatprep.subr.mxu0 0.0
  %2993 = vmatpush1.msra.mxu0 0.0
  %2994 = vmatprep.subr.mxu0 0.0
  %2995 = vmatpush1.msra.mxu0 0.0
  %2996 = vmatprep.subr.mxu0 0.0
  %2997 = vmatpush1.msra.mxu0 0.0
  %2998 = vmatprep.subr.mxu0 0.0
  %2999 = vmatpush1.msra.mxu0 0.0
  %3000 = vmatprep.subr.mxu0 0.0
  %3001 = vmatpush1.msra.mxu0 0.0
  %3002 = vmatprep.subr.mxu0 0.0
  %3003 = vmatpush1.msra.mxu0 0.0
  %3004 = vmatprep.subr.mxu0 0.0
  %3005 = vmatpush1.msra.mxu0 0.0
  %3006 = vmatprep.subr.mxu0 0.0
  %3007 = vmatpush1.msra.mxu0 0.0
  %3008 = vmatprep.subr.mxu0 0.0
  %3009 = vmatpush1.msra.mxu0 0.0
  %3010 = vmatprep.subr.mxu0 0.0
  %3011 = vmatpush1.msra.mxu0 0.0
  %3012 = vmatprep.subr.mxu0 0.0
  %3013 = vmatpush1.msra.mxu0 0.0
  %3014 = vmatprep.subr.mxu0 0.0
  %3015 = vmatpush1.msra.mxu0 0.0
  %3016 = vmatprep.subr.mxu0 0.0
  %3017 = vmatpush1.msra.mxu0 0.0
  %3018 = vmatprep.subr.mxu0 0.0
  %3019 = vmatpush1.msra.mxu0 0.0
  %3020 = vmatprep.subr.mxu0 0.0
  %3021 = vmatpush1.msra.mxu0 0.0
  %3022 = vmatprep.subr.mxu0 0.0
  %3023 = vmatpush1.msra.mxu0 0.0
  %3024 = vmatprep.subr.mxu0 0.0
  %3025 = vmatpush1.msra.mxu0 0.0
  %3026 = vmatprep.subr.mxu0 0.0
  %3027 = vmatpush1.msra.mxu0 0.0
  %3028 = vmatprep.subr.mxu0 0.0
  %3029 = vmatpush1.msra.mxu0 0.0
  %3030 = vmatprep.subr.mxu0 0.0
  %3031 = vmatpush1.msra.mxu0 0.0
  %3032 = vmatprep.subr.mxu0 0.0
  %3033 = vmatpush1.msra.mxu0 0.0
  %3034 = vmatprep.subr.mxu0 0.0
  %3035 = vmatpush1.msra.mxu0 0.0
  %3036 = vmatprep.subr.mxu0 0.0
  %3037 = vmatpush1.msra.mxu0 0.0
  %3038 = vmatprep.subr.mxu0 0.0
  %3039 = vmatpush1.msra.mxu0 0.0
  %3040 = vmatprep.subr.mxu0 0.0
  %3041 = vmatpush1.msra.mxu0 0.0
  %3042 = vmatprep.mubr.f32.mxu0 0.0
  %3043 = vmatmul.mubr.f32.gmra.mrb[0].mxu0 %v2976
  %v3044 = vpop.f32.mrb[0].mxu0
  %v3045 = vadd.f32 0.0, %v3044
  %v3046 = vpop.f32.mrb[0].mxu0
  %3047 = vdwg.mxu0
  %v3049 = vsel %vm2718, %v2892, 0
  %3051 = vmatprep.subr.mxu0 0.0
  %3052 = vmatpush1.msra.mxu0 %v2969
  %3053 = vmatprep.subr.mxu0 0.0
  %3054 = vmatpush1.msra.mxu0 %v2970
  %3055 = vmatprep.subr.mxu0 0.0
  %3056 = vmatpush1.msra.mxu0 %v2971
  %3057 = vmatprep.subr.mxu0 0.0
  %3058 = vmatpush1.msra.mxu0 0.0
  %3059 = vmatprep.subr.mxu0 0.0
  %3060 = vmatpush1.msra.mxu0 0.0
  %3061 = vmatprep.subr.mxu0 0.0
  %3062 = vmatpush1.msra.mxu0 0.0
  %3063 = vmatprep.subr.mxu0 0.0
  %3064 = vmatpush1.msra.mxu0 0.0
  %3065 = vmatprep.subr.mxu0 0.0
  %3066 = vmatpush1.msra.mxu0 0.0
  %3067 = vmatprep.subr.mxu0 0.0
  %3068 = vmatpush1.msra.mxu0 0.0
  %3069 = vmatprep.subr.mxu0 0.0
  %3070 = vmatpush1.msra.mxu0 0.0
  %3071 = vmatprep.subr.mxu0 0.0
  %3072 = vmatpush1.msra.mxu0 0.0
  %3073 = vmatprep.subr.mxu0 0.0
  %3074 = vmatpush1.msra.mxu0 0.0
  %3075 = vmatprep.subr.mxu0 0.0
  %3076 = vmatpush1.msra.mxu0 0.0
  %3077 = vmatprep.subr.mxu0 0.0
  %3078 = vmatpush1.msra.mxu0 0.0
  %3079 = vmatprep.subr.mxu0 0.0
  %3080 = vmatpush1.msra.mxu0 0.0
  %3081 = vmatprep.subr.mxu0 0.0
  %3082 = vmatpush1.msra.mxu0 0.0
  %3083 = vmatprep.subr.mxu0 0.0
  %3084 = vmatpush1.msra.mxu0 0.0
  %3085 = vmatprep.subr.mxu0 0.0
  %3086 = vmatpush1.msra.mxu0 0.0
  %3087 = vmatprep.subr.mxu0 0.0
  %3088 = vmatpush1.msra.mxu0 0.0
  %3089 = vmatprep.subr.mxu0 0.0
  %3090 = vmatpush1.msra.mxu0 0.0
  %3091 = vmatprep.subr.mxu0 0.0
  %3092 = vmatpush1.msra.mxu0 0.0
  %3093 = vmatprep.subr.mxu0 0.0
  %3094 = vmatpush1.msra.mxu0 0.0
  %3095 = vmatprep.subr.mxu0 0.0
  %3096 = vmatpush1.msra.mxu0 0.0
  %3097 = vmatprep.subr.mxu0 0.0
  %3098 = vmatpush1.msra.mxu0 0.0
  %3099 = vmatprep.subr.mxu0 0.0
  %3100 = vmatpush1.msra.mxu0 0.0
  %3101 = vmatprep.subr.mxu0 0.0
  %3102 = vmatpush1.msra.mxu0 0.0
  %3103 = vmatprep.subr.mxu0 0.0
  %3104 = vmatpush1.msra.mxu0 0.0
  %3105 = vmatprep.subr.mxu0 0.0
  %3106 = vmatpush1.msra.mxu0 0.0
  %3107 = vmatprep.subr.mxu0 0.0
  %3108 = vmatpush1.msra.mxu0 0.0
  %3109 = vmatprep.subr.mxu0 0.0
  %3110 = vmatpush1.msra.mxu0 0.0
  %3111 = vmatprep.subr.mxu0 0.0
  %3112 = vmatpush1.msra.mxu0 0.0
  %3113 = vmatprep.subr.mxu0 0.0
  %3114 = vmatpush1.msra.mxu0 0.0
  %3115 = vmatprep.mubr.f32.mxu0 0.0
  %3116 = vmatmul.mubr.f32.gmra.mrb[0].mxu0 %v3049
  %v3117 = vpop.f32.mrb[0].mxu0
  %v3118 = vadd.f32 %v3045, %v3117
  %v3119 = vpop.f32.mrb[0].mxu0
  %3120 = vdwg.mxu0
  %v3121 = vld [vmem:[%s20] sm:$0x1]
  %v3123 = vlaneseq
  %v3124 = vshrl.u32 %v3123, 7
  %v3125 = vsub.s32 0, %v3124
  %v3126 = vrot.slane %v3121, %v3125
  %v3128 = vadd.f32 %v3118, %v3126
  %v3129 = vmax.f32 %v3128, 0.0
  %v3130 = vld [vmem:[%s21] sm:$0xff]
  %v3131 = vld [vmem:[%s21 + $0x8] sm:$0xff]
  %v3132 = vld [vmem:[%s21 + $0x10] sm:$0xff]
  %v3133 = vld [vmem:[#allocation2] sm:$0x1]
  %v3135 = vlaneseq
  %v3136 = vshrl.u32 %v3135, 7
  %v3137 = vsub.s32 0, %v3136
  %v3138 = vrot.slane %v3133, %v3137
  %v3141 = vsel %vm2718, %v3129, 0
  %3143 = vmatprep.subr.mxu0 0.0
  %3144 = vmatpush1.msra.mxu0 %v3130
  %3145 = vmatprep.subr.mxu0 0.0
  %3146 = vmatpush1.msra.mxu0 %v3131
  %3147 = vmatprep.subr.mxu0 0.0
  %3148 = vmatpush1.msra.mxu0 %v3132
  %3149 = vmatprep.subr.mxu0 0.0
  %3150 = vmatpush1.msra.mxu0 0.0
  %3151 = vmatprep.subr.mxu0 0.0
  %3152 = vmatpush1.msra.mxu0 0.0
  %3153 = vmatprep.subr.mxu0 0.0
  %3154 = vmatpush1.msra.mxu0 0.0
  %3155 = vmatprep.subr.mxu0 0.0
  %3156 = vmatpush1.msra.mxu0 0.0
  %3157 = vmatprep.subr.mxu0 0.0
  %3158 = vmatpush1.msra.mxu0 0.0
  %3159 = vmatprep.subr.mxu0 0.0
  %3160 = vmatpush1.msra.mxu0 0.0
  %3161 = vmatprep.subr.mxu0 0.0
  %3162 = vmatpush1.msra.mxu0 0.0
  %3163 = vmatprep.subr.mxu0 0.0
  %3164 = vmatpush1.msra.mxu0 0.0
  %3165 = vmatprep.subr.mxu0 0.0
  %3166 = vmatpush1.msra.mxu0 0.0
  %3167 = vmatprep.subr.mxu0 0.0
  %3168 = vmatpush1.msra.mxu0 0.0
  %3169 = vmatprep.subr.mxu0 0.0
  %3170 = vmatpush1.msra.mxu0 0.0
  %3171 = vmatprep.subr.mxu0 0.0
  %3172 = vmatpush1.msra.mxu0 0.0
  %3173 = vmatprep.subr.mxu0 0.0
  %3174 = vmatpush1.msra.mxu0 0.0
  %3175 = vmatprep.subr.mxu0 0.0
  %3176 = vmatpush1.msra.mxu0 0.0
  %3177 = vmatprep.subr.mxu0 0.0
  %3178 = vmatpush1.msra.mxu0 0.0
  %3179 = vmatprep.subr.mxu0 0.0
  %3180 = vmatpush1.msra.mxu0 0.0
  %3181 = vmatprep.subr.mxu0 0.0
  %3182 = vmatpush1.msra.mxu0 0.0
  %3183 = vmatprep.subr.mxu0 0.0
  %3184 = vmatpush1.msra.mxu0 0.0
  %3185 = vmatprep.subr.mxu0 0.0
  %3186 = vmatpush1.msra.mxu0 0.0
  %3187 = vmatprep.subr.mxu0 0.0
  %3188 = vmatpush1.msra.mxu0 0.0
  %3189 = vmatprep.subr.mxu0 0.0
  %3190 = vmatpush1.msra.mxu0 0.0
  %3191 = vmatprep.subr.mxu0 0.0
  %3192 = vmatpush1.msra.mxu0 0.0
  %3193 = vmatprep.subr.mxu0 0.0
  %3194 = vmatpush1.msra.mxu0 0.0
  %3195 = vmatprep.subr.mxu0 0.0
  %3196 = vmatpush1.msra.mxu0 0.0
  %3197 = vmatprep.subr.mxu0 0.0
  %3198 = vmatpush1.msra.mxu0 0.0
  %3199 = vmatprep.subr.mxu0 0.0
  %3200 = vmatpush1.msra.mxu0 0.0
  %3201 = vmatprep.subr.mxu0 0.0
  %3202 = vmatpush1.msra.mxu0 0.0
  %3203 = vmatprep.subr.mxu0 0.0
  %3204 = vmatpush1.msra.mxu0 0.0
  %3205 = vmatprep.subr.mxu0 0.0
  %3206 = vmatpush1.msra.mxu0 0.0
  %3207 = vmatprep.mubr.f32.mxu0 0.0
  %3208 = vmatmul.mubr.f32.gmra.mrb[0].mxu0 %v3141
  %v3209 = vpop.f32.mrb[0].mxu0
  %v3210 = vadd.f32 %v3138, %v3209
  %v3211 = vpop.f32.mrb[0].mxu0
  %3212 = vdwg.mxu0
  %v3213 = vxor.u32 %v3210, 2147483648
  %v3214 = vmul.f32 %v3213, 1.442695
  %v3215 = vpow.pop %v3214
  %v3216 = vadd.f32 %v3215, 1.0
  %v3217 = vrcp.pop %v3216
  %v3218 = vmul.f32 1.0, %v3217
  %vm3219 = vcmask 3072
  %3220 = vst.msk [vmem:[%s23] sm:$0xf] %vm3219, %v3218
  // Predicated region
  $region94: #{graphormer_forward.1} parent=0 // pred_check
    _
  $region95: #{graphormer_forward.1} parent=0 // pred_check_branch
    %3222 = sbr.rel (0) target = $region97
  $region96: #{graphormer_forward.1} parent=0 // pred_region
    _
  $region97: #{graphormer_forward.1} parent=0 // pred_fallthru
    _
  // Predicated region
  $region98: #{graphormer_forward.1} parent=0 // pred_check
    _
  $region99: #{graphormer_forward.1} parent=0 // pred_check_branch
    %3224 = sbr.rel (0) target = $region101
  $region100: #{graphormer_forward.1} parent=0 // pred_region
    _
  $region101: #{graphormer_forward.1} parent=0 // pred_fallthru
    _

</llo_original>
